<compile_context>
chip_gen: v7x
topology: tpu7x:2x2x1
jax: 0.10.0
libtpu: 0.0.40
codegen_flags: <defaults>
</compile_context>

<pallas_src>
import jax
import jax.numpy as jnp
from jax.experimental import pallas as pl
from jax.experimental.pallas import tpu as pltpu

VOCAB_SIZE = 50
EMBED_DIM = 32
HIDDEN_DIM = 32          # 4*H = 128 -> gate block is exactly one lane-dense vreg width
NUM_LAYERS = 2           # fixed, matching the module default
PADDING_IDX = 0


def _encoder_lstm_kernel(len_ref, tok_ref, emb_ref,
                         w_ih1_ref, w_hh1_ref, b1_ref,
                         w_ih2_ref, w_hh2_ref, b2_ref,
                         w_e2d_ref, b_e2d_ref,
                         ctx_ref, dec_ref, ct_ref):
    B = len_ref.shape[0]                  # padded batch (8)
    H = w_hh1_ref.shape[0]
    V, _E = emb_ref.shape
    T = tok_ref.shape[0] // B
    f32 = jnp.float32

    # ---- fused embedding gather: one-hot matmul on the MXU --------------------
    tok = tok_ref[...]                                                    # (T*B, 1) int32, time-major
    onehot = (jax.lax.broadcasted_iota(jnp.int32, (T * B, V), 1) == tok).astype(f32)
    emb_all = jnp.dot(onehot, emb_ref[...], preferred_element_type=f32)   # (T*B, E)
    # TODO(synk): nn.Dropout on embeds / LSTM inter-layer dropout are train-mode only; eval identity.

    # Layer-1 input-gate pre-activations for every step are recurrence-independent:
    # compute them all before the loop (off the serial chain), bias folded in once.
    gx1_all = (jnp.dot(emb_all, w_ih1_ref[...], preferred_element_type=f32)
               + jnp.broadcast_to(b1_ref[...], (T * B, 4 * H)))           # (T*B, 4H)

    # Hoisted loop invariants (JAX does not CSE broadcast_in_dim in an unrolled loop).
    b2 = jnp.broadcast_to(b2_ref[...], (B, 4 * H))
    lengths = len_ref[...]                                                # (B, 1) int32
    w_hh1 = w_hh1_ref[...]
    w_ih2 = w_ih2_ref[...]
    w_hh2 = w_hh2_ref[...]

    def gate_act(gates, c_prev):
        # One sigmoid over the whole lane-dense (B, 4H) block, slice i|f|o from it,
        # tanh only on the g slice.  PyTorch gate order i|f|g|o.
        sig = jax.nn.sigmoid(gates)
        i = sig[:, 0 * H:1 * H]
        f = sig[:, 1 * H:2 * H]
        o = sig[:, 3 * H:4 * H]
        g = jnp.tanh(gates[:, 2 * H:3 * H])
        c_new = f * c_prev + i * g
        h_new = o * jnp.tanh(c_new)
        return h_new, c_new

    zeros = jnp.zeros((B, H), f32)
    h1, c1, h2, c2 = zeros, zeros, zeros, zeros

    # Fully unrolled recurrence (T static & small); state stays in vregs.
    for t in range(T):
        mask = lengths > t                                                # (B, 1) packed-seq mask

        # ---- layer 1: only the recurrent matmul sits on the serial chain ----
        gates1 = gx1_all[t * B:(t + 1) * B, :] + jnp.dot(h1, w_hh1, preferred_element_type=f32)
        h1n, c1n = gate_act(gates1, c1)
        h1 = jnp.where(mask, h1n, h1)
        c1 = jnp.where(mask, c1n, c1)

        # ---- layer 2 ----
        gates2 = (jnp.dot(h1, w_ih2, preferred_element_type=f32)
                  + jnp.dot(h2, w_hh2, preferred_element_type=f32)
                  + b2)
        h2n, c2n = gate_act(gates2, c2)
        h2 = jnp.where(mask, h2n, h2)
        c2 = jnp.where(mask, c2n, c2)

        # pad_packed_sequence: zeros past each row's length.  Lane-dense (B, T*H)
        # output; per-step writes land in the VMEM output block at static lane
        # offsets, HBM sees ONE store at kernel end.
        ctx_ref[:, t * H:(t + 1) * H] = jnp.where(mask, h2, 0.0)

    # encoder2decoder tanh head on the final (frozen-at-length) layer-2 hidden, plus c_t.
    dec = jnp.tanh(jnp.dot(h2, w_e2d_ref[...], preferred_element_type=f32)
                   + jnp.broadcast_to(b_e2d_ref[...], (B, H)))
    dec_ref[...] = dec.astype(dec_ref.dtype)
    ct_ref[...] = c2.astype(ct_ref.dtype)


def encoder_lstm_forward(inputs, lengths, params):
    """inputs: (B, T) int32 token ids; lengths: (B,) int32 -> (ctx, decoder_init, c_t)."""
    emb_table, (w_ih1, w_hh1, b1), (w_ih2, w_hh2, b2), (w_e2d, b_e2d) = params
    B, T = inputs.shape
    H = w_hh1.shape[0]

    # Pad batch to a full sublane group (8); padded rows get length 0 so the
    # in-kernel mask keeps their state/outputs at zero.
    Bp = max(8, -(-B // 8) * 8)
    tok_p = jnp.full((Bp, T), PADDING_IDX, dtype=jnp.int32).at[:B, :].set(inputs.astype(jnp.int32))
    len_p = jnp.zeros((Bp, 1), dtype=jnp.int32).at[:B, 0].set(lengths.astype(jnp.int32))
    tok_tm = jnp.transpose(tok_p).reshape(T * Bp, 1)          # time-major flattened token ids

    vmem = pl.BlockSpec(memory_space=pltpu.MemorySpace.VMEM)  # everything VMEM-resident, no grid

    ctx_flat, dec_init, c_t = pl.pallas_call(
        _encoder_lstm_kernel,
        out_shape=(
            jax.ShapeDtypeStruct((Bp, T * H), jnp.float32),   # ctx, lane-dense (T*H = 256)
            jax.ShapeDtypeStruct((Bp, H), jnp.float32),       # decoder_init
            jax.ShapeDtypeStruct((Bp, H), jnp.float32),       # c_t
        ),
        in_specs=[vmem] * 11,
        out_specs=(vmem, vmem, vmem),
        # TODO(synk): for large B on v7x, add a "parallel" batch grid axis so both
        # TensorCores are used; unnecessary at B=2.
    )(len_p, tok_tm, emb_table, w_ih1, w_hh1, b1, w_ih2, w_hh2, b2, w_e2d, b_e2d)

    ctx = ctx_flat[:B].reshape(B, T, H)                       # contiguous reshape, no transpose
    return ctx, dec_init[:B], c_t[:B]


def init_params(key):
    """Mimics nn.LSTM / nn.Linear default init; weights stored [in, out] so kernel does x @ W."""
    ks = jax.random.split(key, 9)
    bound = 1.0 / jnp.sqrt(float(HIDDEN_DIM))

    emb = jax.random.normal(ks[0], (VOCAB_SIZE, EMBED_DIM), jnp.float32)
    emb = emb.at[PADDING_IDX].set(0.0)                        # padding_idx row is zero

    def u(k, shape):
        return jax.random.uniform(k, shape, jnp.float32, -bound, bound)

    w_ih1 = u(ks[1], (EMBED_DIM, 4 * HIDDEN_DIM))
    w_hh1 = u(ks[2], (HIDDEN_DIM, 4 * HIDDEN_DIM))
    b1 = u(ks[3], (1, 4 * HIDDEN_DIM))                        # b_ih + b_hh folded together
    w_ih2 = u(ks[4], (HIDDEN_DIM, 4 * HIDDEN_DIM))
    w_hh2 = u(ks[5], (HIDDEN_DIM, 4 * HIDDEN_DIM))
    b2 = u(ks[6], (1, 4 * HIDDEN_DIM))
    w_e2d = u(ks[7], (HIDDEN_DIM, HIDDEN_DIM))
    b_e2d = u(ks[8], (1, HIDDEN_DIM))
    return emb, (w_ih1, w_hh1, b1), (w_ih2, w_hh2, b2), (w_e2d, b_e2d)


def reference_forward(inputs, lengths, params):
    """Pure-JAX reference for the packed 2-layer LSTM + tanh head."""
    emb_table, (w_ih1, w_hh1, b1), (w_ih2, w_hh2, b2), (w_e2d, b_e2d) = params
    B, T = inputs.shape
    H = w_hh1.shape[0]
    embeds = emb_table[inputs]
    h1 = jnp.zeros((B, H), jnp.float32)
    c1 = jnp.zeros((B, H), jnp.float32)
    h2 = jnp.zeros((B, H), jnp.float32)
    c2 = jnp.zeros((B, H), jnp.float32)

    def cell(x, h, c, w_ih, w_hh, b):
        gates = x @ w_ih + h @ w_hh + b
        i, f, g, o = jnp.split(gates, 4, axis=1)
        c_new = jax.nn.sigmoid(f) * c + jax.nn.sigmoid(i) * jnp.tanh(g)
        return jax.nn.sigmoid(o) * jnp.tanh(c_new), c_new

    ctx_steps = []
    for t in range(T):
        m = (lengths > t).reshape(B, 1)
        h1n, c1n = cell(embeds[:, t], h1, c1, w_ih1, w_hh1, b1)
        h1 = jnp.where(m, h1n, h1)
        c1 = jnp.where(m, c1n, c1)
        h2n, c2n = cell(h1, h2, c2, w_ih2, w_hh2, b2)
        h2 = jnp.where(m, h2n, h2)
        c2 = jnp.where(m, c2n, c2)
        ctx_steps.append(jnp.where(m, h2, 0.0))
    ctx = jnp.stack(ctx_steps, axis=1)
    dec = jnp.tanh(h2 @ w_e2d + b_e2d)
    return ctx, dec, c2


if __name__ == "__main__":
    key = jax.random.PRNGKey(0)
    k_params, k_tok = jax.random.split(key)

    B, T = 2, 8
    params = init_params(k_params)

    lengths = jnp.array([8, 5], dtype=jnp.int32)              # sorted descending, like pack_padded_sequence
    tokens = jax.random.randint(k_tok, (B, T), 1, VOCAB_SIZE, dtype=jnp.int32)
    # zero-pad (padding_idx) the tail of the shorter sequence
    pos = jnp.arange(T)[None, :]
    tokens = jnp.where(pos < lengths[:, None], tokens, PADDING_IDX)

    ctx, dec_init, c_t = encoder_lstm_forward(tokens, lengths, params)
    jax.block_until_ready((ctx, dec_init, c_t))

    ctx_ref, dec_ref, ct_ref = reference_forward(tokens, lengths, params)

    assert ctx.shape == (B, T, HIDDEN_DIM)
    assert dec_init.shape == (B, HIDDEN_DIM)
    assert c_t.shape == (B, HIDDEN_DIM)
    assert jnp.allclose(ctx, ctx_ref, atol=1e-2, rtol=1e-2)
    assert jnp.allclose(dec_init, dec_ref, atol=1e-2, rtol=1e-2)
    assert jnp.allclose(c_t, ct_ref, atol=1e-2, rtol=1e-2)
    # padding positions of ctx must be exactly zero (pad_packed_sequence behaviour)
    assert jnp.all(ctx[1, 5:, :] == 0.0)

    print("KERNEL_OK")
</pallas_src>

<mosaic_0001>
module attributes {stable_mosaic.version = 11 : i64} {
  func.func @_encoder_lstm_kernel(%arg0: memref<8x1xi32, #tpu.memory_space<vmem>>, %arg1: memref<64x1xi32, #tpu.memory_space<vmem>>, %arg2: memref<50x32xf32, #tpu.memory_space<vmem>>, %arg3: memref<32x128xf32, #tpu.memory_space<vmem>>, %arg4: memref<32x128xf32, #tpu.memory_space<vmem>>, %arg5: memref<1x128xf32, #tpu.memory_space<vmem>>, %arg6: memref<32x128xf32, #tpu.memory_space<vmem>>, %arg7: memref<32x128xf32, #tpu.memory_space<vmem>>, %arg8: memref<1x128xf32, #tpu.memory_space<vmem>>, %arg9: memref<32x32xf32, #tpu.memory_space<vmem>>, %arg10: memref<1x32xf32, #tpu.memory_space<vmem>>, %arg11: memref<8x256xf32, #tpu.memory_space<vmem>>, %arg12: memref<8x32xf32, #tpu.memory_space<vmem>>, %arg13: memref<8x32xf32, #tpu.memory_space<vmem>>) attributes {dimension_semantics = [], scalar_prefetch = 0 : i64, scratch_operands = 0 : i64, tpu.core_type = #tpu.core_type<tc>} {
    %c0 = arith.constant 0 : index
    %c0_0 = arith.constant 0 : index
    %0 = vector.load %arg1[%c0, %c0_0] : memref<64x1xi32, #tpu.memory_space<vmem>>, vector<64x1xi32>
    %1 = tpu.iota {dimensions = array<i32: 1>} : vector<64x50xi32>
    %2 = vector.broadcast %0 : vector<64x1xi32> to vector<64x50xi32>
    %3 = arith.cmpi eq, %1, %2 : vector<64x50xi32>
    %4 = arith.extui %3 : vector<64x50xi1> to vector<64x50xi32>
    %5 = arith.sitofp %4 : vector<64x50xi32> to vector<64x50xf32>
    %c0_1 = arith.constant 0 : index
    %c0_2 = arith.constant 0 : index
    %6 = vector.load %arg2[%c0_1, %c0_2] : memref<50x32xf32, #tpu.memory_space<vmem>>, vector<50x32xf32>
    %cst = arith.constant dense<0.000000e+00> : vector<64x32xf32>
    %7 = tpu.matmul %5, %6, %cst {dimension_numbers = #tpu.dot_dimension_numbers<[1], [0], [0], [1], [0, 0, 1, 1], [], []>} : vector<64x50xf32>, vector<50x32xf32>, vector<64x32xf32> -> vector<64x32xf32>
    %c0_3 = arith.constant 0 : index
    %c0_4 = arith.constant 0 : index
    %8 = vector.load %arg3[%c0_3, %c0_4] : memref<32x128xf32, #tpu.memory_space<vmem>>, vector<32x128xf32>
    %cst_5 = arith.constant dense<0.000000e+00> : vector<64x128xf32>
    %9 = tpu.matmul %7, %8, %cst_5 {dimension_numbers = #tpu.dot_dimension_numbers<[1], [0], [0], [1], [0, 0, 1, 1], [], []>} : vector<64x32xf32>, vector<32x128xf32>, vector<64x128xf32> -> vector<64x128xf32>
    %c0_6 = arith.constant 0 : index
    %c0_7 = arith.constant 0 : index
    %10 = vector.load %arg5[%c0_6, %c0_7] : memref<1x128xf32, #tpu.memory_space<vmem>>, vector<1x128xf32>
    %11 = vector.shape_cast %10 : vector<1x128xf32> to vector<1x128xf32>
    %12 = vector.broadcast %11 : vector<1x128xf32> to vector<64x128xf32>
    %13 = arith.addf %9, %12 : vector<64x128xf32>
    %c0_8 = arith.constant 0 : index
    %c0_9 = arith.constant 0 : index
    %14 = vector.load %arg8[%c0_8, %c0_9] : memref<1x128xf32, #tpu.memory_space<vmem>>, vector<1x128xf32>
    %15 = vector.shape_cast %14 : vector<1x128xf32> to vector<1x128xf32>
    %16 = vector.broadcast %15 : vector<1x128xf32> to vector<8x128xf32>
    %c0_10 = arith.constant 0 : index
    %c0_11 = arith.constant 0 : index
    %17 = vector.load %arg0[%c0_10, %c0_11] : memref<8x1xi32, #tpu.memory_space<vmem>>, vector<8x1xi32>
    %c0_12 = arith.constant 0 : index
    %c0_13 = arith.constant 0 : index
    %18 = vector.load %arg4[%c0_12, %c0_13] : memref<32x128xf32, #tpu.memory_space<vmem>>, vector<32x128xf32>
    %c0_14 = arith.constant 0 : index
    %c0_15 = arith.constant 0 : index
    %19 = vector.load %arg6[%c0_14, %c0_15] : memref<32x128xf32, #tpu.memory_space<vmem>>, vector<32x128xf32>
    %c0_16 = arith.constant 0 : index
    %c0_17 = arith.constant 0 : index
    %20 = vector.load %arg7[%c0_16, %c0_17] : memref<32x128xf32, #tpu.memory_space<vmem>>, vector<32x128xf32>
    %cst_18 = arith.constant 0.000000e+00 : f32
    %21 = vector.broadcast %cst_18 : f32 to vector<8x32xf32>
    %c0_i32 = arith.constant 0 : i32
    %22 = vector.broadcast %c0_i32 : i32 to vector<8x1xi32>
    %23 = arith.cmpi sgt, %17, %22 : vector<8x1xi32>
    %24 = vector.extract_strided_slice %13 {offsets = [0, 0], sizes = [8, 128], strides = [1, 1]} : vector<64x128xf32> to vector<8x128xf32>
    %cst_19 = arith.constant dense<0.000000e+00> : vector<8x128xf32>
    %25 = tpu.matmul %21, %18, %cst_19 {dimension_numbers = #tpu.dot_dimension_numbers<[1], [0], [0], [1], [0, 0, 1, 1], [], []>} : vector<8x32xf32>, vector<32x128xf32>, vector<8x128xf32> -> vector<8x128xf32>
    %26 = arith.addf %24, %25 : vector<8x128xf32>
    %27 = arith.negf %26 : vector<8x128xf32>
    %28 = math.exp %27 : vector<8x128xf32>
    %cst_20 = arith.constant 1.000000e+00 : f32
    %29 = vector.broadcast %cst_20 : f32 to vector<8x128xf32>
    %30 = arith.addf %29, %28 : vector<8x128xf32>
    %31 = arith.divf %29, %30 : vector<8x128xf32>
    %32 = vector.extract_strided_slice %31 {offsets = [0, 0], sizes = [8, 32], strides = [1, 1]} : vector<8x128xf32> to vector<8x32xf32>
    %33 = vector.extract_strided_slice %31 {offsets = [0, 32], sizes = [8, 32], strides = [1, 1]} : vector<8x128xf32> to vector<8x32xf32>
    %34 = vector.extract_strided_slice %31 {offsets = [0, 96], sizes = [8, 32], strides = [1, 1]} : vector<8x128xf32> to vector<8x32xf32>
    %35 = vector.extract_strided_slice %26 {offsets = [0, 64], sizes = [8, 32], strides = [1, 1]} : vector<8x128xf32> to vector<8x32xf32>
    %36 = math.tanh %35 : vector<8x32xf32>
    %37 = arith.mulf %33, %21 : vector<8x32xf32>
    %38 = arith.mulf %32, %36 : vector<8x32xf32>
    %39 = arith.addf %37, %38 : vector<8x32xf32>
    %40 = math.tanh %39 : vector<8x32xf32>
    %41 = arith.mulf %34, %40 : vector<8x32xf32>
    %42 = vector.shape_cast %23 : vector<8x1xi1> to vector<8x1xi1>
    %43 = vector.broadcast %42 : vector<8x1xi1> to vector<8x32xi1>
    %44 = arith.select %43, %41, %21 : vector<8x32xi1>, vector<8x32xf32>
    %45 = vector.shape_cast %23 : vector<8x1xi1> to vector<8x1xi1>
    %46 = vector.broadcast %45 : vector<8x1xi1> to vector<8x32xi1>
    %47 = arith.select %46, %39, %21 : vector<8x32xi1>, vector<8x32xf32>
    %cst_21 = arith.constant dense<0.000000e+00> : vector<8x128xf32>
    %48 = tpu.matmul %44, %19, %cst_21 {dimension_numbers = #tpu.dot_dimension_numbers<[1], [0], [0], [1], [0, 0, 1, 1], [], []>} : vector<8x32xf32>, vector<32x128xf32>, vector<8x128xf32> -> vector<8x128xf32>
    %cst_22 = arith.constant dense<0.000000e+00> : vector<8x128xf32>
    %49 = tpu.matmul %21, %20, %cst_22 {dimension_numbers = #tpu.dot_dimension_numbers<[1], [0], [0], [1], [0, 0, 1, 1], [], []>} : vector<8x32xf32>, vector<32x128xf32>, vector<8x128xf32> -> vector<8x128xf32>
    %50 = arith.addf %48, %49 : vector<8x128xf32>
    %51 = arith.addf %50, %16 : vector<8x128xf32>
    %52 = arith.negf %51 : vector<8x128xf32>
    %53 = math.exp %52 : vector<8x128xf32>
    %cst_23 = arith.constant 1.000000e+00 : f32
    %54 = vector.broadcast %cst_23 : f32 to vector<8x128xf32>
    %55 = arith.addf %54, %53 : vector<8x128xf32>
    %56 = arith.divf %54, %55 : vector<8x128xf32>
    %57 = vector.extract_strided_slice %56 {offsets = [0, 0], sizes = [8, 32], strides = [1, 1]} : vector<8x128xf32> to vector<8x32xf32>
    %58 = vector.extract_strided_slice %56 {offsets = [0, 32], sizes = [8, 32], strides = [1, 1]} : vector<8x128xf32> to vector<8x32xf32>
    %59 = vector.extract_strided_slice %56 {offsets = [0, 96], sizes = [8, 32], strides = [1, 1]} : vector<8x128xf32> to vector<8x32xf32>
    %60 = vector.extract_strided_slice %51 {offsets = [0, 64], sizes = [8, 32], strides = [1, 1]} : vector<8x128xf32> to vector<8x32xf32>
    %61 = math.tanh %60 : vector<8x32xf32>
    %62 = arith.mulf %58, %21 : vector<8x32xf32>
    %63 = arith.mulf %57, %61 : vector<8x32xf32>
    %64 = arith.addf %62, %63 : vector<8x32xf32>
    %65 = math.tanh %64 : vector<8x32xf32>
    %66 = arith.mulf %59, %65 : vector<8x32xf32>
    %67 = vector.shape_cast %23 : vector<8x1xi1> to vector<8x1xi1>
    %68 = vector.broadcast %67 : vector<8x1xi1> to vector<8x32xi1>
    %69 = arith.select %68, %66, %21 : vector<8x32xi1>, vector<8x32xf32>
    %70 = vector.shape_cast %23 : vector<8x1xi1> to vector<8x1xi1>
    %71 = vector.broadcast %70 : vector<8x1xi1> to vector<8x32xi1>
    %72 = arith.select %71, %64, %21 : vector<8x32xi1>, vector<8x32xf32>
    %cst_24 = arith.constant 0.000000e+00 : f32
    %73 = vector.shape_cast %23 : vector<8x1xi1> to vector<8x1xi1>
    %74 = vector.broadcast %73 : vector<8x1xi1> to vector<8x32xi1>
    %75 = vector.broadcast %cst_24 : f32 to vector<8x32xf32>
    %76 = arith.select %74, %69, %75 : vector<8x32xi1>, vector<8x32xf32>
    %c0_25 = arith.constant 0 : index
    %c0_26 = arith.constant 0 : index
    %77 = vector.load %arg11[%c0_25, %c0_26] : memref<8x256xf32, #tpu.memory_space<vmem>>, vector<8x32xf32>
    tpu.vector_store %arg11[%c0_25, %c0_26], %76 {strides = array<i32>} : memref<8x256xf32, #tpu.memory_space<vmem>>, vector<8x32xf32>,
    %c1_i32 = arith.constant 1 : i32
    %78 = vector.broadcast %c1_i32 : i32 to vector<8x1xi32>
    %79 = arith.cmpi sgt, %17, %78 : vector<8x1xi32>
    %80 = vector.extract_strided_slice %13 {offsets = [8, 0], sizes = [8, 128], strides = [1, 1]} : vector<64x128xf32> to vector<8x128xf32>
    %cst_27 = arith.constant dense<0.000000e+00> : vector<8x128xf32>
    %81 = tpu.matmul %44, %18, %cst_27 {dimension_numbers = #tpu.dot_dimension_numbers<[1], [0], [0], [1], [0, 0, 1, 1], [], []>} : vector<8x32xf32>, vector<32x128xf32>, vector<8x128xf32> -> vector<8x128xf32>
    %82 = arith.addf %80, %81 : vector<8x128xf32>
    %83 = arith.negf %82 : vector<8x128xf32>
    %84 = math.exp %83 : vector<8x128xf32>
    %cst_28 = arith.constant 1.000000e+00 : f32
    %85 = vector.broadcast %cst_28 : f32 to vector<8x128xf32>
    %86 = arith.addf %85, %84 : vector<8x128xf32>
    %87 = arith.divf %85, %86 : vector<8x128xf32>
    %88 = vector.extract_strided_slice %87 {offsets = [0, 0], sizes = [8, 32], strides = [1, 1]} : vector<8x128xf32> to vector<8x32xf32>
    %89 = vector.extract_strided_slice %87 {offsets = [0, 32], sizes = [8, 32], strides = [1, 1]} : vector<8x128xf32> to vector<8x32xf32>
    %90 = vector.extract_strided_slice %87 {offsets = [0, 96], sizes = [8, 32], strides = [1, 1]} : vector<8x128xf32> to vector<8x32xf32>
    %91 = vector.extract_strided_slice %82 {offsets = [0, 64], sizes = [8, 32], strides = [1, 1]} : vector<8x128xf32> to vector<8x32xf32>
    %92 = math.tanh %91 : vector<8x32xf32>
    %93 = arith.mulf %89, %47 : vector<8x32xf32>
    %94 = arith.mulf %88, %92 : vector<8x32xf32>
    %95 = arith.addf %93, %94 : vector<8x32xf32>
    %96 = math.tanh %95 : vector<8x32xf32>
    %97 = arith.mulf %90, %96 : vector<8x32xf32>
    %98 = vector.shape_cast %79 : vector<8x1xi1> to vector<8x1xi1>
    %99 = vector.broadcast %98 : vector<8x1xi1> to vector<8x32xi1>
    %100 = arith.select %99, %97, %44 : vector<8x32xi1>, vector<8x32xf32>
    %101 = vector.shape_cast %79 : vector<8x1xi1> to vector<8x1xi1>
    %102 = vector.broadcast %101 : vector<8x1xi1> to vector<8x32xi1>
    %103 = arith.select %102, %95, %47 : vector<8x32xi1>, vector<8x32xf32>
    %cst_29 = arith.constant dense<0.000000e+00> : vector<8x128xf32>
    %104 = tpu.matmul %100, %19, %cst_29 {dimension_numbers = #tpu.dot_dimension_numbers<[1], [0], [0], [1], [0, 0, 1, 1], [], []>} : vector<8x32xf32>, vector<32x128xf32>, vector<8x128xf32> -> vector<8x128xf32>
    %cst_30 = arith.constant dense<0.000000e+00> : vector<8x128xf32>
    %105 = tpu.matmul %69, %20, %cst_30 {dimension_numbers = #tpu.dot_dimension_numbers<[1], [0], [0], [1], [0, 0, 1, 1], [], []>} : vector<8x32xf32>, vector<32x128xf32>, vector<8x128xf32> -> vector<8x128xf32>
    %106 = arith.addf %104, %105 : vector<8x128xf32>
    %107 = arith.addf %106, %16 : vector<8x128xf32>
    %108 = arith.negf %107 : vector<8x128xf32>
    %109 = math.exp %108 : vector<8x128xf32>
    %cst_31 = arith.constant 1.000000e+00 : f32
    %110 = vector.broadcast %cst_31 : f32 to vector<8x128xf32>
    %111 = arith.addf %110, %109 : vector<8x128xf32>
    %112 = arith.divf %110, %111 : vector<8x128xf32>
    %113 = vector.extract_strided_slice %112 {offsets = [0, 0], sizes = [8, 32], strides = [1, 1]} : vector<8x128xf32> to vector<8x32xf32>
    %114 = vector.extract_strided_slice %112 {offsets = [0, 32], sizes = [8, 32], strides = [1, 1]} : vector<8x128xf32> to vector<8x32xf32>
    %115 = vector.extract_strided_slice %112 {offsets = [0, 96], sizes = [8, 32], strides = [1, 1]} : vector<8x128xf32> to vector<8x32xf32>
    %116 = vector.extract_strided_slice %107 {offsets = [0, 64], sizes = [8, 32], strides = [1, 1]} : vector<8x128xf32> to vector<8x32xf32>
    %117 = math.tanh %116 : vector<8x32xf32>
    %118 = arith.mulf %114, %72 : vector<8x32xf32>
    %119 = arith.mulf %113, %117 : vector<8x32xf32>
    %120 = arith.addf %118, %119 : vector<8x32xf32>
    %121 = math.tanh %120 : vector<8x32xf32>
    %122 = arith.mulf %115, %121 : vector<8x32xf32>
    %123 = vector.shape_cast %79 : vector<8x1xi1> to vector<8x1xi1>
    %124 = vector.broadcast %123 : vector<8x1xi1> to vector<8x32xi1>
    %125 = arith.select %124, %122, %69 : vector<8x32xi1>, vector<8x32xf32>
    %126 = vector.shape_cast %79 : vector<8x1xi1> to vector<8x1xi1>
    %127 = vector.broadcast %126 : vector<8x1xi1> to vector<8x32xi1>
    %128 = arith.select %127, %120, %72 : vector<8x32xi1>, vector<8x32xf32>
    %cst_32 = arith.constant 0.000000e+00 : f32
    %129 = vector.shape_cast %79 : vector<8x1xi1> to vector<8x1xi1>
    %130 = vector.broadcast %129 : vector<8x1xi1> to vector<8x32xi1>
    %131 = vector.broadcast %cst_32 : f32 to vector<8x32xf32>
    %132 = arith.select %130, %125, %131 : vector<8x32xi1>, vector<8x32xf32>
    %c0_33 = arith.constant 0 : index
    %c32 = arith.constant 32 : index
    %133 = vector.load %arg11[%c0_33, %c32] : memref<8x256xf32, #tpu.memory_space<vmem>>, vector<8x32xf32>
    tpu.vector_store %arg11[%c0_33, %c32], %132 {strides = array<i32>} : memref<8x256xf32, #tpu.memory_space<vmem>>, vector<8x32xf32>,
    %c2_i32 = arith.constant 2 : i32
    %134 = vector.broadcast %c2_i32 : i32 to vector<8x1xi32>
    %135 = arith.cmpi sgt, %17, %134 : vector<8x1xi32>
    %136 = vector.extract_strided_slice %13 {offsets = [16, 0], sizes = [8, 128], strides = [1, 1]} : vector<64x128xf32> to vector<8x128xf32>
    %cst_34 = arith.constant dense<0.000000e+00> : vector<8x128xf32>
    %137 = tpu.matmul %100, %18, %cst_34 {dimension_numbers = #tpu.dot_dimension_numbers<[1], [0], [0], [1], [0, 0, 1, 1], [], []>} : vector<8x32xf32>, vector<32x128xf32>, vector<8x128xf32> -> vector<8x128xf32>
    %138 = arith.addf %136, %137 : vector<8x128xf32>
    %139 = arith.negf %138 : vector<8x128xf32>
    %140 = math.exp %139 : vector<8x128xf32>
    %cst_35 = arith.constant 1.000000e+00 : f32
    %141 = vector.broadcast %cst_35 : f32 to vector<8x128xf32>
    %142 = arith.addf %141, %140 : vector<8x128xf32>
    %143 = arith.divf %141, %142 : vector<8x128xf32>
    %144 = vector.extract_strided_slice %143 {offsets = [0, 0], sizes = [8, 32], strides = [1, 1]} : vector<8x128xf32> to vector<8x32xf32>
    %145 = vector.extract_strided_slice %143 {offsets = [0, 32], sizes = [8, 32], strides = [1, 1]} : vector<8x128xf32> to vector<8x32xf32>
    %146 = vector.extract_strided_slice %143 {offsets = [0, 96], sizes = [8, 32], strides = [1, 1]} : vector<8x128xf32> to vector<8x32xf32>
    %147 = vector.extract_strided_slice %138 {offsets = [0, 64], sizes = [8, 32], strides = [1, 1]} : vector<8x128xf32> to vector<8x32xf32>
    %148 = math.tanh %147 : vector<8x32xf32>
    %149 = arith.mulf %145, %103 : vector<8x32xf32>
    %150 = arith.mulf %144, %148 : vector<8x32xf32>
    %151 = arith.addf %149, %150 : vector<8x32xf32>
    %152 = math.tanh %151 : vector<8x32xf32>
    %153 = arith.mulf %146, %152 : vector<8x32xf32>
    %154 = vector.shape_cast %135 : vector<8x1xi1> to vector<8x1xi1>
    %155 = vector.broadcast %154 : vector<8x1xi1> to vector<8x32xi1>
    %156 = arith.select %155, %153, %100 : vector<8x32xi1>, vector<8x32xf32>
    %157 = vector.shape_cast %135 : vector<8x1xi1> to vector<8x1xi1>
    %158 = vector.broadcast %157 : vector<8x1xi1> to vector<8x32xi1>
    %159 = arith.select %158, %151, %103 : vector<8x32xi1>, vector<8x32xf32>
    %cst_36 = arith.constant dense<0.000000e+00> : vector<8x128xf32>
    %160 = tpu.matmul %156, %19, %cst_36 {dimension_numbers = #tpu.dot_dimension_numbers<[1], [0], [0], [1], [0, 0, 1, 1], [], []>} : vector<8x32xf32>, vector<32x128xf32>, vector<8x128xf32> -> vector<8x128xf32>
    %cst_37 = arith.constant dense<0.000000e+00> : vector<8x128xf32>
    %161 = tpu.matmul %125, %20, %cst_37 {dimension_numbers = #tpu.dot_dimension_numbers<[1], [0], [0], [1], [0, 0, 1, 1], [], []>} : vector<8x32xf32>, vector<32x128xf32>, vector<8x128xf32> -> vector<8x128xf32>
    %162 = arith.addf %160, %161 : vector<8x128xf32>
    %163 = arith.addf %162, %16 : vector<8x128xf32>
    %164 = arith.negf %163 : vector<8x128xf32>
    %165 = math.exp %164 : vector<8x128xf32>
    %cst_38 = arith.constant 1.000000e+00 : f32
    %166 = vector.broadcast %cst_38 : f32 to vector<8x128xf32>
    %167 = arith.addf %166, %165 : vector<8x128xf32>
    %168 = arith.divf %166, %167 : vector<8x128xf32>
    %169 = vector.extract_strided_slice %168 {offsets = [0, 0], sizes = [8, 32], strides = [1, 1]} : vector<8x128xf32> to vector<8x32xf32>
    %170 = vector.extract_strided_slice %168 {offsets = [0, 32], sizes = [8, 32], strides = [1, 1]} : vector<8x128xf32> to vector<8x32xf32>
    %171 = vector.extract_strided_slice %168 {offsets = [0, 96], sizes = [8, 32], strides = [1, 1]} : vector<8x128xf32> to vector<8x32xf32>
    %172 = vector.extract_strided_slice %163 {offsets = [0, 64], sizes = [8, 32], strides = [1, 1]} : vector<8x128xf32> to vector<8x32xf32>
    %173 = math.tanh %172 : vector<8x32xf32>
    %174 = arith.mulf %170, %128 : vector<8x32xf32>
    %175 = arith.mulf %169, %173 : vector<8x32xf32>
    %176 = arith.addf %174, %175 : vector<8x32xf32>
    %177 = math.tanh %176 : vector<8x32xf32>
    %178 = arith.mulf %171, %177 : vector<8x32xf32>
    %179 = vector.shape_cast %135 : vector<8x1xi1> to vector<8x1xi1>
    %180 = vector.broadcast %179 : vector<8x1xi1> to vector<8x32xi1>
    %181 = arith.select %180, %178, %125 : vector<8x32xi1>, vector<8x32xf32>
    %182 = vector.shape_cast %135 : vector<8x1xi1> to vector<8x1xi1>
    %183 = vector.broadcast %182 : vector<8x1xi1> to vector<8x32xi1>
    %184 = arith.select %183, %176, %128 : vector<8x32xi1>, vector<8x32xf32>
    %cst_39 = arith.constant 0.000000e+00 : f32
    %185 = vector.shape_cast %135 : vector<8x1xi1> to vector<8x1xi1>
    %186 = vector.broadcast %185 : vector<8x1xi1> to vector<8x32xi1>
    %187 = vector.broadcast %cst_39 : f32 to vector<8x32xf32>
    %188 = arith.select %186, %181, %187 : vector<8x32xi1>, vector<8x32xf32>
    %c0_40 = arith.constant 0 : index
    %c64 = arith.constant 64 : index
    %189 = vector.load %arg11[%c0_40, %c64] : memref<8x256xf32, #tpu.memory_space<vmem>>, vector<8x32xf32>
    tpu.vector_store %arg11[%c0_40, %c64], %188 {strides = array<i32>} : memref<8x256xf32, #tpu.memory_space<vmem>>, vector<8x32xf32>,
    %c3_i32 = arith.constant 3 : i32
    %190 = vector.broadcast %c3_i32 : i32 to vector<8x1xi32>
    %191 = arith.cmpi sgt, %17, %190 : vector<8x1xi32>
    %192 = vector.extract_strided_slice %13 {offsets = [24, 0], sizes = [8, 128], strides = [1, 1]} : vector<64x128xf32> to vector<8x128xf32>
    %cst_41 = arith.constant dense<0.000000e+00> : vector<8x128xf32>
    %193 = tpu.matmul %156, %18, %cst_41 {dimension_numbers = #tpu.dot_dimension_numbers<[1], [0], [0], [1], [0, 0, 1, 1], [], []>} : vector<8x32xf32>, vector<32x128xf32>, vector<8x128xf32> -> vector<8x128xf32>
    %194 = arith.addf %192, %193 : vector<8x128xf32>
    %195 = arith.negf %194 : vector<8x128xf32>
    %196 = math.exp %195 : vector<8x128xf32>
    %cst_42 = arith.constant 1.000000e+00 : f32
    %197 = vector.broadcast %cst_42 : f32 to vector<8x128xf32>
    %198 = arith.addf %197, %196 : vector<8x128xf32>
    %199 = arith.divf %197, %198 : vector<8x128xf32>
    %200 = vector.extract_strided_slice %199 {offsets = [0, 0], sizes = [8, 32], strides = [1, 1]} : vector<8x128xf32> to vector<8x32xf32>
    %201 = vector.extract_strided_slice %199 {offsets = [0, 32], sizes = [8, 32], strides = [1, 1]} : vector<8x128xf32> to vector<8x32xf32>
    %202 = vector.extract_strided_slice %199 {offsets = [0, 96], sizes = [8, 32], strides = [1, 1]} : vector<8x128xf32> to vector<8x32xf32>
    %203 = vector.extract_strided_slice %194 {offsets = [0, 64], sizes = [8, 32], strides = [1, 1]} : vector<8x128xf32> to vector<8x32xf32>
    %204 = math.tanh %203 : vector<8x32xf32>
    %205 = arith.mulf %201, %159 : vector<8x32xf32>
    %206 = arith.mulf %200, %204 : vector<8x32xf32>
    %207 = arith.addf %205, %206 : vector<8x32xf32>
    %208 = math.tanh %207 : vector<8x32xf32>
    %209 = arith.mulf %202, %208 : vector<8x32xf32>
    %210 = vector.shape_cast %191 : vector<8x1xi1> to vector<8x1xi1>
    %211 = vector.broadcast %210 : vector<8x1xi1> to vector<8x32xi1>
    %212 = arith.select %211, %209, %156 : vector<8x32xi1>, vector<8x32xf32>
    %213 = vector.shape_cast %191 : vector<8x1xi1> to vector<8x1xi1>
    %214 = vector.broadcast %213 : vector<8x1xi1> to vector<8x32xi1>
    %215 = arith.select %214, %207, %159 : vector<8x32xi1>, vector<8x32xf32>
    %cst_43 = arith.constant dense<0.000000e+00> : vector<8x128xf32>
    %216 = tpu.matmul %212, %19, %cst_43 {dimension_numbers = #tpu.dot_dimension_numbers<[1], [0], [0], [1], [0, 0, 1, 1], [], []>} : vector<8x32xf32>, vector<32x128xf32>, vector<8x128xf32> -> vector<8x128xf32>
    %cst_44 = arith.constant dense<0.000000e+00> : vector<8x128xf32>
    %217 = tpu.matmul %181, %20, %cst_44 {dimension_numbers = #tpu.dot_dimension_numbers<[1], [0], [0], [1], [0, 0, 1, 1], [], []>} : vector<8x32xf32>, vector<32x128xf32>, vector<8x128xf32> -> vector<8x128xf32>
    %218 = arith.addf %216, %217 : vector<8x128xf32>
    %219 = arith.addf %218, %16 : vector<8x128xf32>
    %220 = arith.negf %219 : vector<8x128xf32>
    %221 = math.exp %220 : vector<8x128xf32>
    %cst_45 = arith.constant 1.000000e+00 : f32
    %222 = vector.broadcast %cst_45 : f32 to vector<8x128xf32>
    %223 = arith.addf %222, %221 : vector<8x128xf32>
    %224 = arith.divf %222, %223 : vector<8x128xf32>
    %225 = vector.extract_strided_slice %224 {offsets = [0, 0], sizes = [8, 32], strides = [1, 1]} : vector<8x128xf32> to vector<8x32xf32>
    %226 = vector.extract_strided_slice %224 {offsets = [0, 32], sizes = [8, 32], strides = [1, 1]} : vector<8x128xf32> to vector<8x32xf32>
    %227 = vector.extract_strided_slice %224 {offsets = [0, 96], sizes = [8, 32], strides = [1, 1]} : vector<8x128xf32> to vector<8x32xf32>
    %228 = vector.extract_strided_slice %219 {offsets = [0, 64], sizes = [8, 32], strides = [1, 1]} : vector<8x128xf32> to vector<8x32xf32>
    %229 = math.tanh %228 : vector<8x32xf32>
    %230 = arith.mulf %226, %184 : vector<8x32xf32>
    %231 = arith.mulf %225, %229 : vector<8x32xf32>
    %232 = arith.addf %230, %231 : vector<8x32xf32>
    %233 = math.tanh %232 : vector<8x32xf32>
    %234 = arith.mulf %227, %233 : vector<8x32xf32>
    %235 = vector.shape_cast %191 : vector<8x1xi1> to vector<8x1xi1>
    %236 = vector.broadcast %235 : vector<8x1xi1> to vector<8x32xi1>
    %237 = arith.select %236, %234, %181 : vector<8x32xi1>, vector<8x32xf32>
    %238 = vector.shape_cast %191 : vector<8x1xi1> to vector<8x1xi1>
    %239 = vector.broadcast %238 : vector<8x1xi1> to vector<8x32xi1>
    %240 = arith.select %239, %232, %184 : vector<8x32xi1>, vector<8x32xf32>
    %cst_46 = arith.constant 0.000000e+00 : f32
    %241 = vector.shape_cast %191 : vector<8x1xi1> to vector<8x1xi1>
    %242 = vector.broadcast %241 : vector<8x1xi1> to vector<8x32xi1>
    %243 = vector.broadcast %cst_46 : f32 to vector<8x32xf32>
    %244 = arith.select %242, %237, %243 : vector<8x32xi1>, vector<8x32xf32>
    %c0_47 = arith.constant 0 : index
    %c96 = arith.constant 96 : index
    %245 = vector.load %arg11[%c0_47, %c96] : memref<8x256xf32, #tpu.memory_space<vmem>>, vector<8x32xf32>
    tpu.vector_store %arg11[%c0_47, %c96], %244 {strides = array<i32>} : memref<8x256xf32, #tpu.memory_space<vmem>>, vector<8x32xf32>,
    %c4_i32 = arith.constant 4 : i32
    %246 = vector.broadcast %c4_i32 : i32 to vector<8x1xi32>
    %247 = arith.cmpi sgt, %17, %246 : vector<8x1xi32>
    %248 = vector.extract_strided_slice %13 {offsets = [32, 0], sizes = [8, 128], strides = [1, 1]} : vector<64x128xf32> to vector<8x128xf32>
    %cst_48 = arith.constant dense<0.000000e+00> : vector<8x128xf32>
    %249 = tpu.matmul %212, %18, %cst_48 {dimension_numbers = #tpu.dot_dimension_numbers<[1], [0], [0], [1], [0, 0, 1, 1], [], []>} : vector<8x32xf32>, vector<32x128xf32>, vector<8x128xf32> -> vector<8x128xf32>
    %250 = arith.addf %248, %249 : vector<8x128xf32>
    %251 = arith.negf %250 : vector<8x128xf32>
    %252 = math.exp %251 : vector<8x128xf32>
    %cst_49 = arith.constant 1.000000e+00 : f32
    %253 = vector.broadcast %cst_49 : f32 to vector<8x128xf32>
    %254 = arith.addf %253, %252 : vector<8x128xf32>
    %255 = arith.divf %253, %254 : vector<8x128xf32>
    %256 = vector.extract_strided_slice %255 {offsets = [0, 0], sizes = [8, 32], strides = [1, 1]} : vector<8x128xf32> to vector<8x32xf32>
    %257 = vector.extract_strided_slice %255 {offsets = [0, 32], sizes = [8, 32], strides = [1, 1]} : vector<8x128xf32> to vector<8x32xf32>
    %258 = vector.extract_strided_slice %255 {offsets = [0, 96], sizes = [8, 32], strides = [1, 1]} : vector<8x128xf32> to vector<8x32xf32>
    %259 = vector.extract_strided_slice %250 {offsets = [0, 64], sizes = [8, 32], strides = [1, 1]} : vector<8x128xf32> to vector<8x32xf32>
    %260 = math.tanh %259 : vector<8x32xf32>
    %261 = arith.mulf %257, %215 : vector<8x32xf32>
    %262 = arith.mulf %256, %260 : vector<8x32xf32>
    %263 = arith.addf %261, %262 : vector<8x32xf32>
    %264 = math.tanh %263 : vector<8x32xf32>
    %265 = arith.mulf %258, %264 : vector<8x32xf32>
    %266 = vector.shape_cast %247 : vector<8x1xi1> to vector<8x1xi1>
    %267 = vector.broadcast %266 : vector<8x1xi1> to vector<8x32xi1>
    %268 = arith.select %267, %265, %212 : vector<8x32xi1>, vector<8x32xf32>
    %269 = vector.shape_cast %247 : vector<8x1xi1> to vector<8x1xi1>
    %270 = vector.broadcast %269 : vector<8x1xi1> to vector<8x32xi1>
    %271 = arith.select %270, %263, %215 : vector<8x32xi1>, vector<8x32xf32>
    %cst_50 = arith.constant dense<0.000000e+00> : vector<8x128xf32>
    %272 = tpu.matmul %268, %19, %cst_50 {dimension_numbers = #tpu.dot_dimension_numbers<[1], [0], [0], [1], [0, 0, 1, 1], [], []>} : vector<8x32xf32>, vector<32x128xf32>, vector<8x128xf32> -> vector<8x128xf32>
    %cst_51 = arith.constant dense<0.000000e+00> : vector<8x128xf32>
    %273 = tpu.matmul %237, %20, %cst_51 {dimension_numbers = #tpu.dot_dimension_numbers<[1], [0], [0], [1], [0, 0, 1, 1], [], []>} : vector<8x32xf32>, vector<32x128xf32>, vector<8x128xf32> -> vector<8x128xf32>
    %274 = arith.addf %272, %273 : vector<8x128xf32>
    %275 = arith.addf %274, %16 : vector<8x128xf32>
    %276 = arith.negf %275 : vector<8x128xf32>
    %277 = math.exp %276 : vector<8x128xf32>
    %cst_52 = arith.constant 1.000000e+00 : f32
    %278 = vector.broadcast %cst_52 : f32 to vector<8x128xf32>
    %279 = arith.addf %278, %277 : vector<8x128xf32>
    %280 = arith.divf %278, %279 : vector<8x128xf32>
    %281 = vector.extract_strided_slice %280 {offsets = [0, 0], sizes = [8, 32], strides = [1, 1]} : vector<8x128xf32> to vector<8x32xf32>
    %282 = vector.extract_strided_slice %280 {offsets = [0, 32], sizes = [8, 32], strides = [1, 1]} : vector<8x128xf32> to vector<8x32xf32>
    %283 = vector.extract_strided_slice %280 {offsets = [0, 96], sizes = [8, 32], strides = [1, 1]} : vector<8x128xf32> to vector<8x32xf32>
    %284 = vector.extract_strided_slice %275 {offsets = [0, 64], sizes = [8, 32], strides = [1, 1]} : vector<8x128xf32> to vector<8x32xf32>
    %285 = math.tanh %284 : vector<8x32xf32>
    %286 = arith.mulf %282, %240 : vector<8x32xf32>
    %287 = arith.mulf %281, %285 : vector<8x32xf32>
    %288 = arith.addf %286, %287 : vector<8x32xf32>
    %289 = math.tanh %288 : vector<8x32xf32>
    %290 = arith.mulf %283, %289 : vector<8x32xf32>
    %291 = vector.shape_cast %247 : vector<8x1xi1> to vector<8x1xi1>
    %292 = vector.broadcast %291 : vector<8x1xi1> to vector<8x32xi1>
    %293 = arith.select %292, %290, %237 : vector<8x32xi1>, vector<8x32xf32>
    %294 = vector.shape_cast %247 : vector<8x1xi1> to vector<8x1xi1>
    %295 = vector.broadcast %294 : vector<8x1xi1> to vector<8x32xi1>
    %296 = arith.select %295, %288, %240 : vector<8x32xi1>, vector<8x32xf32>
    %cst_53 = arith.constant 0.000000e+00 : f32
    %297 = vector.shape_cast %247 : vector<8x1xi1> to vector<8x1xi1>
    %298 = vector.broadcast %297 : vector<8x1xi1> to vector<8x32xi1>
    %299 = vector.broadcast %cst_53 : f32 to vector<8x32xf32>
    %300 = arith.select %298, %293, %299 : vector<8x32xi1>, vector<8x32xf32>
    %c0_54 = arith.constant 0 : index
    %c128 = arith.constant 128 : index
    %301 = vector.load %arg11[%c0_54, %c128] : memref<8x256xf32, #tpu.memory_space<vmem>>, vector<8x32xf32>
    tpu.vector_store %arg11[%c0_54, %c128], %300 {strides = array<i32>} : memref<8x256xf32, #tpu.memory_space<vmem>>, vector<8x32xf32>,
    %c5_i32 = arith.constant 5 : i32
    %302 = vector.broadcast %c5_i32 : i32 to vector<8x1xi32>
    %303 = arith.cmpi sgt, %17, %302 : vector<8x1xi32>
    %304 = vector.extract_strided_slice %13 {offsets = [40, 0], sizes = [8, 128], strides = [1, 1]} : vector<64x128xf32> to vector<8x128xf32>
    %cst_55 = arith.constant dense<0.000000e+00> : vector<8x128xf32>
    %305 = tpu.matmul %268, %18, %cst_55 {dimension_numbers = #tpu.dot_dimension_numbers<[1], [0], [0], [1], [0, 0, 1, 1], [], []>} : vector<8x32xf32>, vector<32x128xf32>, vector<8x128xf32> -> vector<8x128xf32>
    %306 = arith.addf %304, %305 : vector<8x128xf32>
    %307 = arith.negf %306 : vector<8x128xf32>
    %308 = math.exp %307 : vector<8x128xf32>
    %cst_56 = arith.constant 1.000000e+00 : f32
    %309 = vector.broadcast %cst_56 : f32 to vector<8x128xf32>
    %310 = arith.addf %309, %308 : vector<8x128xf32>
    %311 = arith.divf %309, %310 : vector<8x128xf32>
    %312 = vector.extract_strided_slice %311 {offsets = [0, 0], sizes = [8, 32], strides = [1, 1]} : vector<8x128xf32> to vector<8x32xf32>
    %313 = vector.extract_strided_slice %311 {offsets = [0, 32], sizes = [8, 32], strides = [1, 1]} : vector<8x128xf32> to vector<8x32xf32>
    %314 = vector.extract_strided_slice %311 {offsets = [0, 96], sizes = [8, 32], strides = [1, 1]} : vector<8x128xf32> to vector<8x32xf32>
    %315 = vector.extract_strided_slice %306 {offsets = [0, 64], sizes = [8, 32], strides = [1, 1]} : vector<8x128xf32> to vector<8x32xf32>
    %316 = math.tanh %315 : vector<8x32xf32>
    %317 = arith.mulf %313, %271 : vector<8x32xf32>
    %318 = arith.mulf %312, %316 : vector<8x32xf32>
    %319 = arith.addf %317, %318 : vector<8x32xf32>
    %320 = math.tanh %319 : vector<8x32xf32>
    %321 = arith.mulf %314, %320 : vector<8x32xf32>
    %322 = vector.shape_cast %303 : vector<8x1xi1> to vector<8x1xi1>
    %323 = vector.broadcast %322 : vector<8x1xi1> to vector<8x32xi1>
    %324 = arith.select %323, %321, %268 : vector<8x32xi1>, vector<8x32xf32>
    %325 = vector.shape_cast %303 : vector<8x1xi1> to vector<8x1xi1>
    %326 = vector.broadcast %325 : vector<8x1xi1> to vector<8x32xi1>
    %327 = arith.select %326, %319, %271 : vector<8x32xi1>, vector<8x32xf32>
    %cst_57 = arith.constant dense<0.000000e+00> : vector<8x128xf32>
    %328 = tpu.matmul %324, %19, %cst_57 {dimension_numbers = #tpu.dot_dimension_numbers<[1], [0], [0], [1], [0, 0, 1, 1], [], []>} : vector<8x32xf32>, vector<32x128xf32>, vector<8x128xf32> -> vector<8x128xf32>
    %cst_58 = arith.constant dense<0.000000e+00> : vector<8x128xf32>
    %329 = tpu.matmul %293, %20, %cst_58 {dimension_numbers = #tpu.dot_dimension_numbers<[1], [0], [0], [1], [0, 0, 1, 1], [], []>} : vector<8x32xf32>, vector<32x128xf32>, vector<8x128xf32> -> vector<8x128xf32>
    %330 = arith.addf %328, %329 : vector<8x128xf32>
    %331 = arith.addf %330, %16 : vector<8x128xf32>
    %332 = arith.negf %331 : vector<8x128xf32>
    %333 = math.exp %332 : vector<8x128xf32>
    %cst_59 = arith.constant 1.000000e+00 : f32
    %334 = vector.broadcast %cst_59 : f32 to vector<8x128xf32>
    %335 = arith.addf %334, %333 : vector<8x128xf32>
    %336 = arith.divf %334, %335 : vector<8x128xf32>
    %337 = vector.extract_strided_slice %336 {offsets = [0, 0], sizes = [8, 32], strides = [1, 1]} : vector<8x128xf32> to vector<8x32xf32>
    %338 = vector.extract_strided_slice %336 {offsets = [0, 32], sizes = [8, 32], strides = [1, 1]} : vector<8x128xf32> to vector<8x32xf32>
    %339 = vector.extract_strided_slice %336 {offsets = [0, 96], sizes = [8, 32], strides = [1, 1]} : vector<8x128xf32> to vector<8x32xf32>
    %340 = vector.extract_strided_slice %331 {offsets = [0, 64], sizes = [8, 32], strides = [1, 1]} : vector<8x128xf32> to vector<8x32xf32>
    %341 = math.tanh %340 : vector<8x32xf32>
    %342 = arith.mulf %338, %296 : vector<8x32xf32>
    %343 = arith.mulf %337, %341 : vector<8x32xf32>
    %344 = arith.addf %342, %343 : vector<8x32xf32>
    %345 = math.tanh %344 : vector<8x32xf32>
    %346 = arith.mulf %339, %345 : vector<8x32xf32>
    %347 = vector.shape_cast %303 : vector<8x1xi1> to vector<8x1xi1>
    %348 = vector.broadcast %347 : vector<8x1xi1> to vector<8x32xi1>
    %349 = arith.select %348, %346, %293 : vector<8x32xi1>, vector<8x32xf32>
    %350 = vector.shape_cast %303 : vector<8x1xi1> to vector<8x1xi1>
    %351 = vector.broadcast %350 : vector<8x1xi1> to vector<8x32xi1>
    %352 = arith.select %351, %344, %296 : vector<8x32xi1>, vector<8x32xf32>
    %cst_60 = arith.constant 0.000000e+00 : f32
    %353 = vector.shape_cast %303 : vector<8x1xi1> to vector<8x1xi1>
    %354 = vector.broadcast %353 : vector<8x1xi1> to vector<8x32xi1>
    %355 = vector.broadcast %cst_60 : f32 to vector<8x32xf32>
    %356 = arith.select %354, %349, %355 : vector<8x32xi1>, vector<8x32xf32>
    %c0_61 = arith.constant 0 : index
    %c160 = arith.constant 160 : index
    %357 = vector.load %arg11[%c0_61, %c160] : memref<8x256xf32, #tpu.memory_space<vmem>>, vector<8x32xf32>
    tpu.vector_store %arg11[%c0_61, %c160], %356 {strides = array<i32>} : memref<8x256xf32, #tpu.memory_space<vmem>>, vector<8x32xf32>,
    %c6_i32 = arith.constant 6 : i32
    %358 = vector.broadcast %c6_i32 : i32 to vector<8x1xi32>
    %359 = arith.cmpi sgt, %17, %358 : vector<8x1xi32>
    %360 = vector.extract_strided_slice %13 {offsets = [48, 0], sizes = [8, 128], strides = [1, 1]} : vector<64x128xf32> to vector<8x128xf32>
    %cst_62 = arith.constant dense<0.000000e+00> : vector<8x128xf32>
    %361 = tpu.matmul %324, %18, %cst_62 {dimension_numbers = #tpu.dot_dimension_numbers<[1], [0], [0], [1], [0, 0, 1, 1], [], []>} : vector<8x32xf32>, vector<32x128xf32>, vector<8x128xf32> -> vector<8x128xf32>
    %362 = arith.addf %360, %361 : vector<8x128xf32>
    %363 = arith.negf %362 : vector<8x128xf32>
    %364 = math.exp %363 : vector<8x128xf32>
    %cst_63 = arith.constant 1.000000e+00 : f32
    %365 = vector.broadcast %cst_63 : f32 to vector<8x128xf32>
    %366 = arith.addf %365, %364 : vector<8x128xf32>
    %367 = arith.divf %365, %366 : vector<8x128xf32>
    %368 = vector.extract_strided_slice %367 {offsets = [0, 0], sizes = [8, 32], strides = [1, 1]} : vector<8x128xf32> to vector<8x32xf32>
    %369 = vector.extract_strided_slice %367 {offsets = [0, 32], sizes = [8, 32], strides = [1, 1]} : vector<8x128xf32> to vector<8x32xf32>
    %370 = vector.extract_strided_slice %367 {offsets = [0, 96], sizes = [8, 32], strides = [1, 1]} : vector<8x128xf32> to vector<8x32xf32>
    %371 = vector.extract_strided_slice %362 {offsets = [0, 64], sizes = [8, 32], strides = [1, 1]} : vector<8x128xf32> to vector<8x32xf32>
    %372 = math.tanh %371 : vector<8x32xf32>
    %373 = arith.mulf %369, %327 : vector<8x32xf32>
    %374 = arith.mulf %368, %372 : vector<8x32xf32>
    %375 = arith.addf %373, %374 : vector<8x32xf32>
    %376 = math.tanh %375 : vector<8x32xf32>
    %377 = arith.mulf %370, %376 : vector<8x32xf32>
    %378 = vector.shape_cast %359 : vector<8x1xi1> to vector<8x1xi1>
    %379 = vector.broadcast %378 : vector<8x1xi1> to vector<8x32xi1>
    %380 = arith.select %379, %377, %324 : vector<8x32xi1>, vector<8x32xf32>
    %381 = vector.shape_cast %359 : vector<8x1xi1> to vector<8x1xi1>
    %382 = vector.broadcast %381 : vector<8x1xi1> to vector<8x32xi1>
    %383 = arith.select %382, %375, %327 : vector<8x32xi1>, vector<8x32xf32>
    %cst_64 = arith.constant dense<0.000000e+00> : vector<8x128xf32>
    %384 = tpu.matmul %380, %19, %cst_64 {dimension_numbers = #tpu.dot_dimension_numbers<[1], [0], [0], [1], [0, 0, 1, 1], [], []>} : vector<8x32xf32>, vector<32x128xf32>, vector<8x128xf32> -> vector<8x128xf32>
    %cst_65 = arith.constant dense<0.000000e+00> : vector<8x128xf32>
    %385 = tpu.matmul %349, %20, %cst_65 {dimension_numbers = #tpu.dot_dimension_numbers<[1], [0], [0], [1], [0, 0, 1, 1], [], []>} : vector<8x32xf32>, vector<32x128xf32>, vector<8x128xf32> -> vector<8x128xf32>
    %386 = arith.addf %384, %385 : vector<8x128xf32>
    %387 = arith.addf %386, %16 : vector<8x128xf32>
    %388 = arith.negf %387 : vector<8x128xf32>
    %389 = math.exp %388 : vector<8x128xf32>
    %cst_66 = arith.constant 1.000000e+00 : f32
    %390 = vector.broadcast %cst_66 : f32 to vector<8x128xf32>
    %391 = arith.addf %390, %389 : vector<8x128xf32>
    %392 = arith.divf %390, %391 : vector<8x128xf32>
    %393 = vector.extract_strided_slice %392 {offsets = [0, 0], sizes = [8, 32], strides = [1, 1]} : vector<8x128xf32> to vector<8x32xf32>
    %394 = vector.extract_strided_slice %392 {offsets = [0, 32], sizes = [8, 32], strides = [1, 1]} : vector<8x128xf32> to vector<8x32xf32>
    %395 = vector.extract_strided_slice %392 {offsets = [0, 96], sizes = [8, 32], strides = [1, 1]} : vector<8x128xf32> to vector<8x32xf32>
    %396 = vector.extract_strided_slice %387 {offsets = [0, 64], sizes = [8, 32], strides = [1, 1]} : vector<8x128xf32> to vector<8x32xf32>
    %397 = math.tanh %396 : vector<8x32xf32>
    %398 = arith.mulf %394, %352 : vector<8x32xf32>
    %399 = arith.mulf %393, %397 : vector<8x32xf32>
    %400 = arith.addf %398, %399 : vector<8x32xf32>
    %401 = math.tanh %400 : vector<8x32xf32>
    %402 = arith.mulf %395, %401 : vector<8x32xf32>
    %403 = vector.shape_cast %359 : vector<8x1xi1> to vector<8x1xi1>
    %404 = vector.broadcast %403 : vector<8x1xi1> to vector<8x32xi1>
    %405 = arith.select %404, %402, %349 : vector<8x32xi1>, vector<8x32xf32>
    %406 = vector.shape_cast %359 : vector<8x1xi1> to vector<8x1xi1>
    %407 = vector.broadcast %406 : vector<8x1xi1> to vector<8x32xi1>
    %408 = arith.select %407, %400, %352 : vector<8x32xi1>, vector<8x32xf32>
    %cst_67 = arith.constant 0.000000e+00 : f32
    %409 = vector.shape_cast %359 : vector<8x1xi1> to vector<8x1xi1>
    %410 = vector.broadcast %409 : vector<8x1xi1> to vector<8x32xi1>
    %411 = vector.broadcast %cst_67 : f32 to vector<8x32xf32>
    %412 = arith.select %410, %405, %411 : vector<8x32xi1>, vector<8x32xf32>
    %c0_68 = arith.constant 0 : index
    %c192 = arith.constant 192 : index
    %413 = vector.load %arg11[%c0_68, %c192] : memref<8x256xf32, #tpu.memory_space<vmem>>, vector<8x32xf32>
    tpu.vector_store %arg11[%c0_68, %c192], %412 {strides = array<i32>} : memref<8x256xf32, #tpu.memory_space<vmem>>, vector<8x32xf32>,
    %c7_i32 = arith.constant 7 : i32
    %414 = vector.broadcast %c7_i32 : i32 to vector<8x1xi32>
    %415 = arith.cmpi sgt, %17, %414 : vector<8x1xi32>
    %416 = vector.extract_strided_slice %13 {offsets = [56, 0], sizes = [8, 128], strides = [1, 1]} : vector<64x128xf32> to vector<8x128xf32>
    %cst_69 = arith.constant dense<0.000000e+00> : vector<8x128xf32>
    %417 = tpu.matmul %380, %18, %cst_69 {dimension_numbers = #tpu.dot_dimension_numbers<[1], [0], [0], [1], [0, 0, 1, 1], [], []>} : vector<8x32xf32>, vector<32x128xf32>, vector<8x128xf32> -> vector<8x128xf32>
    %418 = arith.addf %416, %417 : vector<8x128xf32>
    %419 = arith.negf %418 : vector<8x128xf32>
    %420 = math.exp %419 : vector<8x128xf32>
    %cst_70 = arith.constant 1.000000e+00 : f32
    %421 = vector.broadcast %cst_70 : f32 to vector<8x128xf32>
    %422 = arith.addf %421, %420 : vector<8x128xf32>
    %423 = arith.divf %421, %422 : vector<8x128xf32>
    %424 = vector.extract_strided_slice %423 {offsets = [0, 0], sizes = [8, 32], strides = [1, 1]} : vector<8x128xf32> to vector<8x32xf32>
    %425 = vector.extract_strided_slice %423 {offsets = [0, 32], sizes = [8, 32], strides = [1, 1]} : vector<8x128xf32> to vector<8x32xf32>
    %426 = vector.extract_strided_slice %423 {offsets = [0, 96], sizes = [8, 32], strides = [1, 1]} : vector<8x128xf32> to vector<8x32xf32>
    %427 = vector.extract_strided_slice %418 {offsets = [0, 64], sizes = [8, 32], strides = [1, 1]} : vector<8x128xf32> to vector<8x32xf32>
    %428 = math.tanh %427 : vector<8x32xf32>
    %429 = arith.mulf %425, %383 : vector<8x32xf32>
    %430 = arith.mulf %424, %428 : vector<8x32xf32>
    %431 = arith.addf %429, %430 : vector<8x32xf32>
    %432 = math.tanh %431 : vector<8x32xf32>
    %433 = arith.mulf %426, %432 : vector<8x32xf32>
    %434 = vector.shape_cast %415 : vector<8x1xi1> to vector<8x1xi1>
    %435 = vector.broadcast %434 : vector<8x1xi1> to vector<8x32xi1>
    %436 = arith.select %435, %433, %380 : vector<8x32xi1>, vector<8x32xf32>
    %cst_71 = arith.constant dense<0.000000e+00> : vector<8x128xf32>
    %437 = tpu.matmul %436, %19, %cst_71 {dimension_numbers = #tpu.dot_dimension_numbers<[1], [0], [0], [1], [0, 0, 1, 1], [], []>} : vector<8x32xf32>, vector<32x128xf32>, vector<8x128xf32> -> vector<8x128xf32>
    %cst_72 = arith.constant dense<0.000000e+00> : vector<8x128xf32>
    %438 = tpu.matmul %405, %20, %cst_72 {dimension_numbers = #tpu.dot_dimension_numbers<[1], [0], [0], [1], [0, 0, 1, 1], [], []>} : vector<8x32xf32>, vector<32x128xf32>, vector<8x128xf32> -> vector<8x128xf32>
    %439 = arith.addf %437, %438 : vector<8x128xf32>
    %440 = arith.addf %439, %16 : vector<8x128xf32>
    %441 = arith.negf %440 : vector<8x128xf32>
    %442 = math.exp %441 : vector<8x128xf32>
    %cst_73 = arith.constant 1.000000e+00 : f32
    %443 = vector.broadcast %cst_73 : f32 to vector<8x128xf32>
    %444 = arith.addf %443, %442 : vector<8x128xf32>
    %445 = arith.divf %443, %444 : vector<8x128xf32>
    %446 = vector.extract_strided_slice %445 {offsets = [0, 0], sizes = [8, 32], strides = [1, 1]} : vector<8x128xf32> to vector<8x32xf32>
    %447 = vector.extract_strided_slice %445 {offsets = [0, 32], sizes = [8, 32], strides = [1, 1]} : vector<8x128xf32> to vector<8x32xf32>
    %448 = vector.extract_strided_slice %445 {offsets = [0, 96], sizes = [8, 32], strides = [1, 1]} : vector<8x128xf32> to vector<8x32xf32>
    %449 = vector.extract_strided_slice %440 {offsets = [0, 64], sizes = [8, 32], strides = [1, 1]} : vector<8x128xf32> to vector<8x32xf32>
    %450 = math.tanh %449 : vector<8x32xf32>
    %451 = arith.mulf %447, %408 : vector<8x32xf32>
    %452 = arith.mulf %446, %450 : vector<8x32xf32>
    %453 = arith.addf %451, %452 : vector<8x32xf32>
    %454 = math.tanh %453 : vector<8x32xf32>
    %455 = arith.mulf %448, %454 : vector<8x32xf32>
    %456 = vector.shape_cast %415 : vector<8x1xi1> to vector<8x1xi1>
    %457 = vector.broadcast %456 : vector<8x1xi1> to vector<8x32xi1>
    %458 = arith.select %457, %455, %405 : vector<8x32xi1>, vector<8x32xf32>
    %459 = vector.shape_cast %415 : vector<8x1xi1> to vector<8x1xi1>
    %460 = vector.broadcast %459 : vector<8x1xi1> to vector<8x32xi1>
    %461 = arith.select %460, %453, %408 : vector<8x32xi1>, vector<8x32xf32>
    %cst_74 = arith.constant 0.000000e+00 : f32
    %462 = vector.shape_cast %415 : vector<8x1xi1> to vector<8x1xi1>
    %463 = vector.broadcast %462 : vector<8x1xi1> to vector<8x32xi1>
    %464 = vector.broadcast %cst_74 : f32 to vector<8x32xf32>
    %465 = arith.select %463, %458, %464 : vector<8x32xi1>, vector<8x32xf32>
    %c0_75 = arith.constant 0 : index
    %c224 = arith.constant 224 : index
    %466 = vector.load %arg11[%c0_75, %c224] : memref<8x256xf32, #tpu.memory_space<vmem>>, vector<8x32xf32>
    tpu.vector_store %arg11[%c0_75, %c224], %465 {strides = array<i32>} : memref<8x256xf32, #tpu.memory_space<vmem>>, vector<8x32xf32>,
    %c0_76 = arith.constant 0 : index
    %c0_77 = arith.constant 0 : index
    %467 = vector.load %arg9[%c0_76, %c0_77] : memref<32x32xf32, #tpu.memory_space<vmem>>, vector<32x32xf32>
    %cst_78 = arith.constant dense<0.000000e+00> : vector<8x32xf32>
    %468 = tpu.matmul %458, %467, %cst_78 {dimension_numbers = #tpu.dot_dimension_numbers<[1], [0], [0], [1], [0, 0, 1, 1], [], []>} : vector<8x32xf32>, vector<32x32xf32>, vector<8x32xf32> -> vector<8x32xf32>
    %c0_79 = arith.constant 0 : index
    %c0_80 = arith.constant 0 : index
    %469 = vector.load %arg10[%c0_79, %c0_80] : memref<1x32xf32, #tpu.memory_space<vmem>>, vector<1x32xf32>
    %470 = vector.shape_cast %469 : vector<1x32xf32> to vector<1x32xf32>
    %471 = vector.broadcast %470 : vector<1x32xf32> to vector<8x32xf32>
    %472 = arith.addf %468, %471 : vector<8x32xf32>
    %473 = math.tanh %472 : vector<8x32xf32>
    %c0_81 = arith.constant 0 : index
    %c0_82 = arith.constant 0 : index
    %474 = vector.load %arg12[%c0_81, %c0_82] : memref<8x32xf32, #tpu.memory_space<vmem>>, vector<8x32xf32>
    tpu.vector_store %arg12[%c0_81, %c0_82], %473 {strides = array<i32>} : memref<8x32xf32, #tpu.memory_space<vmem>>, vector<8x32xf32>,
    %c0_83 = arith.constant 0 : index
    %c0_84 = arith.constant 0 : index
    %475 = vector.load %arg13[%c0_83, %c0_84] : memref<8x32xf32, #tpu.memory_space<vmem>>, vector<8x32xf32>
    tpu.vector_store %arg13[%c0_83, %c0_84], %461 {strides = array<i32>} : memref<8x32xf32, #tpu.memory_space<vmem>>, vector<8x32xf32>,
    return
  }
}

</mosaic_0001>

<llo_original>
// kernel: tpu_custom_call.1
$region0: #{tpu_custom_call.1}
  #allocation0 [shape = 'u32[]', space=smem, size = 0x4, offset = 0x4, fixed_abs, tag = 'smem constant byte address 0x4 - core index']
  #allocation1 [shape = 'u32[144,128]{1,0:T(1,128)}', space=vmem, size = 0x12000, scoped, tag = 'internal scratch']
  %s0 = inlined_call_operand.vmem [shape: s32[8,1], index: 0, kind: input, shape index: {}]
  %s1 = inlined_call_operand.vmem [shape: s32[64,1], index: 1, kind: input, shape index: {}]
  %s2 = inlined_call_operand.vmem [shape: f32[50,32], index: 2, kind: input, shape index: {}]
  %s3 = inlined_call_operand.vmem [shape: f32[32,128], index: 3, kind: input, shape index: {}]
  %s4 = inlined_call_operand.vmem [shape: f32[32,128], index: 4, kind: input, shape index: {}]
  %s5 = inlined_call_operand.vmem [shape: f32[1,128], index: 5, kind: input, shape index: {}]
  %s6 = inlined_call_operand.vmem [shape: f32[32,128], index: 6, kind: input, shape index: {}]
  %s7 = inlined_call_operand.vmem [shape: f32[32,128], index: 7, kind: input, shape index: {}]
  %s8 = inlined_call_operand.vmem [shape: f32[1,128], index: 8, kind: input, shape index: {}]
  %s9 = inlined_call_operand.vmem [shape: f32[32,32], index: 9, kind: input, shape index: {}]
  %s10 = inlined_call_operand.vmem [shape: f32[1,32], index: 10, kind: input, shape index: {}]
  %s11 = inlined_call_operand.hbm [shape: f32[8,256], index: 11, kind: output, shape index: {0}]
  %s12 = inlined_call_operand.hbm [shape: f32[8,32], index: 12, kind: output, shape index: {1}]
  %s13 = inlined_call_operand.hbm [shape: f32[8,32], index: 13, kind: output, shape index: {2}]
  %14 = xla_tuple %s11, %s12, %s13
  %s15 = sld [smem:[#allocation0]]
  $region70: #{tpu_custom_call.1} parent=0
    _
  %s17 = ssub.s32 1, %s15
  %s18 = scalar_select 0, %s17, %s15
  $region1: #{tpu_custom_call.1} parent=0
    #allocation2 [shape = 'u8[8192]{0}', space=vmem, size = 0x2000, scoped, tag = 'output window, operand 0, single buffered']
    #allocation3 [shape = 's32[1]{0}', space=sflag, size = 0x4, scoped, tag = 'scoped memory for tpu_custom_call.1']
    #allocation4 [shape = 'u8[4096]{0}', space=vmem, size = 0x1000, scoped, tag = 'output window, operand 1, single buffered']
    #allocation5 [shape = 's32[1]{0}', space=sflag, size = 0x4, scoped, tag = 'scoped memory for tpu_custom_call.1']
    #allocation6 [shape = 'u8[4096]{0}', space=vmem, size = 0x1000, scoped, tag = 'output window, operand 2, single buffered']
    %19 = vsyncpa [#allocation3], 0
    %20 = vsyncpa [#allocation5], 0
    // Predicated region
    $region2: #{tpu_custom_call.1} parent=1 // pred_check
      _
    $region3: #{tpu_custom_call.1} parent=1 // pred_check_branch
      %22 = sbr.rel (0) target = $region5
    $region4: #{tpu_custom_call.1} parent=1 // pred_region
      _
    $region5: #{tpu_custom_call.1} parent=1 // pred_fallthru
      _
    // Predicated region
    $region6: #{tpu_custom_call.1} parent=1 // pred_check
      _
    $region7: #{tpu_custom_call.1} parent=1 // pred_check_branch
      %24 = sbr.rel (0) target = $region9
    $region8: #{tpu_custom_call.1} parent=1 // pred_region
      _
    $region9: #{tpu_custom_call.1} parent=1 // pred_fallthru
      _
    // Predicated region
    $region10: #{tpu_custom_call.1} parent=1 // pred_check
      _
    $region11: #{tpu_custom_call.1} parent=1 // pred_check_branch
      %26 = sbr.rel (0) target = $region13
    $region12: #{tpu_custom_call.1} parent=1 // pred_region
      _
    $region13: #{tpu_custom_call.1} parent=1 // pred_fallthru
      _
    // Predicated region
    $region14: #{tpu_custom_call.1} parent=1 // pred_check
      _
    $region15: #{tpu_custom_call.1} parent=1 // pred_check_branch
      %28 = sbr.rel (0) target = $region17
    $region16: #{tpu_custom_call.1} parent=1 // pred_region
      _
    $region17: #{tpu_custom_call.1} parent=1 // pred_fallthru
      _
    // Predicated region
    $region18: #{tpu_custom_call.1} parent=1 // pred_check
      _
    $region19: #{tpu_custom_call.1} parent=1 // pred_check_branch
      %30 = sbr.rel (0) target = $region21
    $region20: #{tpu_custom_call.1} parent=1 // pred_region
      _
    $region21: #{tpu_custom_call.1} parent=1 // pred_fallthru
      _
    // Predicated region
    $region22: #{tpu_custom_call.1} parent=1 // pred_check
      _
    $region23: #{tpu_custom_call.1} parent=1 // pred_check_branch
      %32 = sbr.rel (0) target = $region25
    $region24: #{tpu_custom_call.1} parent=1 // pred_region
      _
    $region25: #{tpu_custom_call.1} parent=1 // pred_fallthru
      _
    // Predicated region
    $region26: #{tpu_custom_call.1} parent=1 // pred_check
      _
    $region27: #{tpu_custom_call.1} parent=1 // pred_check_branch
      %34 = sbr.rel (0) target = $region29
    $region28: #{tpu_custom_call.1} parent=1 // pred_region
      _
    $region29: #{tpu_custom_call.1} parent=1 // pred_fallthru
      _
    // Predicated region
    $region30: #{tpu_custom_call.1} parent=1 // pred_check
      _
    $region31: #{tpu_custom_call.1} parent=1 // pred_check_branch
      %36 = sbr.rel (0) target = $region33
    $region32: #{tpu_custom_call.1} parent=1 // pred_region
      _
    $region33: #{tpu_custom_call.1} parent=1 // pred_fallthru
      _
    // Predicated region
    $region34: #{tpu_custom_call.1} parent=1 // pred_check
      _
    $region35: #{tpu_custom_call.1} parent=1 // pred_check_branch
      %38 = sbr.rel (0) target = $region37
    $region36: #{tpu_custom_call.1} parent=1 // pred_region
      _
    $region37: #{tpu_custom_call.1} parent=1 // pred_fallthru
      _
    // Predicated region
    $region38: #{tpu_custom_call.1} parent=1 // pred_check
      _
    $region39: #{tpu_custom_call.1} parent=1 // pred_check_branch
      %40 = sbr.rel (0) target = $region41
    $region40: #{tpu_custom_call.1} parent=1 // pred_region
      _
    $region41: #{tpu_custom_call.1} parent=1 // pred_fallthru
      _
    // Predicated region
    $region42: #{tpu_custom_call.1} parent=1 // pred_check
      _
    $region43: #{tpu_custom_call.1} parent=1 // pred_check_branch
      %42 = sbr.rel (0) target = $region45
    $region44: #{tpu_custom_call.1} parent=1 // pred_region
      _
    $region45: #{tpu_custom_call.1} parent=1 // pred_fallthru
      _
    %v43 = vld [vmem:[%s1] sm:$0xff]
    %v44 = vld [vmem:[%s1 + $0x8] sm:$0xff]
    %v45 = vld [vmem:[%s1 + $0x10] sm:$0xff]
    %v46 = vld [vmem:[%s1 + $0x18] sm:$0xff]
    %v47 = vld [vmem:[%s1 + $0x20] sm:$0xff]
    %v48 = vld [vmem:[%s1 + $0x28] sm:$0xff]
    %v49 = vld [vmem:[%s1 + $0x30] sm:$0xff]
    %v50 = vld [vmem:[%s1 + $0x38] sm:$0xff]
    %v51 = vlaneseq
    %v52 = vand.u32 %v51, 127
    %53 = vset.pattern.permute.xlu0 0
    %54 = vperm.xlu0 %53, %v43
    %v55 = vpop.permute.xlu0 %54
    %56 = vset.pattern.permute.xlu0 0
    %57 = vperm.xlu0 %56, %v44
    %v58 = vpop.permute.xlu0 %57
    %59 = vset.pattern.permute.xlu0 0
    %60 = vperm.xlu0 %59, %v45
    %v61 = vpop.permute.xlu0 %60
    %62 = vset.pattern.permute.xlu0 0
    %63 = vperm.xlu0 %62, %v46
    %v64 = vpop.permute.xlu0 %63
    %65 = vset.pattern.permute.xlu0 0
    %66 = vperm.xlu0 %65, %v47
    %v67 = vpop.permute.xlu0 %66
    %68 = vset.pattern.permute.xlu0 0
    %69 = vperm.xlu0 %68, %v48
    %v70 = vpop.permute.xlu0 %69
    %71 = vset.pattern.permute.xlu0 0
    %72 = vperm.xlu0 %71, %v49
    %v73 = vpop.permute.xlu0 %72
    %74 = vset.pattern.permute.xlu0 0
    %75 = vperm.xlu0 %74, %v50
    %v76 = vpop.permute.xlu0 %75
    %vm77 = vcmp.eq.s32.totalorder %v52, %v55
    %vm78 = vcmp.eq.s32.totalorder %v52, %v58
    %vm79 = vcmp.eq.s32.totalorder %v52, %v61
    %vm80 = vcmp.eq.s32.totalorder %v52, %v64
    %vm81 = vcmp.eq.s32.totalorder %v52, %v67
    %vm82 = vcmp.eq.s32.totalorder %v52, %v70
    %vm83 = vcmp.eq.s32.totalorder %v52, %v73
    %vm84 = vcmp.eq.s32.totalorder %v52, %v76
    %v85 = vsel %vm77, 1, 0
    %v86 = vsel %vm78, 1, 0
    %v87 = vsel %vm79, 1, 0
    %v88 = vsel %vm80, 1, 0
    %v89 = vsel %vm81, 1, 0
    %v90 = vsel %vm82, 1, 0
    %v91 = vsel %vm83, 1, 0
    %v92 = vsel %vm84, 1, 0
    %v93 = vcvt.s32.f32 %v85
    %v94 = vcvt.s32.f32 %v86
    %v95 = vcvt.s32.f32 %v87
    %v96 = vcvt.s32.f32 %v88
    %v97 = vcvt.s32.f32 %v89
    %v98 = vcvt.s32.f32 %v90
    %v99 = vcvt.s32.f32 %v91
    %v100 = vcvt.s32.f32 %v92
    %v101 = vld [vmem:[%s2] sm:$0xff]
    %v102 = vld [vmem:[%s2 + $0x8] sm:$0xff]
    %v103 = vld [vmem:[%s2 + $0x10] sm:$0xff]
    %v104 = vld [vmem:[%s2 + $0x18] sm:$0xff]
    %v105 = vld [vmem:[%s2 + $0x20] sm:$0xff]
    %v106 = vld [vmem:[%s2 + $0x28] sm:$0xff]
    %v107 = vld [vmem:[%s2 + $0x30] sm:$0x3]
    %vm108 = vcmask 408576
    %v110 = vsel %vm108, %v93, 0
    %v113 = vsel %vm108, %v94, 0
    %v116 = vsel %vm108, %v95, 0
    %v119 = vsel %vm108, %v96, 0
    %v122 = vsel %vm108, %v97, 0
    %v125 = vsel %vm108, %v98, 0
    %v128 = vsel %vm108, %v99, 0
    %v131 = vsel %vm108, %v100, 0
    %vm133 = vcmask 1041408
    %v135 = vsel %vm133, %v107, 0
    %137 = vmatprep.subr.mxu0 0.0
    %138 = vmatpush1.msra.mxu0 %v101
    %139 = vmatprep.subr.mxu0 0.0
    %140 = vmatpush1.msra.mxu0 %v102
    %141 = vmatprep.subr.mxu0 0.0
    %142 = vmatpush1.msra.mxu0 %v103
    %143 = vmatprep.subr.mxu0 0.0
    %144 = vmatpush1.msra.mxu0 %v104
    %145 = vmatprep.subr.mxu0 0.0
    %146 = vmatpush1.msra.mxu0 %v105
    %147 = vmatprep.subr.mxu0 0.0
    %148 = vmatpush1.msra.mxu0 %v106
    %149 = vmatprep.subr.mxu0 0.0
    %150 = vmatpush1.msra.mxu0 %v135
    %151 = vmatprep.subr.mxu0 0.0
    %152 = vmatpush1.msra.mxu0 0.0
    %153 = vmatprep.subr.mxu0 0.0
    %154 = vmatpush1.msra.mxu0 0.0
    %155 = vmatprep.subr.mxu0 0.0
    %156 = vmatpush1.msra.mxu0 0.0
    %157 = vmatprep.subr.mxu0 0.0
    %158 = vmatpush1.msra.mxu0 0.0
    %159 = vmatprep.subr.mxu0 0.0
    %160 = vmatpush1.msra.mxu0 0.0
    %161 = vmatprep.subr.mxu0 0.0
    %162 = vmatpush1.msra.mxu0 0.0
    %163 = vmatprep.subr.mxu0 0.0
    %164 = vmatpush1.msra.mxu0 0.0
    %165 = vmatprep.subr.mxu0 0.0
    %166 = vmatpush1.msra.mxu0 0.0
    %167 = vmatprep.subr.mxu0 0.0
    %168 = vmatpush1.msra.mxu0 0.0
    %169 = vmatprep.subr.mxu0 0.0
    %170 = vmatpush1.msra.mxu0 0.0
    %171 = vmatprep.subr.mxu0 0.0
    %172 = vmatpush1.msra.mxu0 0.0
    %173 = vmatprep.subr.mxu0 0.0
    %174 = vmatpush1.msra.mxu0 0.0
    %175 = vmatprep.subr.mxu0 0.0
    %176 = vmatpush1.msra.mxu0 0.0
    %177 = vmatprep.subr.mxu0 0.0
    %178 = vmatpush1.msra.mxu0 0.0
    %179 = vmatprep.subr.mxu0 0.0
    %180 = vmatpush1.msra.mxu0 0.0
    %181 = vmatprep.subr.mxu0 0.0
    %182 = vmatpush1.msra.mxu0 0.0
    %183 = vmatprep.subr.mxu0 0.0
    %184 = vmatpush1.msra.mxu0 0.0
    %185 = vmatprep.subr.mxu0 0.0
    %186 = vmatpush1.msra.mxu0 0.0
    %187 = vmatprep.subr.mxu0 0.0
    %188 = vmatpush1.msra.mxu0 0.0
    %189 = vmatprep.subr.mxu0 0.0
    %190 = vmatpush1.msra.mxu0 0.0
    %191 = vmatprep.subr.mxu0 0.0
    %192 = vmatpush1.msra.mxu0 0.0
    %193 = vmatprep.subr.mxu0 0.0
    %194 = vmatpush1.msra.mxu0 0.0
    %195 = vmatprep.subr.mxu0 0.0
    %196 = vmatpush1.msra.mxu0 0.0
    %197 = vmatprep.subr.mxu0 0.0
    %198 = vmatpush1.msra.mxu0 0.0
    %199 = vmatprep.subr.mxu0 0.0
    %200 = vmatpush1.msra.mxu0 0.0
    %201 = vmatprep.mubr.f32.mxu0 0.0
    %202 = vmatmul.mubr.f32.gmra.mrb[0].mxu0 %v110
    %v203 = vpop.f32.mrb[0].mxu0
    %v204 = vadd.f32 0.0, %v203
    %v205 = vpop.f32.mrb[0].mxu0
    %206 = vmatprep.mubr.f32.mxu0 0.0
    %207 = vmatmul.mubr.f32.gmra.mrb[0].mxu0 %v113
    %v208 = vpop.f32.mrb[0].mxu0
    %v209 = vadd.f32 0.0, %v208
    %v210 = vpop.f32.mrb[0].mxu0
    %211 = vmatprep.mubr.f32.mxu0 0.0
    %212 = vmatmul.mubr.f32.gmra.mrb[0].mxu0 %v116
    %v213 = vpop.f32.mrb[0].mxu0
    %v214 = vadd.f32 0.0, %v213
    %v215 = vpop.f32.mrb[0].mxu0
    %216 = vmatprep.mubr.f32.mxu0 0.0
    %217 = vmatmul.mubr.f32.gmra.mrb[0].mxu0 %v119
    %v218 = vpop.f32.mrb[0].mxu0
    %v219 = vadd.f32 0.0, %v218
    %v220 = vpop.f32.mrb[0].mxu0
    %221 = vmatprep.mubr.f32.mxu0 0.0
    %222 = vmatmul.mubr.f32.gmra.mrb[0].mxu0 %v122
    %v223 = vpop.f32.mrb[0].mxu0
    %v224 = vadd.f32 0.0, %v223
    %v225 = vpop.f32.mrb[0].mxu0
    %226 = vmatprep.mubr.f32.mxu0 0.0
    %227 = vmatmul.mubr.f32.gmra.mrb[0].mxu0 %v125
    %v228 = vpop.f32.mrb[0].mxu0
    %v229 = vadd.f32 0.0, %v228
    %v230 = vpop.f32.mrb[0].mxu0
    %231 = vmatprep.mubr.f32.mxu0 0.0
    %232 = vmatmul.mubr.f32.gmra.mrb[0].mxu0 %v128
    %v233 = vpop.f32.mrb[0].mxu0
    %v234 = vadd.f32 0.0, %v233
    %v235 = vpop.f32.mrb[0].mxu0
    %236 = vmatprep.mubr.f32.mxu0 0.0
    %237 = vmatmul.mubr.f32.gmra.mrb[0].mxu0 %v131
    %v238 = vpop.f32.mrb[0].mxu0
    %v239 = vadd.f32 0.0, %v238
    %v240 = vpop.f32.mrb[0].mxu0
    %241 = vdwg.mxu0
    %v242 = vld [vmem:[%s3] sm:$0xff]
    %v243 = vld [vmem:[%s3 + $0x8] sm:$0xff]
    %v244 = vld [vmem:[%s3 + $0x10] sm:$0xff]
    %v245 = vld [vmem:[%s3 + $0x18] sm:$0xff]
    %v246 = vld [vmem:[%s5] sm:$0x1]
    %v248 = vlaneseq
    %v249 = vshrl.u32 %v248, 7
    %v250 = vsub.s32 0, %v249
    %v251 = vrot.slane %v246, %v250
    %vm253 = vcmask 261120
    %v255 = vsel %vm253, %v204, 0
    %v258 = vsel %vm253, %v209, 0
    %v261 = vsel %vm253, %v214, 0
    %v264 = vsel %vm253, %v219, 0
    %v267 = vsel %vm253, %v224, 0
    %v270 = vsel %vm253, %v229, 0
    %v273 = vsel %vm253, %v234, 0
    %v276 = vsel %vm253, %v239, 0
    %278 = vmatprep.subr.mxu0 0.0
    %279 = vmatpush1.msra.mxu0 %v242
    %280 = vmatprep.subr.mxu0 0.0
    %281 = vmatpush1.msra.mxu0 %v243
    %282 = vmatprep.subr.mxu0 0.0
    %283 = vmatpush1.msra.mxu0 %v244
    %284 = vmatprep.subr.mxu0 0.0
    %285 = vmatpush1.msra.mxu0 %v245
    %286 = vmatprep.subr.mxu0 0.0
    %287 = vmatpush1.msra.mxu0 0.0
    %288 = vmatprep.subr.mxu0 0.0
    %289 = vmatpush1.msra.mxu0 0.0
    %290 = vmatprep.subr.mxu0 0.0
    %291 = vmatpush1.msra.mxu0 0.0
    %292 = vmatprep.subr.mxu0 0.0
    %293 = vmatpush1.msra.mxu0 0.0
    %294 = vmatprep.subr.mxu0 0.0
    %295 = vmatpush1.msra.mxu0 0.0
    %296 = vmatprep.subr.mxu0 0.0
    %297 = vmatpush1.msra.mxu0 0.0
    %298 = vmatprep.subr.mxu0 0.0
    %299 = vmatpush1.msra.mxu0 0.0
    %300 = vmatprep.subr.mxu0 0.0
    %301 = vmatpush1.msra.mxu0 0.0
    %302 = vmatprep.subr.mxu0 0.0
    %303 = vmatpush1.msra.mxu0 0.0
    %304 = vmatprep.subr.mxu0 0.0
    %305 = vmatpush1.msra.mxu0 0.0
    %306 = vmatprep.subr.mxu0 0.0
    %307 = vmatpush1.msra.mxu0 0.0
    %308 = vmatprep.subr.mxu0 0.0
    %309 = vmatpush1.msra.mxu0 0.0
    %310 = vmatprep.subr.mxu0 0.0
    %311 = vmatpush1.msra.mxu0 0.0
    %312 = vmatprep.subr.mxu0 0.0
    %313 = vmatpush1.msra.mxu0 0.0
    %314 = vmatprep.subr.mxu0 0.0
    %315 = vmatpush1.msra.mxu0 0.0
    %316 = vmatprep.subr.mxu0 0.0
    %317 = vmatpush1.msra.mxu0 0.0
    %318 = vmatprep.subr.mxu0 0.0
    %319 = vmatpush1.msra.mxu0 0.0
    %320 = vmatprep.subr.mxu0 0.0
    %321 = vmatpush1.msra.mxu0 0.0
    %322 = vmatprep.subr.mxu0 0.0
    %323 = vmatpush1.msra.mxu0 0.0
    %324 = vmatprep.subr.mxu0 0.0
    %325 = vmatpush1.msra.mxu0 0.0
    %326 = vmatprep.subr.mxu0 0.0
    %327 = vmatpush1.msra.mxu0 0.0
    %328 = vmatprep.subr.mxu0 0.0
    %329 = vmatpush1.msra.mxu0 0.0
    %330 = vmatprep.subr.mxu0 0.0
    %331 = vmatpush1.msra.mxu0 0.0
    %332 = vmatprep.subr.mxu0 0.0
    %333 = vmatpush1.msra.mxu0 0.0
    %334 = vmatprep.subr.mxu0 0.0
    %335 = vmatpush1.msra.mxu0 0.0
    %336 = vmatprep.subr.mxu0 0.0
    %337 = vmatpush1.msra.mxu0 0.0
    %338 = vmatprep.subr.mxu0 0.0
    %339 = vmatpush1.msra.mxu0 0.0
    %340 = vmatprep.subr.mxu0 0.0
    %341 = vmatpush1.msra.mxu0 0.0
    %342 = vmatprep.mubr.f32.mxu0 0.0
    %343 = vmatmul.mubr.f32.gmra.mrb[0].mxu0 %v255
    %v344 = vpop.f32.mrb[0].mxu0
    %v345 = vadd.f32 %v251, %v344
    %v346 = vpop.f32.mrb[0].mxu0
    %347 = vmatprep.mubr.f32.mxu0 0.0
    %348 = vmatmul.mubr.f32.gmra.mrb[0].mxu0 %v258
    %v349 = vpop.f32.mrb[0].mxu0
    %v350 = vadd.f32 %v251, %v349
    %v351 = vpop.f32.mrb[0].mxu0
    %352 = vmatprep.mubr.f32.mxu0 0.0
    %353 = vmatmul.mubr.f32.gmra.mrb[0].mxu0 %v261
    %v354 = vpop.f32.mrb[0].mxu0
    %v355 = vadd.f32 %v251, %v354
    %v356 = vpop.f32.mrb[0].mxu0
    %357 = vmatprep.mubr.f32.mxu0 0.0
    %358 = vmatmul.mubr.f32.gmra.mrb[0].mxu0 %v264
    %v359 = vpop.f32.mrb[0].mxu0
    %v360 = vadd.f32 %v251, %v359
    %v361 = vpop.f32.mrb[0].mxu0
    %362 = vmatprep.mubr.f32.mxu0 0.0
    %363 = vmatmul.mubr.f32.gmra.mrb[0].mxu0 %v267
    %v364 = vpop.f32.mrb[0].mxu0
    %v365 = vadd.f32 %v251, %v364
    %v366 = vpop.f32.mrb[0].mxu0
    %367 = vmatprep.mubr.f32.mxu0 0.0
    %368 = vmatmul.mubr.f32.gmra.mrb[0].mxu0 %v270
    %v369 = vpop.f32.mrb[0].mxu0
    %v370 = vadd.f32 %v251, %v369
    %v371 = vpop.f32.mrb[0].mxu0
    %372 = vmatprep.mubr.f32.mxu0 0.0
    %373 = vmatmul.mubr.f32.gmra.mrb[0].mxu0 %v273
    %v374 = vpop.f32.mrb[0].mxu0
    %v375 = vadd.f32 %v251, %v374
    %v376 = vpop.f32.mrb[0].mxu0
    %377 = vmatprep.mubr.f32.mxu0 0.0
    %378 = vmatmul.mubr.f32.gmra.mrb[0].mxu0 %v276
    %v379 = vpop.f32.mrb[0].mxu0
    %v380 = vadd.f32 %v251, %v379
    %v381 = vpop.f32.mrb[0].mxu0
    %382 = vdwg.mxu0
    %v383 = vld [vmem:[%s8] sm:$0x1]
    %v385 = vlaneseq
    %v386 = vshrl.u32 %v385, 7
    %v387 = vsub.s32 0, %v386
    %v388 = vrot.slane %v383, %v387
    %v390 = vld [vmem:[%s0] sm:$0xff]
    %v391 = vld [vmem:[%s4] sm:$0xff]
    %v392 = vld [vmem:[%s4 + $0x8] sm:$0xff]
    %v393 = vld [vmem:[%s4 + $0x10] sm:$0xff]
    %v394 = vld [vmem:[%s4 + $0x18] sm:$0xff]
    %v395 = vld [vmem:[%s6] sm:$0xff]
    %v396 = vld [vmem:[%s6 + $0x8] sm:$0xff]
    %v397 = vld [vmem:[%s6 + $0x10] sm:$0xff]
    %v398 = vld [vmem:[%s6 + $0x18] sm:$0xff]
    %v399 = vld [vmem:[%s7] sm:$0xff]
    %v400 = vld [vmem:[%s7 + $0x8] sm:$0xff]
    %v401 = vld [vmem:[%s7 + $0x10] sm:$0xff]
    %v402 = vld [vmem:[%s7 + $0x18] sm:$0xff]
    %vm403 = vcmp.gt.s32.totalorder %v390, 0
    %v405 = vsel %vm253, 0.0, 0
    %407 = vmatprep.subr.mxu0 0.0
    %408 = vmatpush1.msra.mxu0 %v391
    %409 = vmatprep.subr.mxu0 0.0
    %410 = vmatpush1.msra.mxu0 %v392
    %411 = vmatprep.subr.mxu0 0.0
    %412 = vmatpush1.msra.mxu0 %v393
    %413 = vmatprep.subr.mxu0 0.0
    %414 = vmatpush1.msra.mxu0 %v394
    %415 = vmatprep.subr.mxu0 0.0
    %416 = vmatpush1.msra.mxu0 0.0
    %417 = vmatprep.subr.mxu0 0.0
    %418 = vmatpush1.msra.mxu0 0.0
    %419 = vmatprep.subr.mxu0 0.0
    %420 = vmatpush1.msra.mxu0 0.0
    %421 = vmatprep.subr.mxu0 0.0
    %422 = vmatpush1.msra.mxu0 0.0
    %423 = vmatprep.subr.mxu0 0.0
    %424 = vmatpush1.msra.mxu0 0.0
    %425 = vmatprep.subr.mxu0 0.0
    %426 = vmatpush1.msra.mxu0 0.0
    %427 = vmatprep.subr.mxu0 0.0
    %428 = vmatpush1.msra.mxu0 0.0
    %429 = vmatprep.subr.mxu0 0.0
    %430 = vmatpush1.msra.mxu0 0.0
    %431 = vmatprep.subr.mxu0 0.0
    %432 = vmatpush1.msra.mxu0 0.0
    %433 = vmatprep.subr.mxu0 0.0
    %434 = vmatpush1.msra.mxu0 0.0
    %435 = vmatprep.subr.mxu0 0.0
    %436 = vmatpush1.msra.mxu0 0.0
    %437 = vmatprep.subr.mxu0 0.0
    %438 = vmatpush1.msra.mxu0 0.0
    %439 = vmatprep.subr.mxu0 0.0
    %440 = vmatpush1.msra.mxu0 0.0
    %441 = vmatprep.subr.mxu0 0.0
    %442 = vmatpush1.msra.mxu0 0.0
    %443 = vmatprep.subr.mxu0 0.0
    %444 = vmatpush1.msra.mxu0 0.0
    %445 = vmatprep.subr.mxu0 0.0
    %446 = vmatpush1.msra.mxu0 0.0
    %447 = vmatprep.subr.mxu0 0.0
    %448 = vmatpush1.msra.mxu0 0.0
    %449 = vmatprep.subr.mxu0 0.0
    %450 = vmatpush1.msra.mxu0 0.0
    %451 = vmatprep.subr.mxu0 0.0
    %452 = vmatpush1.msra.mxu0 0.0
    %453 = vmatprep.subr.mxu0 0.0
    %454 = vmatpush1.msra.mxu0 0.0
    %455 = vmatprep.subr.mxu0 0.0
    %456 = vmatpush1.msra.mxu0 0.0
    %457 = vmatprep.subr.mxu0 0.0
    %458 = vmatpush1.msra.mxu0 0.0
    %459 = vmatprep.subr.mxu0 0.0
    %460 = vmatpush1.msra.mxu0 0.0
    %461 = vmatprep.subr.mxu0 0.0
    %462 = vmatpush1.msra.mxu0 0.0
    %463 = vmatprep.subr.mxu0 0.0
    %464 = vmatpush1.msra.mxu0 0.0
    %465 = vmatprep.subr.mxu0 0.0
    %466 = vmatpush1.msra.mxu0 0.0
    %467 = vmatprep.subr.mxu0 0.0
    %468 = vmatpush1.msra.mxu0 0.0
    %469 = vmatprep.subr.mxu0 0.0
    %470 = vmatpush1.msra.mxu0 0.0
    %471 = vmatprep.mubr.f32.mxu0 0.0
    %472 = vmatmul.mubr.f32.gmra.mrb[0].mxu0 %v405
    %v473 = vpop.f32.mrb[0].mxu0
    %v474 = vadd.f32 0.0, %v473
    %v475 = vpop.f32.mrb[0].mxu0
    %476 = vdwg.mxu0
    %v477 = vadd.f32 %v345, %v474
    %v478 = vxor.u32 %v477, 2147483648
    %v479 = vmul.f32 %v478, 1.442695
    %v480 = vpow.pop %v479
    %v481 = vadd.f32 %v480, 1.0
    %v482 = vrcp.pop %v481
    %v483 = vmul.f32 1.0, %v482
    %v484 = vtanh.pop %v477
    %v485 = vmul.f32 %v483, 0.0
    %487 = vrot.lane.b32.xlu0 %v484, 64
    %v488 = vpop.permute.xlu0 %487
    %v490 = vmul.f32 %v483, %v488
    %492 = vrot.lane.b32.xlu0 %v490, 32
    %v493 = vpop.permute.xlu0 %492
    %v495 = vadd.f32 %v485, %v493
    %v496 = vtanh.pop %v495
    %498 = vrot.lane.b32.xlu0 %v496, 64
    %v499 = vpop.permute.xlu0 %498
    %v501 = vmul.f32 %v483, %v499
    %v502 = vsel %vm403, 1, 0
    %503 = vset.pattern.permute.xlu0 0
    %504 = vperm.xlu0 %503, %v502
    %v505 = vpop.permute.xlu0 %504
    %vm506 = vcmp.eq.s32.totalorder %v505, 1
    %v507 = vsel %vm506, %v501, 0.0
    %v508 = vsel %vm506, %v495, 0.0
    %509 = vmatprep.subr.mxu0 0.0
    %510 = vmatpush1.msra.mxu0 %v399
    %511 = vmatprep.subr.mxu0 0.0
    %512 = vmatpush1.msra.mxu0 %v400
    %513 = vmatprep.subr.mxu0 0.0
    %514 = vmatpush1.msra.mxu0 %v401
    %515 = vmatprep.subr.mxu0 0.0
    %516 = vmatpush1.msra.mxu0 %v402
    %517 = vmatprep.subr.mxu0 0.0
    %518 = vmatpush1.msra.mxu0 0.0
    %519 = vmatprep.subr.mxu0 0.0
    %520 = vmatpush1.msra.mxu0 0.0
    %521 = vmatprep.subr.mxu0 0.0
    %522 = vmatpush1.msra.mxu0 0.0
    %523 = vmatprep.subr.mxu0 0.0
    %524 = vmatpush1.msra.mxu0 0.0
    %525 = vmatprep.subr.mxu0 0.0
    %526 = vmatpush1.msra.mxu0 0.0
    %527 = vmatprep.subr.mxu0 0.0
    %528 = vmatpush1.msra.mxu0 0.0
    %529 = vmatprep.subr.mxu0 0.0
    %530 = vmatpush1.msra.mxu0 0.0
    %531 = vmatprep.subr.mxu0 0.0
    %532 = vmatpush1.msra.mxu0 0.0
    %533 = vmatprep.subr.mxu0 0.0
    %534 = vmatpush1.msra.mxu0 0.0
    %535 = vmatprep.subr.mxu0 0.0
    %536 = vmatpush1.msra.mxu0 0.0
    %537 = vmatprep.subr.mxu0 0.0
    %538 = vmatpush1.msra.mxu0 0.0
    %539 = vmatprep.subr.mxu0 0.0
    %540 = vmatpush1.msra.mxu0 0.0
    %541 = vmatprep.subr.mxu0 0.0
    %542 = vmatpush1.msra.mxu0 0.0
    %543 = vmatprep.subr.mxu0 0.0
    %544 = vmatpush1.msra.mxu0 0.0
    %545 = vmatprep.subr.mxu0 0.0
    %546 = vmatpush1.msra.mxu0 0.0
    %547 = vmatprep.subr.mxu0 0.0
    %548 = vmatpush1.msra.mxu0 0.0
    %549 = vmatprep.subr.mxu0 0.0
    %550 = vmatpush1.msra.mxu0 0.0
    %551 = vmatprep.subr.mxu0 0.0
    %552 = vmatpush1.msra.mxu0 0.0
    %553 = vmatprep.subr.mxu0 0.0
    %554 = vmatpush1.msra.mxu0 0.0
    %555 = vmatprep.subr.mxu0 0.0
    %556 = vmatpush1.msra.mxu0 0.0
    %557 = vmatprep.subr.mxu0 0.0
    %558 = vmatpush1.msra.mxu0 0.0
    %559 = vmatprep.subr.mxu0 0.0
    %560 = vmatpush1.msra.mxu0 0.0
    %561 = vmatprep.subr.mxu0 0.0
    %562 = vmatpush1.msra.mxu0 0.0
    %563 = vmatprep.subr.mxu0 0.0
    %564 = vmatpush1.msra.mxu0 0.0
    %565 = vmatprep.subr.mxu0 0.0
    %566 = vmatpush1.msra.mxu0 0.0
    %567 = vmatprep.subr.mxu0 0.0
    %568 = vmatpush1.msra.mxu0 0.0
    %569 = vmatprep.subr.mxu0 0.0
    %570 = vmatpush1.msra.mxu0 0.0
    %571 = vmatprep.subr.mxu0 0.0
    %572 = vmatpush1.msra.mxu0 0.0
    %573 = vmatprep.mubr.f32.mxu0 0.0
    %574 = vmatmul.mubr.f32.gmra.mrb[0].mxu0 %v405
    %v575 = vpop.f32.mrb[0].mxu0
    %v576 = vadd.f32 0.0, %v575
    %v577 = vpop.f32.mrb[0].mxu0
    %578 = vdwg.mxu0
    %580 = vrot.lane.b32.xlu0 %v507, 32
    %v581 = vpop.permute.xlu0 %580
    %v582 = vsel %vm253, %v581, 0
    %584 = vmatprep.subr.mxu0 0.0
    %585 = vmatpush1.msra.mxu0 %v395
    %586 = vmatprep.subr.mxu0 0.0
    %587 = vmatpush1.msra.mxu0 %v396
    %588 = vmatprep.subr.mxu0 0.0
    %589 = vmatpush1.msra.mxu0 %v397
    %590 = vmatprep.subr.mxu0 0.0
    %591 = vmatpush1.msra.mxu0 %v398
    %592 = vmatprep.subr.mxu0 0.0
    %593 = vmatpush1.msra.mxu0 0.0
    %594 = vmatprep.subr.mxu0 0.0
    %595 = vmatpush1.msra.mxu0 0.0
    %596 = vmatprep.subr.mxu0 0.0
    %597 = vmatpush1.msra.mxu0 0.0
    %598 = vmatprep.subr.mxu0 0.0
    %599 = vmatpush1.msra.mxu0 0.0
    %600 = vmatprep.subr.mxu0 0.0
    %601 = vmatpush1.msra.mxu0 0.0
    %602 = vmatprep.subr.mxu0 0.0
    %603 = vmatpush1.msra.mxu0 0.0
    %604 = vmatprep.subr.mxu0 0.0
    %605 = vmatpush1.msra.mxu0 0.0
    %606 = vmatprep.subr.mxu0 0.0
    %607 = vmatpush1.msra.mxu0 0.0
    %608 = vmatprep.subr.mxu0 0.0
    %609 = vmatpush1.msra.mxu0 0.0
    %610 = vmatprep.subr.mxu0 0.0
    %611 = vmatpush1.msra.mxu0 0.0
    %612 = vmatprep.subr.mxu0 0.0
    %613 = vmatpush1.msra.mxu0 0.0
    %614 = vmatprep.subr.mxu0 0.0
    %615 = vmatpush1.msra.mxu0 0.0
    %616 = vmatprep.subr.mxu0 0.0
    %617 = vmatpush1.msra.mxu0 0.0
    %618 = vmatprep.subr.mxu0 0.0
    %619 = vmatpush1.msra.mxu0 0.0
    %620 = vmatprep.subr.mxu0 0.0
    %621 = vmatpush1.msra.mxu0 0.0
    %622 = vmatprep.subr.mxu0 0.0
    %623 = vmatpush1.msra.mxu0 0.0
    %624 = vmatprep.subr.mxu0 0.0
    %625 = vmatpush1.msra.mxu0 0.0
    %626 = vmatprep.subr.mxu0 0.0
    %627 = vmatpush1.msra.mxu0 0.0
    %628 = vmatprep.subr.mxu0 0.0
    %629 = vmatpush1.msra.mxu0 0.0
    %630 = vmatprep.subr.mxu0 0.0
    %631 = vmatpush1.msra.mxu0 0.0
    %632 = vmatprep.subr.mxu0 0.0
    %633 = vmatpush1.msra.mxu0 0.0
    %634 = vmatprep.subr.mxu0 0.0
    %635 = vmatpush1.msra.mxu0 0.0
    %636 = vmatprep.subr.mxu0 0.0
    %637 = vmatpush1.msra.mxu0 0.0
    %638 = vmatprep.subr.mxu0 0.0
    %639 = vmatpush1.msra.mxu0 0.0
    %640 = vmatprep.subr.mxu0 0.0
    %641 = vmatpush1.msra.mxu0 0.0
    %642 = vmatprep.subr.mxu0 0.0
    %643 = vmatpush1.msra.mxu0 0.0
    %644 = vmatprep.subr.mxu0 0.0
    %645 = vmatpush1.msra.mxu0 0.0
    %646 = vmatprep.subr.mxu0 0.0
    %647 = vmatpush1.msra.mxu0 0.0
    %648 = vmatprep.mubr.f32.mxu0 0.0
    %649 = vmatmul.mubr.f32.gmra.mrb[0].mxu0 %v582
    %v650 = vpop.f32.mrb[0].mxu0
    %v651 = vadd.f32 %v576, %v650
    %v652 = vpop.f32.mrb[0].mxu0
    %653 = vdwg.mxu0
    %v654 = vadd.f32 %v651, %v388
    %v655 = vxor.u32 %v654, 2147483648
    %v656 = vmul.f32 %v655, 1.442695
    %v657 = vpow.pop %v656
    %v658 = vadd.f32 %v657, 1.0
    %v659 = vrcp.pop %v658
    %v660 = vmul.f32 1.0, %v659
    %v661 = vtanh.pop %v654
    %v662 = vmul.f32 %v660, 0.0
    %664 = vrot.lane.b32.xlu0 %v661, 64
    %v665 = vpop.permute.xlu0 %664
    %v667 = vmul.f32 %v660, %v665
    %669 = vrot.lane.b32.xlu0 %v667, 32
    %v670 = vpop.permute.xlu0 %669
    %v672 = vadd.f32 %v662, %v670
    %v673 = vtanh.pop %v672
    %675 = vrot.lane.b32.xlu0 %v673, 64
    %v676 = vpop.permute.xlu0 %675
    %v678 = vmul.f32 %v660, %v676
    %v679 = vsel %vm506, %v678, 0.0
    %v680 = vsel %vm506, %v672, 0.0
    %682 = vrot.lane.b32.xlu0 %v679, 32
    %v683 = vpop.permute.xlu0 %682
    %685 = vst.msk [vmem:[#allocation2] sm:$0xff] %vm253, %v683
    %vm686 = vcmp.gt.s32.totalorder %v390, 1
    %687 = vmatprep.subr.mxu0 0.0
    %688 = vmatpush1.msra.mxu0 %v391
    %689 = vmatprep.subr.mxu0 0.0
    %690 = vmatpush1.msra.mxu0 %v392
    %691 = vmatprep.subr.mxu0 0.0
    %692 = vmatpush1.msra.mxu0 %v393
    %693 = vmatprep.subr.mxu0 0.0
    %694 = vmatpush1.msra.mxu0 %v394
    %695 = vmatprep.subr.mxu0 0.0
    %696 = vmatpush1.msra.mxu0 0.0
    %697 = vmatprep.subr.mxu0 0.0
    %698 = vmatpush1.msra.mxu0 0.0
    %699 = vmatprep.subr.mxu0 0.0
    %700 = vmatpush1.msra.mxu0 0.0
    %701 = vmatprep.subr.mxu0 0.0
    %702 = vmatpush1.msra.mxu0 0.0
    %703 = vmatprep.subr.mxu0 0.0
    %704 = vmatpush1.msra.mxu0 0.0
    %705 = vmatprep.subr.mxu0 0.0
    %706 = vmatpush1.msra.mxu0 0.0
    %707 = vmatprep.subr.mxu0 0.0
    %708 = vmatpush1.msra.mxu0 0.0
    %709 = vmatprep.subr.mxu0 0.0
    %710 = vmatpush1.msra.mxu0 0.0
    %711 = vmatprep.subr.mxu0 0.0
    %712 = vmatpush1.msra.mxu0 0.0
    %713 = vmatprep.subr.mxu0 0.0
    %714 = vmatpush1.msra.mxu0 0.0
    %715 = vmatprep.subr.mxu0 0.0
    %716 = vmatpush1.msra.mxu0 0.0
    %717 = vmatprep.subr.mxu0 0.0
    %718 = vmatpush1.msra.mxu0 0.0
    %719 = vmatprep.subr.mxu0 0.0
    %720 = vmatpush1.msra.mxu0 0.0
    %721 = vmatprep.subr.mxu0 0.0
    %722 = vmatpush1.msra.mxu0 0.0
    %723 = vmatprep.subr.mxu0 0.0
    %724 = vmatpush1.msra.mxu0 0.0
    %725 = vmatprep.subr.mxu0 0.0
    %726 = vmatpush1.msra.mxu0 0.0
    %727 = vmatprep.subr.mxu0 0.0
    %728 = vmatpush1.msra.mxu0 0.0
    %729 = vmatprep.subr.mxu0 0.0
    %730 = vmatpush1.msra.mxu0 0.0
    %731 = vmatprep.subr.mxu0 0.0
    %732 = vmatpush1.msra.mxu0 0.0
    %733 = vmatprep.subr.mxu0 0.0
    %734 = vmatpush1.msra.mxu0 0.0
    %735 = vmatprep.subr.mxu0 0.0
    %736 = vmatpush1.msra.mxu0 0.0
    %737 = vmatprep.subr.mxu0 0.0
    %738 = vmatpush1.msra.mxu0 0.0
    %739 = vmatprep.subr.mxu0 0.0
    %740 = vmatpush1.msra.mxu0 0.0
    %741 = vmatprep.subr.mxu0 0.0
    %742 = vmatpush1.msra.mxu0 0.0
    %743 = vmatprep.subr.mxu0 0.0
    %744 = vmatpush1.msra.mxu0 0.0
    %745 = vmatprep.subr.mxu0 0.0
    %746 = vmatpush1.msra.mxu0 0.0
    %747 = vmatprep.subr.mxu0 0.0
    %748 = vmatpush1.msra.mxu0 0.0
    %749 = vmatprep.subr.mxu0 0.0
    %750 = vmatpush1.msra.mxu0 0.0
    %751 = vmatprep.mubr.f32.mxu0 0.0
    %752 = vmatmul.mubr.f32.gmra.mrb[0].mxu0 %v582
    %v753 = vpop.f32.mrb[0].mxu0
    %v754 = vadd.f32 0.0, %v753
    %v755 = vpop.f32.mrb[0].mxu0
    %756 = vdwg.mxu0
    %v757 = vadd.f32 %v350, %v754
    %v758 = vxor.u32 %v757, 2147483648
    %v759 = vmul.f32 %v758, 1.442695
    %v760 = vpow.pop %v759
    %v761 = vadd.f32 %v760, 1.0
    %v762 = vrcp.pop %v761
    %v763 = vmul.f32 1.0, %v762
    %v764 = vtanh.pop %v757
    %v765 = vmul.f32 %v763, %v508
    %767 = vrot.lane.b32.xlu0 %v764, 64
    %v768 = vpop.permute.xlu0 %767
    %v770 = vmul.f32 %v763, %v768
    %772 = vrot.lane.b32.xlu0 %v770, 32
    %v773 = vpop.permute.xlu0 %772
    %v775 = vadd.f32 %v765, %v773
    %v776 = vtanh.pop %v775
    %778 = vrot.lane.b32.xlu0 %v776, 64
    %v779 = vpop.permute.xlu0 %778
    %v781 = vmul.f32 %v763, %v779
    %v782 = vsel %vm686, 1, 0
    %783 = vset.pattern.permute.xlu0 0
    %784 = vperm.xlu0 %783, %v782
    %v785 = vpop.permute.xlu0 %784
    %vm786 = vcmp.eq.s32.totalorder %v785, 1
    %v787 = vsel %vm786, %v781, %v507
    %v788 = vsel %vm786, %v775, %v508
    %v789 = vsel %vm253, %v683, 0
    %791 = vmatprep.subr.mxu0 0.0
    %792 = vmatpush1.msra.mxu0 %v399
    %793 = vmatprep.subr.mxu0 0.0
    %794 = vmatpush1.msra.mxu0 %v400
    %795 = vmatprep.subr.mxu0 0.0
    %796 = vmatpush1.msra.mxu0 %v401
    %797 = vmatprep.subr.mxu0 0.0
    %798 = vmatpush1.msra.mxu0 %v402
    %799 = vmatprep.subr.mxu0 0.0
    %800 = vmatpush1.msra.mxu0 0.0
    %801 = vmatprep.subr.mxu0 0.0
    %802 = vmatpush1.msra.mxu0 0.0
    %803 = vmatprep.subr.mxu0 0.0
    %804 = vmatpush1.msra.mxu0 0.0
    %805 = vmatprep.subr.mxu0 0.0
    %806 = vmatpush1.msra.mxu0 0.0
    %807 = vmatprep.subr.mxu0 0.0
    %808 = vmatpush1.msra.mxu0 0.0
    %809 = vmatprep.subr.mxu0 0.0
    %810 = vmatpush1.msra.mxu0 0.0
    %811 = vmatprep.subr.mxu0 0.0
    %812 = vmatpush1.msra.mxu0 0.0
    %813 = vmatprep.subr.mxu0 0.0
    %814 = vmatpush1.msra.mxu0 0.0
    %815 = vmatprep.subr.mxu0 0.0
    %816 = vmatpush1.msra.mxu0 0.0
    %817 = vmatprep.subr.mxu0 0.0
    %818 = vmatpush1.msra.mxu0 0.0
    %819 = vmatprep.subr.mxu0 0.0
    %820 = vmatpush1.msra.mxu0 0.0
    %821 = vmatprep.subr.mxu0 0.0
    %822 = vmatpush1.msra.mxu0 0.0
    %823 = vmatprep.subr.mxu0 0.0
    %824 = vmatpush1.msra.mxu0 0.0
    %825 = vmatprep.subr.mxu0 0.0
    %826 = vmatpush1.msra.mxu0 0.0
    %827 = vmatprep.subr.mxu0 0.0
    %828 = vmatpush1.msra.mxu0 0.0
    %829 = vmatprep.subr.mxu0 0.0
    %830 = vmatpush1.msra.mxu0 0.0
    %831 = vmatprep.subr.mxu0 0.0
    %832 = vmatpush1.msra.mxu0 0.0
    %833 = vmatprep.subr.mxu0 0.0
    %834 = vmatpush1.msra.mxu0 0.0
    %835 = vmatprep.subr.mxu0 0.0
    %836 = vmatpush1.msra.mxu0 0.0
    %837 = vmatprep.subr.mxu0 0.0
    %838 = vmatpush1.msra.mxu0 0.0
    %839 = vmatprep.subr.mxu0 0.0
    %840 = vmatpush1.msra.mxu0 0.0
    %841 = vmatprep.subr.mxu0 0.0
    %842 = vmatpush1.msra.mxu0 0.0
    %843 = vmatprep.subr.mxu0 0.0
    %844 = vmatpush1.msra.mxu0 0.0
    %845 = vmatprep.subr.mxu0 0.0
    %846 = vmatpush1.msra.mxu0 0.0
    %847 = vmatprep.subr.mxu0 0.0
    %848 = vmatpush1.msra.mxu0 0.0
    %849 = vmatprep.subr.mxu0 0.0
    %850 = vmatpush1.msra.mxu0 0.0
    %851 = vmatprep.subr.mxu0 0.0
    %852 = vmatpush1.msra.mxu0 0.0
    %853 = vmatprep.subr.mxu0 0.0
    %854 = vmatpush1.msra.mxu0 0.0
    %855 = vmatprep.mubr.f32.mxu0 0.0
    %856 = vmatmul.mubr.f32.gmra.mrb[0].mxu0 %v789
    %v857 = vpop.f32.mrb[0].mxu0
    %v858 = vadd.f32 0.0, %v857
    %v859 = vpop.f32.mrb[0].mxu0
    %860 = vdwg.mxu0
    %862 = vrot.lane.b32.xlu0 %v787, 32
    %v863 = vpop.permute.xlu0 %862
    %v864 = vsel %vm253, %v863, 0
    %866 = vmatprep.subr.mxu0 0.0
    %867 = vmatpush1.msra.mxu0 %v395
    %868 = vmatprep.subr.mxu0 0.0
    %869 = vmatpush1.msra.mxu0 %v396
    %870 = vmatprep.subr.mxu0 0.0
    %871 = vmatpush1.msra.mxu0 %v397
    %872 = vmatprep.subr.mxu0 0.0
    %873 = vmatpush1.msra.mxu0 %v398
    %874 = vmatprep.subr.mxu0 0.0
    %875 = vmatpush1.msra.mxu0 0.0
    %876 = vmatprep.subr.mxu0 0.0
    %877 = vmatpush1.msra.mxu0 0.0
    %878 = vmatprep.subr.mxu0 0.0
    %879 = vmatpush1.msra.mxu0 0.0
    %880 = vmatprep.subr.mxu0 0.0
    %881 = vmatpush1.msra.mxu0 0.0
    %882 = vmatprep.subr.mxu0 0.0
    %883 = vmatpush1.msra.mxu0 0.0
    %884 = vmatprep.subr.mxu0 0.0
    %885 = vmatpush1.msra.mxu0 0.0
    %886 = vmatprep.subr.mxu0 0.0
    %887 = vmatpush1.msra.mxu0 0.0
    %888 = vmatprep.subr.mxu0 0.0
    %889 = vmatpush1.msra.mxu0 0.0
    %890 = vmatprep.subr.mxu0 0.0
    %891 = vmatpush1.msra.mxu0 0.0
    %892 = vmatprep.subr.mxu0 0.0
    %893 = vmatpush1.msra.mxu0 0.0
    %894 = vmatprep.subr.mxu0 0.0
    %895 = vmatpush1.msra.mxu0 0.0
    %896 = vmatprep.subr.mxu0 0.0
    %897 = vmatpush1.msra.mxu0 0.0
    %898 = vmatprep.subr.mxu0 0.0
    %899 = vmatpush1.msra.mxu0 0.0
    %900 = vmatprep.subr.mxu0 0.0
    %901 = vmatpush1.msra.mxu0 0.0
    %902 = vmatprep.subr.mxu0 0.0
    %903 = vmatpush1.msra.mxu0 0.0
    %904 = vmatprep.subr.mxu0 0.0
    %905 = vmatpush1.msra.mxu0 0.0
    %906 = vmatprep.subr.mxu0 0.0
    %907 = vmatpush1.msra.mxu0 0.0
    %908 = vmatprep.subr.mxu0 0.0
    %909 = vmatpush1.msra.mxu0 0.0
    %910 = vmatprep.subr.mxu0 0.0
    %911 = vmatpush1.msra.mxu0 0.0
    %912 = vmatprep.subr.mxu0 0.0
    %913 = vmatpush1.msra.mxu0 0.0
    %914 = vmatprep.subr.mxu0 0.0
    %915 = vmatpush1.msra.mxu0 0.0
    %916 = vmatprep.subr.mxu0 0.0
    %917 = vmatpush1.msra.mxu0 0.0
    %918 = vmatprep.subr.mxu0 0.0
    %919 = vmatpush1.msra.mxu0 0.0
    %920 = vmatprep.subr.mxu0 0.0
    %921 = vmatpush1.msra.mxu0 0.0
    %922 = vmatprep.subr.mxu0 0.0
    %923 = vmatpush1.msra.mxu0 0.0
    %924 = vmatprep.subr.mxu0 0.0
    %925 = vmatpush1.msra.mxu0 0.0
    %926 = vmatprep.subr.mxu0 0.0
    %927 = vmatpush1.msra.mxu0 0.0
    %928 = vmatprep.subr.mxu0 0.0
    %929 = vmatpush1.msra.mxu0 0.0
    %930 = vmatprep.mubr.f32.mxu0 0.0
    %931 = vmatmul.mubr.f32.gmra.mrb[0].mxu0 %v864
    %v932 = vpop.f32.mrb[0].mxu0
    %v933 = vadd.f32 %v858, %v932
    %v934 = vpop.f32.mrb[0].mxu0
    %935 = vdwg.mxu0
    %v936 = vadd.f32 %v933, %v388
    %v937 = vxor.u32 %v936, 2147483648
    %v938 = vmul.f32 %v937, 1.442695
    %v939 = vpow.pop %v938
    %v940 = vadd.f32 %v939, 1.0
    %v941 = vrcp.pop %v940
    %v942 = vmul.f32 1.0, %v941
    %v943 = vtanh.pop %v936
    %v944 = vmul.f32 %v942, %v680
    %946 = vrot.lane.b32.xlu0 %v943, 64
    %v947 = vpop.permute.xlu0 %946
    %v949 = vmul.f32 %v942, %v947
    %951 = vrot.lane.b32.xlu0 %v949, 32
    %v952 = vpop.permute.xlu0 %951
    %v954 = vadd.f32 %v944, %v952
    %v955 = vtanh.pop %v954
    %957 = vrot.lane.b32.xlu0 %v955, 64
    %v958 = vpop.permute.xlu0 %957
    %v960 = vmul.f32 %v942, %v958
    %v961 = vsel %vm786, %v960, %v679
    %v962 = vsel %vm786, %v954, %v680
    %v963 = vsel %vm786, %v960, 0.0
    %965 = vrot.lane.b32.xlu0 %v963, 64
    %v966 = vpop.permute.xlu0 %965
    %vm968 = vcmask 523520
    %969 = vst.msk [vmem:[#allocation2] sm:$0xff] %vm968, %v966
    %vm970 = vcmp.gt.s32.totalorder %v390, 2
    %971 = vmatprep.subr.mxu0 0.0
    %972 = vmatpush1.msra.mxu0 %v391
    %973 = vmatprep.subr.mxu0 0.0
    %974 = vmatpush1.msra.mxu0 %v392
    %975 = vmatprep.subr.mxu0 0.0
    %976 = vmatpush1.msra.mxu0 %v393
    %977 = vmatprep.subr.mxu0 0.0
    %978 = vmatpush1.msra.mxu0 %v394
    %979 = vmatprep.subr.mxu0 0.0
    %980 = vmatpush1.msra.mxu0 0.0
    %981 = vmatprep.subr.mxu0 0.0
    %982 = vmatpush1.msra.mxu0 0.0
    %983 = vmatprep.subr.mxu0 0.0
    %984 = vmatpush1.msra.mxu0 0.0
    %985 = vmatprep.subr.mxu0 0.0
    %986 = vmatpush1.msra.mxu0 0.0
    %987 = vmatprep.subr.mxu0 0.0
    %988 = vmatpush1.msra.mxu0 0.0
    %989 = vmatprep.subr.mxu0 0.0
    %990 = vmatpush1.msra.mxu0 0.0
    %991 = vmatprep.subr.mxu0 0.0
    %992 = vmatpush1.msra.mxu0 0.0
    %993 = vmatprep.subr.mxu0 0.0
    %994 = vmatpush1.msra.mxu0 0.0
    %995 = vmatprep.subr.mxu0 0.0
    %996 = vmatpush1.msra.mxu0 0.0
    %997 = vmatprep.subr.mxu0 0.0
    %998 = vmatpush1.msra.mxu0 0.0
    %999 = vmatprep.subr.mxu0 0.0
    %1000 = vmatpush1.msra.mxu0 0.0
    %1001 = vmatprep.subr.mxu0 0.0
    %1002 = vmatpush1.msra.mxu0 0.0
    %1003 = vmatprep.subr.mxu0 0.0
    %1004 = vmatpush1.msra.mxu0 0.0
    %1005 = vmatprep.subr.mxu0 0.0
    %1006 = vmatpush1.msra.mxu0 0.0
    %1007 = vmatprep.subr.mxu0 0.0
    %1008 = vmatpush1.msra.mxu0 0.0
    %1009 = vmatprep.subr.mxu0 0.0
    %1010 = vmatpush1.msra.mxu0 0.0
    %1011 = vmatprep.subr.mxu0 0.0
    %1012 = vmatpush1.msra.mxu0 0.0
    %1013 = vmatprep.subr.mxu0 0.0
    %1014 = vmatpush1.msra.mxu0 0.0
    %1015 = vmatprep.subr.mxu0 0.0
    %1016 = vmatpush1.msra.mxu0 0.0
    %1017 = vmatprep.subr.mxu0 0.0
    %1018 = vmatpush1.msra.mxu0 0.0
    %1019 = vmatprep.subr.mxu0 0.0
    %1020 = vmatpush1.msra.mxu0 0.0
    %1021 = vmatprep.subr.mxu0 0.0
    %1022 = vmatpush1.msra.mxu0 0.0
    %1023 = vmatprep.subr.mxu0 0.0
    %1024 = vmatpush1.msra.mxu0 0.0
    %1025 = vmatprep.subr.mxu0 0.0
    %1026 = vmatpush1.msra.mxu0 0.0
    %1027 = vmatprep.subr.mxu0 0.0
    %1028 = vmatpush1.msra.mxu0 0.0
    %1029 = vmatprep.subr.mxu0 0.0
    %1030 = vmatpush1.msra.mxu0 0.0
    %1031 = vmatprep.subr.mxu0 0.0
    %1032 = vmatpush1.msra.mxu0 0.0
    %1033 = vmatprep.subr.mxu0 0.0
    %1034 = vmatpush1.msra.mxu0 0.0
    %1035 = vmatprep.mubr.f32.mxu0 0.0
    %1036 = vmatmul.mubr.f32.gmra.mrb[0].mxu0 %v864
    %v1037 = vpop.f32.mrb[0].mxu0
    %v1038 = vadd.f32 0.0, %v1037
    %v1039 = vpop.f32.mrb[0].mxu0
    %1040 = vdwg.mxu0
    %v1041 = vadd.f32 %v355, %v1038
    %v1042 = vxor.u32 %v1041, 2147483648
    %v1043 = vmul.f32 %v1042, 1.442695
    %v1044 = vpow.pop %v1043
    %v1045 = vadd.f32 %v1044, 1.0
    %v1046 = vrcp.pop %v1045
    %v1047 = vmul.f32 1.0, %v1046
    %v1048 = vtanh.pop %v1041
    %v1049 = vmul.f32 %v1047, %v788
    %1051 = vrot.lane.b32.xlu0 %v1048, 64
    %v1052 = vpop.permute.xlu0 %1051
    %v1054 = vmul.f32 %v1047, %v1052
    %1056 = vrot.lane.b32.xlu0 %v1054, 32
    %v1057 = vpop.permute.xlu0 %1056
    %v1059 = vadd.f32 %v1049, %v1057
    %v1060 = vtanh.pop %v1059
    %1062 = vrot.lane.b32.xlu0 %v1060, 64
    %v1063 = vpop.permute.xlu0 %1062
    %v1065 = vmul.f32 %v1047, %v1063
    %v1066 = vsel %vm970, 1, 0
    %1067 = vset.pattern.permute.xlu0 0
    %1068 = vperm.xlu0 %1067, %v1066
    %v1069 = vpop.permute.xlu0 %1068
    %vm1070 = vcmp.eq.s32.totalorder %v1069, 1
    %v1071 = vsel %vm1070, %v1065, %v787
    %v1072 = vsel %vm1070, %v1059, %v788
    %1074 = vrot.lane.b32.xlu0 %v961, 32
    %v1075 = vpop.permute.xlu0 %1074
    %v1076 = vsel %vm253, %v1075, 0
    %1078 = vmatprep.subr.mxu0 0.0
    %1079 = vmatpush1.msra.mxu0 %v399
    %1080 = vmatprep.subr.mxu0 0.0
    %1081 = vmatpush1.msra.mxu0 %v400
    %1082 = vmatprep.subr.mxu0 0.0
    %1083 = vmatpush1.msra.mxu0 %v401
    %1084 = vmatprep.subr.mxu0 0.0
    %1085 = vmatpush1.msra.mxu0 %v402
    %1086 = vmatprep.subr.mxu0 0.0
    %1087 = vmatpush1.msra.mxu0 0.0
    %1088 = vmatprep.subr.mxu0 0.0
    %1089 = vmatpush1.msra.mxu0 0.0
    %1090 = vmatprep.subr.mxu0 0.0
    %1091 = vmatpush1.msra.mxu0 0.0
    %1092 = vmatprep.subr.mxu0 0.0
    %1093 = vmatpush1.msra.mxu0 0.0
    %1094 = vmatprep.subr.mxu0 0.0
    %1095 = vmatpush1.msra.mxu0 0.0
    %1096 = vmatprep.subr.mxu0 0.0
    %1097 = vmatpush1.msra.mxu0 0.0
    %1098 = vmatprep.subr.mxu0 0.0
    %1099 = vmatpush1.msra.mxu0 0.0
    %1100 = vmatprep.subr.mxu0 0.0
    %1101 = vmatpush1.msra.mxu0 0.0
    %1102 = vmatprep.subr.mxu0 0.0
    %1103 = vmatpush1.msra.mxu0 0.0
    %1104 = vmatprep.subr.mxu0 0.0
    %1105 = vmatpush1.msra.mxu0 0.0
    %1106 = vmatprep.subr.mxu0 0.0
    %1107 = vmatpush1.msra.mxu0 0.0
    %1108 = vmatprep.subr.mxu0 0.0
    %1109 = vmatpush1.msra.mxu0 0.0
    %1110 = vmatprep.subr.mxu0 0.0
    %1111 = vmatpush1.msra.mxu0 0.0
    %1112 = vmatprep.subr.mxu0 0.0
    %1113 = vmatpush1.msra.mxu0 0.0
    %1114 = vmatprep.subr.mxu0 0.0
    %1115 = vmatpush1.msra.mxu0 0.0
    %1116 = vmatprep.subr.mxu0 0.0
    %1117 = vmatpush1.msra.mxu0 0.0
    %1118 = vmatprep.subr.mxu0 0.0
    %1119 = vmatpush1.msra.mxu0 0.0
    %1120 = vmatprep.subr.mxu0 0.0
    %1121 = vmatpush1.msra.mxu0 0.0
    %1122 = vmatprep.subr.mxu0 0.0
    %1123 = vmatpush1.msra.mxu0 0.0
    %1124 = vmatprep.subr.mxu0 0.0
    %1125 = vmatpush1.msra.mxu0 0.0
    %1126 = vmatprep.subr.mxu0 0.0
    %1127 = vmatpush1.msra.mxu0 0.0
    %1128 = vmatprep.subr.mxu0 0.0
    %1129 = vmatpush1.msra.mxu0 0.0
    %1130 = vmatprep.subr.mxu0 0.0
    %1131 = vmatpush1.msra.mxu0 0.0
    %1132 = vmatprep.subr.mxu0 0.0
    %1133 = vmatpush1.msra.mxu0 0.0
    %1134 = vmatprep.subr.mxu0 0.0
    %1135 = vmatpush1.msra.mxu0 0.0
    %1136 = vmatprep.subr.mxu0 0.0
    %1137 = vmatpush1.msra.mxu0 0.0
    %1138 = vmatprep.subr.mxu0 0.0
    %1139 = vmatpush1.msra.mxu0 0.0
    %1140 = vmatprep.subr.mxu0 0.0
    %1141 = vmatpush1.msra.mxu0 0.0
    %1142 = vmatprep.mubr.f32.mxu0 0.0
    %1143 = vmatmul.mubr.f32.gmra.mrb[0].mxu0 %v1076
    %v1144 = vpop.f32.mrb[0].mxu0
    %v1145 = vadd.f32 0.0, %v1144
    %v1146 = vpop.f32.mrb[0].mxu0
    %1147 = vdwg.mxu0
    %1149 = vrot.lane.b32.xlu0 %v1071, 32
    %v1150 = vpop.permute.xlu0 %1149
    %v1151 = vsel %vm253, %v1150, 0
    %1153 = vmatprep.subr.mxu0 0.0
    %1154 = vmatpush1.msra.mxu0 %v395
    %1155 = vmatprep.subr.mxu0 0.0
    %1156 = vmatpush1.msra.mxu0 %v396
    %1157 = vmatprep.subr.mxu0 0.0
    %1158 = vmatpush1.msra.mxu0 %v397
    %1159 = vmatprep.subr.mxu0 0.0
    %1160 = vmatpush1.msra.mxu0 %v398
    %1161 = vmatprep.subr.mxu0 0.0
    %1162 = vmatpush1.msra.mxu0 0.0
    %1163 = vmatprep.subr.mxu0 0.0
    %1164 = vmatpush1.msra.mxu0 0.0
    %1165 = vmatprep.subr.mxu0 0.0
    %1166 = vmatpush1.msra.mxu0 0.0
    %1167 = vmatprep.subr.mxu0 0.0
    %1168 = vmatpush1.msra.mxu0 0.0
    %1169 = vmatprep.subr.mxu0 0.0
    %1170 = vmatpush1.msra.mxu0 0.0
    %1171 = vmatprep.subr.mxu0 0.0
    %1172 = vmatpush1.msra.mxu0 0.0
    %1173 = vmatprep.subr.mxu0 0.0
    %1174 = vmatpush1.msra.mxu0 0.0
    %1175 = vmatprep.subr.mxu0 0.0
    %1176 = vmatpush1.msra.mxu0 0.0
    %1177 = vmatprep.subr.mxu0 0.0
    %1178 = vmatpush1.msra.mxu0 0.0
    %1179 = vmatprep.subr.mxu0 0.0
    %1180 = vmatpush1.msra.mxu0 0.0
    %1181 = vmatprep.subr.mxu0 0.0
    %1182 = vmatpush1.msra.mxu0 0.0
    %1183 = vmatprep.subr.mxu0 0.0
    %1184 = vmatpush1.msra.mxu0 0.0
    %1185 = vmatprep.subr.mxu0 0.0
    %1186 = vmatpush1.msra.mxu0 0.0
    %1187 = vmatprep.subr.mxu0 0.0
    %1188 = vmatpush1.msra.mxu0 0.0
    %1189 = vmatprep.subr.mxu0 0.0
    %1190 = vmatpush1.msra.mxu0 0.0
    %1191 = vmatprep.subr.mxu0 0.0
    %1192 = vmatpush1.msra.mxu0 0.0
    %1193 = vmatprep.subr.mxu0 0.0
    %1194 = vmatpush1.msra.mxu0 0.0
    %1195 = vmatprep.subr.mxu0 0.0
    %1196 = vmatpush1.msra.mxu0 0.0
    %1197 = vmatprep.subr.mxu0 0.0
    %1198 = vmatpush1.msra.mxu0 0.0
    %1199 = vmatprep.subr.mxu0 0.0
    %1200 = vmatpush1.msra.mxu0 0.0
    %1201 = vmatprep.subr.mxu0 0.0
    %1202 = vmatpush1.msra.mxu0 0.0
    %1203 = vmatprep.subr.mxu0 0.0
    %1204 = vmatpush1.msra.mxu0 0.0
    %1205 = vmatprep.subr.mxu0 0.0
    %1206 = vmatpush1.msra.mxu0 0.0
    %1207 = vmatprep.subr.mxu0 0.0
    %1208 = vmatpush1.msra.mxu0 0.0
    %1209 = vmatprep.subr.mxu0 0.0
    %1210 = vmatpush1.msra.mxu0 0.0
    %1211 = vmatprep.subr.mxu0 0.0
    %1212 = vmatpush1.msra.mxu0 0.0
    %1213 = vmatprep.subr.mxu0 0.0
    %1214 = vmatpush1.msra.mxu0 0.0
    %1215 = vmatprep.subr.mxu0 0.0
    %1216 = vmatpush1.msra.mxu0 0.0
    %1217 = vmatprep.mubr.f32.mxu0 0.0
    %1218 = vmatmul.mubr.f32.gmra.mrb[0].mxu0 %v1151
    %v1219 = vpop.f32.mrb[0].mxu0
    %v1220 = vadd.f32 %v1145, %v1219
    %v1221 = vpop.f32.mrb[0].mxu0
    %1222 = vdwg.mxu0
    %v1223 = vadd.f32 %v1220, %v388
    %v1224 = vxor.u32 %v1223, 2147483648
    %v1225 = vmul.f32 %v1224, 1.442695
    %v1226 = vpow.pop %v1225
    %v1227 = vadd.f32 %v1226, 1.0
    %v1228 = vrcp.pop %v1227
    %v1229 = vmul.f32 1.0, %v1228
    %v1230 = vtanh.pop %v1223
    %v1231 = vmul.f32 %v1229, %v962
    %1233 = vrot.lane.b32.xlu0 %v1230, 64
    %v1234 = vpop.permute.xlu0 %1233
    %v1236 = vmul.f32 %v1229, %v1234
    %1238 = vrot.lane.b32.xlu0 %v1236, 32
    %v1239 = vpop.permute.xlu0 %1238
    %v1241 = vadd.f32 %v1231, %v1239
    %v1242 = vtanh.pop %v1241
    %1244 = vrot.lane.b32.xlu0 %v1242, 64
    %v1245 = vpop.permute.xlu0 %1244
    %v1247 = vmul.f32 %v1229, %v1245
    %v1248 = vsel %vm1070, %v1247, %v961
    %v1249 = vsel %vm1070, %v1241, %v962
    %v1250 = vsel %vm1070, %v1247, 0.0
    %1252 = vrot.lane.b32.xlu0 %v1250, 96
    %v1253 = vpop.permute.xlu0 %1252
    %vm1255 = vcmask 785920
    %1256 = vst.msk [vmem:[#allocation2] sm:$0xff] %vm1255, %v1253
    %vm1257 = vcmp.gt.s32.totalorder %v390, 3
    %1258 = vmatprep.subr.mxu0 0.0
    %1259 = vmatpush1.msra.mxu0 %v391
    %1260 = vmatprep.subr.mxu0 0.0
    %1261 = vmatpush1.msra.mxu0 %v392
    %1262 = vmatprep.subr.mxu0 0.0
    %1263 = vmatpush1.msra.mxu0 %v393
    %1264 = vmatprep.subr.mxu0 0.0
    %1265 = vmatpush1.msra.mxu0 %v394
    %1266 = vmatprep.subr.mxu0 0.0
    %1267 = vmatpush1.msra.mxu0 0.0
    %1268 = vmatprep.subr.mxu0 0.0
    %1269 = vmatpush1.msra.mxu0 0.0
    %1270 = vmatprep.subr.mxu0 0.0
    %1271 = vmatpush1.msra.mxu0 0.0
    %1272 = vmatprep.subr.mxu0 0.0
    %1273 = vmatpush1.msra.mxu0 0.0
    %1274 = vmatprep.subr.mxu0 0.0
    %1275 = vmatpush1.msra.mxu0 0.0
    %1276 = vmatprep.subr.mxu0 0.0
    %1277 = vmatpush1.msra.mxu0 0.0
    %1278 = vmatprep.subr.mxu0 0.0
    %1279 = vmatpush1.msra.mxu0 0.0
    %1280 = vmatprep.subr.mxu0 0.0
    %1281 = vmatpush1.msra.mxu0 0.0
    %1282 = vmatprep.subr.mxu0 0.0
    %1283 = vmatpush1.msra.mxu0 0.0
    %1284 = vmatprep.subr.mxu0 0.0
    %1285 = vmatpush1.msra.mxu0 0.0
    %1286 = vmatprep.subr.mxu0 0.0
    %1287 = vmatpush1.msra.mxu0 0.0
    %1288 = vmatprep.subr.mxu0 0.0
    %1289 = vmatpush1.msra.mxu0 0.0
    %1290 = vmatprep.subr.mxu0 0.0
    %1291 = vmatpush1.msra.mxu0 0.0
    %1292 = vmatprep.subr.mxu0 0.0
    %1293 = vmatpush1.msra.mxu0 0.0
    %1294 = vmatprep.subr.mxu0 0.0
    %1295 = vmatpush1.msra.mxu0 0.0
    %1296 = vmatprep.subr.mxu0 0.0
    %1297 = vmatpush1.msra.mxu0 0.0
    %1298 = vmatprep.subr.mxu0 0.0
    %1299 = vmatpush1.msra.mxu0 0.0
    %1300 = vmatprep.subr.mxu0 0.0
    %1301 = vmatpush1.msra.mxu0 0.0
    %1302 = vmatprep.subr.mxu0 0.0
    %1303 = vmatpush1.msra.mxu0 0.0
    %1304 = vmatprep.subr.mxu0 0.0
    %1305 = vmatpush1.msra.mxu0 0.0
    %1306 = vmatprep.subr.mxu0 0.0
    %1307 = vmatpush1.msra.mxu0 0.0
    %1308 = vmatprep.subr.mxu0 0.0
    %1309 = vmatpush1.msra.mxu0 0.0
    %1310 = vmatprep.subr.mxu0 0.0
    %1311 = vmatpush1.msra.mxu0 0.0
    %1312 = vmatprep.subr.mxu0 0.0
    %1313 = vmatpush1.msra.mxu0 0.0
    %1314 = vmatprep.subr.mxu0 0.0
    %1315 = vmatpush1.msra.mxu0 0.0
    %1316 = vmatprep.subr.mxu0 0.0
    %1317 = vmatpush1.msra.mxu0 0.0
    %1318 = vmatprep.subr.mxu0 0.0
    %1319 = vmatpush1.msra.mxu0 0.0
    %1320 = vmatprep.subr.mxu0 0.0
    %1321 = vmatpush1.msra.mxu0 0.0
    %1322 = vmatprep.mubr.f32.mxu0 0.0
    %1323 = vmatmul.mubr.f32.gmra.mrb[0].mxu0 %v1151
    %v1324 = vpop.f32.mrb[0].mxu0
    %v1325 = vadd.f32 0.0, %v1324
    %v1326 = vpop.f32.mrb[0].mxu0
    %1327 = vdwg.mxu0
    %v1328 = vadd.f32 %v360, %v1325
    %v1329 = vxor.u32 %v1328, 2147483648
    %v1330 = vmul.f32 %v1329, 1.442695
    %v1331 = vpow.pop %v1330
    %v1332 = vadd.f32 %v1331, 1.0
    %v1333 = vrcp.pop %v1332
    %v1334 = vmul.f32 1.0, %v1333
    %v1335 = vtanh.pop %v1328
    %v1336 = vmul.f32 %v1334, %v1072
    %1338 = vrot.lane.b32.xlu0 %v1335, 64
    %v1339 = vpop.permute.xlu0 %1338
    %v1341 = vmul.f32 %v1334, %v1339
    %1343 = vrot.lane.b32.xlu0 %v1341, 32
    %v1344 = vpop.permute.xlu0 %1343
    %v1346 = vadd.f32 %v1336, %v1344
    %v1347 = vtanh.pop %v1346
    %1349 = vrot.lane.b32.xlu0 %v1347, 64
    %v1350 = vpop.permute.xlu0 %1349
    %v1352 = vmul.f32 %v1334, %v1350
    %v1353 = vsel %vm1257, 1, 0
    %1354 = vset.pattern.permute.xlu0 0
    %1355 = vperm.xlu0 %1354, %v1353
    %v1356 = vpop.permute.xlu0 %1355
    %vm1357 = vcmp.eq.s32.totalorder %v1356, 1
    %v1358 = vsel %vm1357, %v1352, %v1071
    %v1359 = vsel %vm1357, %v1346, %v1072
    %1361 = vrot.lane.b32.xlu0 %v1248, 32
    %v1362 = vpop.permute.xlu0 %1361
    %v1363 = vsel %vm253, %v1362, 0
    %1365 = vmatprep.subr.mxu0 0.0
    %1366 = vmatpush1.msra.mxu0 %v399
    %1367 = vmatprep.subr.mxu0 0.0
    %1368 = vmatpush1.msra.mxu0 %v400
    %1369 = vmatprep.subr.mxu0 0.0
    %1370 = vmatpush1.msra.mxu0 %v401
    %1371 = vmatprep.subr.mxu0 0.0
    %1372 = vmatpush1.msra.mxu0 %v402
    %1373 = vmatprep.subr.mxu0 0.0
    %1374 = vmatpush1.msra.mxu0 0.0
    %1375 = vmatprep.subr.mxu0 0.0
    %1376 = vmatpush1.msra.mxu0 0.0
    %1377 = vmatprep.subr.mxu0 0.0
    %1378 = vmatpush1.msra.mxu0 0.0
    %1379 = vmatprep.subr.mxu0 0.0
    %1380 = vmatpush1.msra.mxu0 0.0
    %1381 = vmatprep.subr.mxu0 0.0
    %1382 = vmatpush1.msra.mxu0 0.0
    %1383 = vmatprep.subr.mxu0 0.0
    %1384 = vmatpush1.msra.mxu0 0.0
    %1385 = vmatprep.subr.mxu0 0.0
    %1386 = vmatpush1.msra.mxu0 0.0
    %1387 = vmatprep.subr.mxu0 0.0
    %1388 = vmatpush1.msra.mxu0 0.0
    %1389 = vmatprep.subr.mxu0 0.0
    %1390 = vmatpush1.msra.mxu0 0.0
    %1391 = vmatprep.subr.mxu0 0.0
    %1392 = vmatpush1.msra.mxu0 0.0
    %1393 = vmatprep.subr.mxu0 0.0
    %1394 = vmatpush1.msra.mxu0 0.0
    %1395 = vmatprep.subr.mxu0 0.0
    %1396 = vmatpush1.msra.mxu0 0.0
    %1397 = vmatprep.subr.mxu0 0.0
    %1398 = vmatpush1.msra.mxu0 0.0
    %1399 = vmatprep.subr.mxu0 0.0
    %1400 = vmatpush1.msra.mxu0 0.0
    %1401 = vmatprep.subr.mxu0 0.0
    %1402 = vmatpush1.msra.mxu0 0.0
    %1403 = vmatprep.subr.mxu0 0.0
    %1404 = vmatpush1.msra.mxu0 0.0
    %1405 = vmatprep.subr.mxu0 0.0
    %1406 = vmatpush1.msra.mxu0 0.0
    %1407 = vmatprep.subr.mxu0 0.0
    %1408 = vmatpush1.msra.mxu0 0.0
    %1409 = vmatprep.subr.mxu0 0.0
    %1410 = vmatpush1.msra.mxu0 0.0
    %1411 = vmatprep.subr.mxu0 0.0
    %1412 = vmatpush1.msra.mxu0 0.0
    %1413 = vmatprep.subr.mxu0 0.0
    %1414 = vmatpush1.msra.mxu0 0.0
    %1415 = vmatprep.subr.mxu0 0.0
    %1416 = vmatpush1.msra.mxu0 0.0
    %1417 = vmatprep.subr.mxu0 0.0
    %1418 = vmatpush1.msra.mxu0 0.0
    %1419 = vmatprep.subr.mxu0 0.0
    %1420 = vmatpush1.msra.mxu0 0.0
    %1421 = vmatprep.subr.mxu0 0.0
    %1422 = vmatpush1.msra.mxu0 0.0
    %1423 = vmatprep.subr.mxu0 0.0
    %1424 = vmatpush1.msra.mxu0 0.0
    %1425 = vmatprep.subr.mxu0 0.0
    %1426 = vmatpush1.msra.mxu0 0.0
    %1427 = vmatprep.subr.mxu0 0.0
    %1428 = vmatpush1.msra.mxu0 0.0
    %1429 = vmatprep.mubr.f32.mxu0 0.0
    %1430 = vmatmul.mubr.f32.gmra.mrb[0].mxu0 %v1363
    %v1431 = vpop.f32.mrb[0].mxu0
    %v1432 = vadd.f32 0.0, %v1431
    %v1433 = vpop.f32.mrb[0].mxu0
    %1434 = vdwg.mxu0
    %1436 = vrot.lane.b32.xlu0 %v1358, 32
    %v1437 = vpop.permute.xlu0 %1436
    %v1438 = vsel %vm253, %v1437, 0
    %1440 = vmatprep.subr.mxu0 0.0
    %1441 = vmatpush1.msra.mxu0 %v395
    %1442 = vmatprep.subr.mxu0 0.0
    %1443 = vmatpush1.msra.mxu0 %v396
    %1444 = vmatprep.subr.mxu0 0.0
    %1445 = vmatpush1.msra.mxu0 %v397
    %1446 = vmatprep.subr.mxu0 0.0
    %1447 = vmatpush1.msra.mxu0 %v398
    %1448 = vmatprep.subr.mxu0 0.0
    %1449 = vmatpush1.msra.mxu0 0.0
    %1450 = vmatprep.subr.mxu0 0.0
    %1451 = vmatpush1.msra.mxu0 0.0
    %1452 = vmatprep.subr.mxu0 0.0
    %1453 = vmatpush1.msra.mxu0 0.0
    %1454 = vmatprep.subr.mxu0 0.0
    %1455 = vmatpush1.msra.mxu0 0.0
    %1456 = vmatprep.subr.mxu0 0.0
    %1457 = vmatpush1.msra.mxu0 0.0
    %1458 = vmatprep.subr.mxu0 0.0
    %1459 = vmatpush1.msra.mxu0 0.0
    %1460 = vmatprep.subr.mxu0 0.0
    %1461 = vmatpush1.msra.mxu0 0.0
    %1462 = vmatprep.subr.mxu0 0.0
    %1463 = vmatpush1.msra.mxu0 0.0
    %1464 = vmatprep.subr.mxu0 0.0
    %1465 = vmatpush1.msra.mxu0 0.0
    %1466 = vmatprep.subr.mxu0 0.0
    %1467 = vmatpush1.msra.mxu0 0.0
    %1468 = vmatprep.subr.mxu0 0.0
    %1469 = vmatpush1.msra.mxu0 0.0
    %1470 = vmatprep.subr.mxu0 0.0
    %1471 = vmatpush1.msra.mxu0 0.0
    %1472 = vmatprep.subr.mxu0 0.0
    %1473 = vmatpush1.msra.mxu0 0.0
    %1474 = vmatprep.subr.mxu0 0.0
    %1475 = vmatpush1.msra.mxu0 0.0
    %1476 = vmatprep.subr.mxu0 0.0
    %1477 = vmatpush1.msra.mxu0 0.0
    %1478 = vmatprep.subr.mxu0 0.0
    %1479 = vmatpush1.msra.mxu0 0.0
    %1480 = vmatprep.subr.mxu0 0.0
    %1481 = vmatpush1.msra.mxu0 0.0
    %1482 = vmatprep.subr.mxu0 0.0
    %1483 = vmatpush1.msra.mxu0 0.0
    %1484 = vmatprep.subr.mxu0 0.0
    %1485 = vmatpush1.msra.mxu0 0.0
    %1486 = vmatprep.subr.mxu0 0.0
    %1487 = vmatpush1.msra.mxu0 0.0
    %1488 = vmatprep.subr.mxu0 0.0
    %1489 = vmatpush1.msra.mxu0 0.0
    %1490 = vmatprep.subr.mxu0 0.0
    %1491 = vmatpush1.msra.mxu0 0.0
    %1492 = vmatprep.subr.mxu0 0.0
    %1493 = vmatpush1.msra.mxu0 0.0
    %1494 = vmatprep.subr.mxu0 0.0
    %1495 = vmatpush1.msra.mxu0 0.0
    %1496 = vmatprep.subr.mxu0 0.0
    %1497 = vmatpush1.msra.mxu0 0.0
    %1498 = vmatprep.subr.mxu0 0.0
    %1499 = vmatpush1.msra.mxu0 0.0
    %1500 = vmatprep.subr.mxu0 0.0
    %1501 = vmatpush1.msra.mxu0 0.0
    %1502 = vmatprep.subr.mxu0 0.0
    %1503 = vmatpush1.msra.mxu0 0.0
    %1504 = vmatprep.mubr.f32.mxu0 0.0
    %1505 = vmatmul.mubr.f32.gmra.mrb[0].mxu0 %v1438
    %v1506 = vpop.f32.mrb[0].mxu0
    %v1507 = vadd.f32 %v1432, %v1506
    %v1508 = vpop.f32.mrb[0].mxu0
    %1509 = vdwg.mxu0
    %v1510 = vadd.f32 %v1507, %v388
    %v1511 = vxor.u32 %v1510, 2147483648
    %v1512 = vmul.f32 %v1511, 1.442695
    %v1513 = vpow.pop %v1512
    %v1514 = vadd.f32 %v1513, 1.0
    %v1515 = vrcp.pop %v1514
    %v1516 = vmul.f32 1.0, %v1515
    %v1517 = vtanh.pop %v1510
    %v1518 = vmul.f32 %v1516, %v1249
    %1520 = vrot.lane.b32.xlu0 %v1517, 64
    %v1521 = vpop.permute.xlu0 %1520
    %v1523 = vmul.f32 %v1516, %v1521
    %1525 = vrot.lane.b32.xlu0 %v1523, 32
    %v1526 = vpop.permute.xlu0 %1525
    %v1528 = vadd.f32 %v1518, %v1526
    %v1529 = vtanh.pop %v1528
    %1531 = vrot.lane.b32.xlu0 %v1529, 64
    %v1532 = vpop.permute.xlu0 %1531
    %v1534 = vmul.f32 %v1516, %v1532
    %v1535 = vsel %vm1357, %v1534, %v1248
    %v1536 = vsel %vm1357, %v1528, %v1249
    %v1537 = vsel %vm1357, %v1534, 0.0
    %vm1538 = vcmask 1048320
    %1539 = vst.msk [vmem:[#allocation2] sm:$0xff] %vm1538, %v1537
    %vm1540 = vcmp.gt.s32.totalorder %v390, 4
    %1541 = vmatprep.subr.mxu0 0.0
    %1542 = vmatpush1.msra.mxu0 %v391
    %1543 = vmatprep.subr.mxu0 0.0
    %1544 = vmatpush1.msra.mxu0 %v392
    %1545 = vmatprep.subr.mxu0 0.0
    %1546 = vmatpush1.msra.mxu0 %v393
    %1547 = vmatprep.subr.mxu0 0.0
    %1548 = vmatpush1.msra.mxu0 %v394
    %1549 = vmatprep.subr.mxu0 0.0
    %1550 = vmatpush1.msra.mxu0 0.0
    %1551 = vmatprep.subr.mxu0 0.0
    %1552 = vmatpush1.msra.mxu0 0.0
    %1553 = vmatprep.subr.mxu0 0.0
    %1554 = vmatpush1.msra.mxu0 0.0
    %1555 = vmatprep.subr.mxu0 0.0
    %1556 = vmatpush1.msra.mxu0 0.0
    %1557 = vmatprep.subr.mxu0 0.0
    %1558 = vmatpush1.msra.mxu0 0.0
    %1559 = vmatprep.subr.mxu0 0.0
    %1560 = vmatpush1.msra.mxu0 0.0
    %1561 = vmatprep.subr.mxu0 0.0
    %1562 = vmatpush1.msra.mxu0 0.0
    %1563 = vmatprep.subr.mxu0 0.0
    %1564 = vmatpush1.msra.mxu0 0.0
    %1565 = vmatprep.subr.mxu0 0.0
    %1566 = vmatpush1.msra.mxu0 0.0
    %1567 = vmatprep.subr.mxu0 0.0
    %1568 = vmatpush1.msra.mxu0 0.0
    %1569 = vmatprep.subr.mxu0 0.0
    %1570 = vmatpush1.msra.mxu0 0.0
    %1571 = vmatprep.subr.mxu0 0.0
    %1572 = vmatpush1.msra.mxu0 0.0
    %1573 = vmatprep.subr.mxu0 0.0
    %1574 = vmatpush1.msra.mxu0 0.0
    %1575 = vmatprep.subr.mxu0 0.0
    %1576 = vmatpush1.msra.mxu0 0.0
    %1577 = vmatprep.subr.mxu0 0.0
    %1578 = vmatpush1.msra.mxu0 0.0
    %1579 = vmatprep.subr.mxu0 0.0
    %1580 = vmatpush1.msra.mxu0 0.0
    %1581 = vmatprep.subr.mxu0 0.0
    %1582 = vmatpush1.msra.mxu0 0.0
    %1583 = vmatprep.subr.mxu0 0.0
    %1584 = vmatpush1.msra.mxu0 0.0
    %1585 = vmatprep.subr.mxu0 0.0
    %1586 = vmatpush1.msra.mxu0 0.0
    %1587 = vmatprep.subr.mxu0 0.0
    %1588 = vmatpush1.msra.mxu0 0.0
    %1589 = vmatprep.subr.mxu0 0.0
    %1590 = vmatpush1.msra.mxu0 0.0
    %1591 = vmatprep.subr.mxu0 0.0
    %1592 = vmatpush1.msra.mxu0 0.0
    %1593 = vmatprep.subr.mxu0 0.0
    %1594 = vmatpush1.msra.mxu0 0.0
    %1595 = vmatprep.subr.mxu0 0.0
    %1596 = vmatpush1.msra.mxu0 0.0
    %1597 = vmatprep.subr.mxu0 0.0
    %1598 = vmatpush1.msra.mxu0 0.0
    %1599 = vmatprep.subr.mxu0 0.0
    %1600 = vmatpush1.msra.mxu0 0.0
    %1601 = vmatprep.subr.mxu0 0.0
    %1602 = vmatpush1.msra.mxu0 0.0
    %1603 = vmatprep.subr.mxu0 0.0
    %1604 = vmatpush1.msra.mxu0 0.0
    %1605 = vmatprep.mubr.f32.mxu0 0.0
    %1606 = vmatmul.mubr.f32.gmra.mrb[0].mxu0 %v1438
    %v1607 = vpop.f32.mrb[0].mxu0
    %v1608 = vadd.f32 0.0, %v1607
    %v1609 = vpop.f32.mrb[0].mxu0
    %1610 = vdwg.mxu0
    %v1611 = vadd.f32 %v365, %v1608
    %v1612 = vxor.u32 %v1611, 2147483648
    %v1613 = vmul.f32 %v1612, 1.442695
    %v1614 = vpow.pop %v1613
    %v1615 = vadd.f32 %v1614, 1.0
    %v1616 = vrcp.pop %v1615
    %v1617 = vmul.f32 1.0, %v1616
    %v1618 = vtanh.pop %v1611
    %v1619 = vmul.f32 %v1617, %v1359
    %1621 = vrot.lane.b32.xlu0 %v1618, 64
    %v1622 = vpop.permute.xlu0 %1621
    %v1624 = vmul.f32 %v1617, %v1622
    %1626 = vrot.lane.b32.xlu0 %v1624, 32
    %v1627 = vpop.permute.xlu0 %1626
    %v1629 = vadd.f32 %v1619, %v1627
    %v1630 = vtanh.pop %v1629
    %1632 = vrot.lane.b32.xlu0 %v1630, 64
    %v1633 = vpop.permute.xlu0 %1632
    %v1635 = vmul.f32 %v1617, %v1633
    %v1636 = vsel %vm1540, 1, 0
    %1637 = vset.pattern.permute.xlu0 0
    %1638 = vperm.xlu0 %1637, %v1636
    %v1639 = vpop.permute.xlu0 %1638
    %vm1640 = vcmp.eq.s32.totalorder %v1639, 1
    %v1641 = vsel %vm1640, %v1635, %v1358
    %v1642 = vsel %vm1640, %v1629, %v1359
    %1644 = vrot.lane.b32.xlu0 %v1535, 32
    %v1645 = vpop.permute.xlu0 %1644
    %v1646 = vsel %vm253, %v1645, 0
    %1648 = vmatprep.subr.mxu0 0.0
    %1649 = vmatpush1.msra.mxu0 %v399
    %1650 = vmatprep.subr.mxu0 0.0
    %1651 = vmatpush1.msra.mxu0 %v400
    %1652 = vmatprep.subr.mxu0 0.0
    %1653 = vmatpush1.msra.mxu0 %v401
    %1654 = vmatprep.subr.mxu0 0.0
    %1655 = vmatpush1.msra.mxu0 %v402
    %1656 = vmatprep.subr.mxu0 0.0
    %1657 = vmatpush1.msra.mxu0 0.0
    %1658 = vmatprep.subr.mxu0 0.0
    %1659 = vmatpush1.msra.mxu0 0.0
    %1660 = vmatprep.subr.mxu0 0.0
    %1661 = vmatpush1.msra.mxu0 0.0
    %1662 = vmatprep.subr.mxu0 0.0
    %1663 = vmatpush1.msra.mxu0 0.0
    %1664 = vmatprep.subr.mxu0 0.0
    %1665 = vmatpush1.msra.mxu0 0.0
    %1666 = vmatprep.subr.mxu0 0.0
    %1667 = vmatpush1.msra.mxu0 0.0
    %1668 = vmatprep.subr.mxu0 0.0
    %1669 = vmatpush1.msra.mxu0 0.0
    %1670 = vmatprep.subr.mxu0 0.0
    %1671 = vmatpush1.msra.mxu0 0.0
    %1672 = vmatprep.subr.mxu0 0.0
    %1673 = vmatpush1.msra.mxu0 0.0
    %1674 = vmatprep.subr.mxu0 0.0
    %1675 = vmatpush1.msra.mxu0 0.0
    %1676 = vmatprep.subr.mxu0 0.0
    %1677 = vmatpush1.msra.mxu0 0.0
    %1678 = vmatprep.subr.mxu0 0.0
    %1679 = vmatpush1.msra.mxu0 0.0
    %1680 = vmatprep.subr.mxu0 0.0
    %1681 = vmatpush1.msra.mxu0 0.0
    %1682 = vmatprep.subr.mxu0 0.0
    %1683 = vmatpush1.msra.mxu0 0.0
    %1684 = vmatprep.subr.mxu0 0.0
    %1685 = vmatpush1.msra.mxu0 0.0
    %1686 = vmatprep.subr.mxu0 0.0
    %1687 = vmatpush1.msra.mxu0 0.0
    %1688 = vmatprep.subr.mxu0 0.0
    %1689 = vmatpush1.msra.mxu0 0.0
    %1690 = vmatprep.subr.mxu0 0.0
    %1691 = vmatpush1.msra.mxu0 0.0
    %1692 = vmatprep.subr.mxu0 0.0
    %1693 = vmatpush1.msra.mxu0 0.0
    %1694 = vmatprep.subr.mxu0 0.0
    %1695 = vmatpush1.msra.mxu0 0.0
    %1696 = vmatprep.subr.mxu0 0.0
    %1697 = vmatpush1.msra.mxu0 0.0
    %1698 = vmatprep.subr.mxu0 0.0
    %1699 = vmatpush1.msra.mxu0 0.0
    %1700 = vmatprep.subr.mxu0 0.0
    %1701 = vmatpush1.msra.mxu0 0.0
    %1702 = vmatprep.subr.mxu0 0.0
    %1703 = vmatpush1.msra.mxu0 0.0
    %1704 = vmatprep.subr.mxu0 0.0
    %1705 = vmatpush1.msra.mxu0 0.0
    %1706 = vmatprep.subr.mxu0 0.0
    %1707 = vmatpush1.msra.mxu0 0.0
    %1708 = vmatprep.subr.mxu0 0.0
    %1709 = vmatpush1.msra.mxu0 0.0
    %1710 = vmatprep.subr.mxu0 0.0
    %1711 = vmatpush1.msra.mxu0 0.0
    %1712 = vmatprep.mubr.f32.mxu0 0.0
    %1713 = vmatmul.mubr.f32.gmra.mrb[0].mxu0 %v1646
    %v1714 = vpop.f32.mrb[0].mxu0
    %v1715 = vadd.f32 0.0, %v1714
    %v1716 = vpop.f32.mrb[0].mxu0
    %1717 = vdwg.mxu0
    %1719 = vrot.lane.b32.xlu0 %v1641, 32
    %v1720 = vpop.permute.xlu0 %1719
    %v1721 = vsel %vm253, %v1720, 0
    %1723 = vmatprep.subr.mxu0 0.0
    %1724 = vmatpush1.msra.mxu0 %v395
    %1725 = vmatprep.subr.mxu0 0.0
    %1726 = vmatpush1.msra.mxu0 %v396
    %1727 = vmatprep.subr.mxu0 0.0
    %1728 = vmatpush1.msra.mxu0 %v397
    %1729 = vmatprep.subr.mxu0 0.0
    %1730 = vmatpush1.msra.mxu0 %v398
    %1731 = vmatprep.subr.mxu0 0.0
    %1732 = vmatpush1.msra.mxu0 0.0
    %1733 = vmatprep.subr.mxu0 0.0
    %1734 = vmatpush1.msra.mxu0 0.0
    %1735 = vmatprep.subr.mxu0 0.0
    %1736 = vmatpush1.msra.mxu0 0.0
    %1737 = vmatprep.subr.mxu0 0.0
    %1738 = vmatpush1.msra.mxu0 0.0
    %1739 = vmatprep.subr.mxu0 0.0
    %1740 = vmatpush1.msra.mxu0 0.0
    %1741 = vmatprep.subr.mxu0 0.0
    %1742 = vmatpush1.msra.mxu0 0.0
    %1743 = vmatprep.subr.mxu0 0.0
    %1744 = vmatpush1.msra.mxu0 0.0
    %1745 = vmatprep.subr.mxu0 0.0
    %1746 = vmatpush1.msra.mxu0 0.0
    %1747 = vmatprep.subr.mxu0 0.0
    %1748 = vmatpush1.msra.mxu0 0.0
    %1749 = vmatprep.subr.mxu0 0.0
    %1750 = vmatpush1.msra.mxu0 0.0
    %1751 = vmatprep.subr.mxu0 0.0
    %1752 = vmatpush1.msra.mxu0 0.0
    %1753 = vmatprep.subr.mxu0 0.0
    %1754 = vmatpush1.msra.mxu0 0.0
    %1755 = vmatprep.subr.mxu0 0.0
    %1756 = vmatpush1.msra.mxu0 0.0
    %1757 = vmatprep.subr.mxu0 0.0
    %1758 = vmatpush1.msra.mxu0 0.0
    %1759 = vmatprep.subr.mxu0 0.0
    %1760 = vmatpush1.msra.mxu0 0.0
    %1761 = vmatprep.subr.mxu0 0.0
    %1762 = vmatpush1.msra.mxu0 0.0
    %1763 = vmatprep.subr.mxu0 0.0
    %1764 = vmatpush1.msra.mxu0 0.0
    %1765 = vmatprep.subr.mxu0 0.0
    %1766 = vmatpush1.msra.mxu0 0.0
    %1767 = vmatprep.subr.mxu0 0.0
    %1768 = vmatpush1.msra.mxu0 0.0
    %1769 = vmatprep.subr.mxu0 0.0
    %1770 = vmatpush1.msra.mxu0 0.0
    %1771 = vmatprep.subr.mxu0 0.0
    %1772 = vmatpush1.msra.mxu0 0.0
    %1773 = vmatprep.subr.mxu0 0.0
    %1774 = vmatpush1.msra.mxu0 0.0
    %1775 = vmatprep.subr.mxu0 0.0
    %1776 = vmatpush1.msra.mxu0 0.0
    %1777 = vmatprep.subr.mxu0 0.0
    %1778 = vmatpush1.msra.mxu0 0.0
    %1779 = vmatprep.subr.mxu0 0.0
    %1780 = vmatpush1.msra.mxu0 0.0
    %1781 = vmatprep.subr.mxu0 0.0
    %1782 = vmatpush1.msra.mxu0 0.0
    %1783 = vmatprep.subr.mxu0 0.0
    %1784 = vmatpush1.msra.mxu0 0.0
    %1785 = vmatprep.subr.mxu0 0.0
    %1786 = vmatpush1.msra.mxu0 0.0
    %1787 = vmatprep.mubr.f32.mxu0 0.0
    %1788 = vmatmul.mubr.f32.gmra.mrb[0].mxu0 %v1721
    %v1789 = vpop.f32.mrb[0].mxu0
    %v1790 = vadd.f32 %v1715, %v1789
    %v1791 = vpop.f32.mrb[0].mxu0
    %1792 = vdwg.mxu0
    %v1793 = vadd.f32 %v1790, %v388
    %v1794 = vxor.u32 %v1793, 2147483648
    %v1795 = vmul.f32 %v1794, 1.442695
    %v1796 = vpow.pop %v1795
    %v1797 = vadd.f32 %v1796, 1.0
    %v1798 = vrcp.pop %v1797
    %v1799 = vmul.f32 1.0, %v1798
    %v1800 = vtanh.pop %v1793
    %v1801 = vmul.f32 %v1799, %v1536
    %1803 = vrot.lane.b32.xlu0 %v1800, 64
    %v1804 = vpop.permute.xlu0 %1803
    %v1806 = vmul.f32 %v1799, %v1804
    %1808 = vrot.lane.b32.xlu0 %v1806, 32
    %v1809 = vpop.permute.xlu0 %1808
    %v1811 = vadd.f32 %v1801, %v1809
    %v1812 = vtanh.pop %v1811
    %1814 = vrot.lane.b32.xlu0 %v1812, 64
    %v1815 = vpop.permute.xlu0 %1814
    %v1817 = vmul.f32 %v1799, %v1815
    %v1818 = vsel %vm1640, %v1817, %v1535
    %v1819 = vsel %vm1640, %v1811, %v1536
    %v1820 = vsel %vm1640, %v1817, 0.0
    %1822 = vrot.lane.b32.xlu0 %v1820, 32
    %v1823 = vpop.permute.xlu0 %1822
    %1825 = vst.msk [vmem:[#allocation2 + $0x8] sm:$0xff] %vm253, %v1823
    %vm1826 = vcmp.gt.s32.totalorder %v390, 5
    %1827 = vmatprep.subr.mxu0 0.0
    %1828 = vmatpush1.msra.mxu0 %v391
    %1829 = vmatprep.subr.mxu0 0.0
    %1830 = vmatpush1.msra.mxu0 %v392
    %1831 = vmatprep.subr.mxu0 0.0
    %1832 = vmatpush1.msra.mxu0 %v393
    %1833 = vmatprep.subr.mxu0 0.0
    %1834 = vmatpush1.msra.mxu0 %v394
    %1835 = vmatprep.subr.mxu0 0.0
    %1836 = vmatpush1.msra.mxu0 0.0
    %1837 = vmatprep.subr.mxu0 0.0
    %1838 = vmatpush1.msra.mxu0 0.0
    %1839 = vmatprep.subr.mxu0 0.0
    %1840 = vmatpush1.msra.mxu0 0.0
    %1841 = vmatprep.subr.mxu0 0.0
    %1842 = vmatpush1.msra.mxu0 0.0
    %1843 = vmatprep.subr.mxu0 0.0
    %1844 = vmatpush1.msra.mxu0 0.0
    %1845 = vmatprep.subr.mxu0 0.0
    %1846 = vmatpush1.msra.mxu0 0.0
    %1847 = vmatprep.subr.mxu0 0.0
    %1848 = vmatpush1.msra.mxu0 0.0
    %1849 = vmatprep.subr.mxu0 0.0
    %1850 = vmatpush1.msra.mxu0 0.0
    %1851 = vmatprep.subr.mxu0 0.0
    %1852 = vmatpush1.msra.mxu0 0.0
    %1853 = vmatprep.subr.mxu0 0.0
    %1854 = vmatpush1.msra.mxu0 0.0
    %1855 = vmatprep.subr.mxu0 0.0
    %1856 = vmatpush1.msra.mxu0 0.0
    %1857 = vmatprep.subr.mxu0 0.0
    %1858 = vmatpush1.msra.mxu0 0.0
    %1859 = vmatprep.subr.mxu0 0.0
    %1860 = vmatpush1.msra.mxu0 0.0
    %1861 = vmatprep.subr.mxu0 0.0
    %1862 = vmatpush1.msra.mxu0 0.0
    %1863 = vmatprep.subr.mxu0 0.0
    %1864 = vmatpush1.msra.mxu0 0.0
    %1865 = vmatprep.subr.mxu0 0.0
    %1866 = vmatpush1.msra.mxu0 0.0
    %1867 = vmatprep.subr.mxu0 0.0
    %1868 = vmatpush1.msra.mxu0 0.0
    %1869 = vmatprep.subr.mxu0 0.0
    %1870 = vmatpush1.msra.mxu0 0.0
    %1871 = vmatprep.subr.mxu0 0.0
    %1872 = vmatpush1.msra.mxu0 0.0
    %1873 = vmatprep.subr.mxu0 0.0
    %1874 = vmatpush1.msra.mxu0 0.0
    %1875 = vmatprep.subr.mxu0 0.0
    %1876 = vmatpush1.msra.mxu0 0.0
    %1877 = vmatprep.subr.mxu0 0.0
    %1878 = vmatpush1.msra.mxu0 0.0
    %1879 = vmatprep.subr.mxu0 0.0
    %1880 = vmatpush1.msra.mxu0 0.0
    %1881 = vmatprep.subr.mxu0 0.0
    %1882 = vmatpush1.msra.mxu0 0.0
    %1883 = vmatprep.subr.mxu0 0.0
    %1884 = vmatpush1.msra.mxu0 0.0
    %1885 = vmatprep.subr.mxu0 0.0
    %1886 = vmatpush1.msra.mxu0 0.0
    %1887 = vmatprep.subr.mxu0 0.0
    %1888 = vmatpush1.msra.mxu0 0.0
    %1889 = vmatprep.subr.mxu0 0.0
    %1890 = vmatpush1.msra.mxu0 0.0
    %1891 = vmatprep.mubr.f32.mxu0 0.0
    %1892 = vmatmul.mubr.f32.gmra.mrb[0].mxu0 %v1721
    %v1893 = vpop.f32.mrb[0].mxu0
    %v1894 = vadd.f32 0.0, %v1893
    %v1895 = vpop.f32.mrb[0].mxu0
    %1896 = vdwg.mxu0
    %v1897 = vadd.f32 %v370, %v1894
    %v1898 = vxor.u32 %v1897, 2147483648
    %v1899 = vmul.f32 %v1898, 1.442695
    %v1900 = vpow.pop %v1899
    %v1901 = vadd.f32 %v1900, 1.0
    %v1902 = vrcp.pop %v1901
    %v1903 = vmul.f32 1.0, %v1902
    %v1904 = vtanh.pop %v1897
    %v1905 = vmul.f32 %v1903, %v1642
    %1907 = vrot.lane.b32.xlu0 %v1904, 64
    %v1908 = vpop.permute.xlu0 %1907
    %v1910 = vmul.f32 %v1903, %v1908
    %1912 = vrot.lane.b32.xlu0 %v1910, 32
    %v1913 = vpop.permute.xlu0 %1912
    %v1915 = vadd.f32 %v1905, %v1913
    %v1916 = vtanh.pop %v1915
    %1918 = vrot.lane.b32.xlu0 %v1916, 64
    %v1919 = vpop.permute.xlu0 %1918
    %v1921 = vmul.f32 %v1903, %v1919
    %v1922 = vsel %vm1826, 1, 0
    %1923 = vset.pattern.permute.xlu0 0
    %1924 = vperm.xlu0 %1923, %v1922
    %v1925 = vpop.permute.xlu0 %1924
    %vm1926 = vcmp.eq.s32.totalorder %v1925, 1
    %v1927 = vsel %vm1926, %v1921, %v1641
    %v1928 = vsel %vm1926, %v1915, %v1642
    %1930 = vrot.lane.b32.xlu0 %v1818, 32
    %v1931 = vpop.permute.xlu0 %1930
    %v1932 = vsel %vm253, %v1931, 0
    %1934 = vmatprep.subr.mxu0 0.0
    %1935 = vmatpush1.msra.mxu0 %v399
    %1936 = vmatprep.subr.mxu0 0.0
    %1937 = vmatpush1.msra.mxu0 %v400
    %1938 = vmatprep.subr.mxu0 0.0
    %1939 = vmatpush1.msra.mxu0 %v401
    %1940 = vmatprep.subr.mxu0 0.0
    %1941 = vmatpush1.msra.mxu0 %v402
    %1942 = vmatprep.subr.mxu0 0.0
    %1943 = vmatpush1.msra.mxu0 0.0
    %1944 = vmatprep.subr.mxu0 0.0
    %1945 = vmatpush1.msra.mxu0 0.0
    %1946 = vmatprep.subr.mxu0 0.0
    %1947 = vmatpush1.msra.mxu0 0.0
    %1948 = vmatprep.subr.mxu0 0.0
    %1949 = vmatpush1.msra.mxu0 0.0
    %1950 = vmatprep.subr.mxu0 0.0
    %1951 = vmatpush1.msra.mxu0 0.0
    %1952 = vmatprep.subr.mxu0 0.0
    %1953 = vmatpush1.msra.mxu0 0.0
    %1954 = vmatprep.subr.mxu0 0.0
    %1955 = vmatpush1.msra.mxu0 0.0
    %1956 = vmatprep.subr.mxu0 0.0
    %1957 = vmatpush1.msra.mxu0 0.0
    %1958 = vmatprep.subr.mxu0 0.0
    %1959 = vmatpush1.msra.mxu0 0.0
    %1960 = vmatprep.subr.mxu0 0.0
    %1961 = vmatpush1.msra.mxu0 0.0
    %1962 = vmatprep.subr.mxu0 0.0
    %1963 = vmatpush1.msra.mxu0 0.0
    %1964 = vmatprep.subr.mxu0 0.0
    %1965 = vmatpush1.msra.mxu0 0.0
    %1966 = vmatprep.subr.mxu0 0.0
    %1967 = vmatpush1.msra.mxu0 0.0
    %1968 = vmatprep.subr.mxu0 0.0
    %1969 = vmatpush1.msra.mxu0 0.0
    %1970 = vmatprep.subr.mxu0 0.0
    %1971 = vmatpush1.msra.mxu0 0.0
    %1972 = vmatprep.subr.mxu0 0.0
    %1973 = vmatpush1.msra.mxu0 0.0
    %1974 = vmatprep.subr.mxu0 0.0
    %1975 = vmatpush1.msra.mxu0 0.0
    %1976 = vmatprep.subr.mxu0 0.0
    %1977 = vmatpush1.msra.mxu0 0.0
    %1978 = vmatprep.subr.mxu0 0.0
    %1979 = vmatpush1.msra.mxu0 0.0
    %1980 = vmatprep.subr.mxu0 0.0
    %1981 = vmatpush1.msra.mxu0 0.0
    %1982 = vmatprep.subr.mxu0 0.0
    %1983 = vmatpush1.msra.mxu0 0.0
    %1984 = vmatprep.subr.mxu0 0.0
    %1985 = vmatpush1.msra.mxu0 0.0
    %1986 = vmatprep.subr.mxu0 0.0
    %1987 = vmatpush1.msra.mxu0 0.0
    %1988 = vmatprep.subr.mxu0 0.0
    %1989 = vmatpush1.msra.mxu0 0.0
    %1990 = vmatprep.subr.mxu0 0.0
    %1991 = vmatpush1.msra.mxu0 0.0
    %1992 = vmatprep.subr.mxu0 0.0
    %1993 = vmatpush1.msra.mxu0 0.0
    %1994 = vmatprep.subr.mxu0 0.0
    %1995 = vmatpush1.msra.mxu0 0.0
    %1996 = vmatprep.subr.mxu0 0.0
    %1997 = vmatpush1.msra.mxu0 0.0
    %1998 = vmatprep.mubr.f32.mxu0 0.0
    %1999 = vmatmul.mubr.f32.gmra.mrb[0].mxu0 %v1932
    %v2000 = vpop.f32.mrb[0].mxu0
    %v2001 = vadd.f32 0.0, %v2000
    %v2002 = vpop.f32.mrb[0].mxu0
    %2003 = vdwg.mxu0
    %2005 = vrot.lane.b32.xlu0 %v1927, 32
    %v2006 = vpop.permute.xlu0 %2005
    %v2007 = vsel %vm253, %v2006, 0
    %2009 = vmatprep.subr.mxu0 0.0
    %2010 = vmatpush1.msra.mxu0 %v395
    %2011 = vmatprep.subr.mxu0 0.0
    %2012 = vmatpush1.msra.mxu0 %v396
    %2013 = vmatprep.subr.mxu0 0.0
    %2014 = vmatpush1.msra.mxu0 %v397
    %2015 = vmatprep.subr.mxu0 0.0
    %2016 = vmatpush1.msra.mxu0 %v398
    %2017 = vmatprep.subr.mxu0 0.0
    %2018 = vmatpush1.msra.mxu0 0.0
    %2019 = vmatprep.subr.mxu0 0.0
    %2020 = vmatpush1.msra.mxu0 0.0
    %2021 = vmatprep.subr.mxu0 0.0
    %2022 = vmatpush1.msra.mxu0 0.0
    %2023 = vmatprep.subr.mxu0 0.0
    %2024 = vmatpush1.msra.mxu0 0.0
    %2025 = vmatprep.subr.mxu0 0.0
    %2026 = vmatpush1.msra.mxu0 0.0
    %2027 = vmatprep.subr.mxu0 0.0
    %2028 = vmatpush1.msra.mxu0 0.0
    %2029 = vmatprep.subr.mxu0 0.0
    %2030 = vmatpush1.msra.mxu0 0.0
    %2031 = vmatprep.subr.mxu0 0.0
    %2032 = vmatpush1.msra.mxu0 0.0
    %2033 = vmatprep.subr.mxu0 0.0
    %2034 = vmatpush1.msra.mxu0 0.0
    %2035 = vmatprep.subr.mxu0 0.0
    %2036 = vmatpush1.msra.mxu0 0.0
    %2037 = vmatprep.subr.mxu0 0.0
    %2038 = vmatpush1.msra.mxu0 0.0
    %2039 = vmatprep.subr.mxu0 0.0
    %2040 = vmatpush1.msra.mxu0 0.0
    %2041 = vmatprep.subr.mxu0 0.0
    %2042 = vmatpush1.msra.mxu0 0.0
    %2043 = vmatprep.subr.mxu0 0.0
    %2044 = vmatpush1.msra.mxu0 0.0
    %2045 = vmatprep.subr.mxu0 0.0
    %2046 = vmatpush1.msra.mxu0 0.0
    %2047 = vmatprep.subr.mxu0 0.0
    %2048 = vmatpush1.msra.mxu0 0.0
    %2049 = vmatprep.subr.mxu0 0.0
    %2050 = vmatpush1.msra.mxu0 0.0
    %2051 = vmatprep.subr.mxu0 0.0
    %2052 = vmatpush1.msra.mxu0 0.0
    %2053 = vmatprep.subr.mxu0 0.0
    %2054 = vmatpush1.msra.mxu0 0.0
    %2055 = vmatprep.subr.mxu0 0.0
    %2056 = vmatpush1.msra.mxu0 0.0
    %2057 = vmatprep.subr.mxu0 0.0
    %2058 = vmatpush1.msra.mxu0 0.0
    %2059 = vmatprep.subr.mxu0 0.0
    %2060 = vmatpush1.msra.mxu0 0.0
    %2061 = vmatprep.subr.mxu0 0.0
    %2062 = vmatpush1.msra.mxu0 0.0
    %2063 = vmatprep.subr.mxu0 0.0
    %2064 = vmatpush1.msra.mxu0 0.0
    %2065 = vmatprep.subr.mxu0 0.0
    %2066 = vmatpush1.msra.mxu0 0.0
    %2067 = vmatprep.subr.mxu0 0.0
    %2068 = vmatpush1.msra.mxu0 0.0
    %2069 = vmatprep.subr.mxu0 0.0
    %2070 = vmatpush1.msra.mxu0 0.0
    %2071 = vmatprep.subr.mxu0 0.0
    %2072 = vmatpush1.msra.mxu0 0.0
    %2073 = vmatprep.mubr.f32.mxu0 0.0
    %2074 = vmatmul.mubr.f32.gmra.mrb[0].mxu0 %v2007
    %v2075 = vpop.f32.mrb[0].mxu0
    %v2076 = vadd.f32 %v2001, %v2075
    %v2077 = vpop.f32.mrb[0].mxu0
    %2078 = vdwg.mxu0
    %v2079 = vadd.f32 %v2076, %v388
    %v2080 = vxor.u32 %v2079, 2147483648
    %v2081 = vmul.f32 %v2080, 1.442695
    %v2082 = vpow.pop %v2081
    %v2083 = vadd.f32 %v2082, 1.0
    %v2084 = vrcp.pop %v2083
    %v2085 = vmul.f32 1.0, %v2084
    %v2086 = vtanh.pop %v2079
    %v2087 = vmul.f32 %v2085, %v1819
    %2089 = vrot.lane.b32.xlu0 %v2086, 64
    %v2090 = vpop.permute.xlu0 %2089
    %v2092 = vmul.f32 %v2085, %v2090
    %2094 = vrot.lane.b32.xlu0 %v2092, 32
    %v2095 = vpop.permute.xlu0 %2094
    %v2097 = vadd.f32 %v2087, %v2095
    %v2098 = vtanh.pop %v2097
    %2100 = vrot.lane.b32.xlu0 %v2098, 64
    %v2101 = vpop.permute.xlu0 %2100
    %v2103 = vmul.f32 %v2085, %v2101
    %v2104 = vsel %vm1926, %v2103, %v1818
    %v2105 = vsel %vm1926, %v2097, %v1819
    %v2106 = vsel %vm1926, %v2103, 0.0
    %2108 = vrot.lane.b32.xlu0 %v2106, 64
    %v2109 = vpop.permute.xlu0 %2108
    %2111 = vst.msk [vmem:[#allocation2 + $0x8] sm:$0xff] %vm968, %v2109
    %vm2112 = vcmp.gt.s32.totalorder %v390, 6
    %2113 = vmatprep.subr.mxu0 0.0
    %2114 = vmatpush1.msra.mxu0 %v391
    %2115 = vmatprep.subr.mxu0 0.0
    %2116 = vmatpush1.msra.mxu0 %v392
    %2117 = vmatprep.subr.mxu0 0.0
    %2118 = vmatpush1.msra.mxu0 %v393
    %2119 = vmatprep.subr.mxu0 0.0
    %2120 = vmatpush1.msra.mxu0 %v394
    %2121 = vmatprep.subr.mxu0 0.0
    %2122 = vmatpush1.msra.mxu0 0.0
    %2123 = vmatprep.subr.mxu0 0.0
    %2124 = vmatpush1.msra.mxu0 0.0
    %2125 = vmatprep.subr.mxu0 0.0
    %2126 = vmatpush1.msra.mxu0 0.0
    %2127 = vmatprep.subr.mxu0 0.0
    %2128 = vmatpush1.msra.mxu0 0.0
    %2129 = vmatprep.subr.mxu0 0.0
    %2130 = vmatpush1.msra.mxu0 0.0
    %2131 = vmatprep.subr.mxu0 0.0
    %2132 = vmatpush1.msra.mxu0 0.0
    %2133 = vmatprep.subr.mxu0 0.0
    %2134 = vmatpush1.msra.mxu0 0.0
    %2135 = vmatprep.subr.mxu0 0.0
    %2136 = vmatpush1.msra.mxu0 0.0
    %2137 = vmatprep.subr.mxu0 0.0
    %2138 = vmatpush1.msra.mxu0 0.0
    %2139 = vmatprep.subr.mxu0 0.0
    %2140 = vmatpush1.msra.mxu0 0.0
    %2141 = vmatprep.subr.mxu0 0.0
    %2142 = vmatpush1.msra.mxu0 0.0
    %2143 = vmatprep.subr.mxu0 0.0
    %2144 = vmatpush1.msra.mxu0 0.0
    %2145 = vmatprep.subr.mxu0 0.0
    %2146 = vmatpush1.msra.mxu0 0.0
    %2147 = vmatprep.subr.mxu0 0.0
    %2148 = vmatpush1.msra.mxu0 0.0
    %2149 = vmatprep.subr.mxu0 0.0
    %2150 = vmatpush1.msra.mxu0 0.0
    %2151 = vmatprep.subr.mxu0 0.0
    %2152 = vmatpush1.msra.mxu0 0.0
    %2153 = vmatprep.subr.mxu0 0.0
    %2154 = vmatpush1.msra.mxu0 0.0
    %2155 = vmatprep.subr.mxu0 0.0
    %2156 = vmatpush1.msra.mxu0 0.0
    %2157 = vmatprep.subr.mxu0 0.0
    %2158 = vmatpush1.msra.mxu0 0.0
    %2159 = vmatprep.subr.mxu0 0.0
    %2160 = vmatpush1.msra.mxu0 0.0
    %2161 = vmatprep.subr.mxu0 0.0
    %2162 = vmatpush1.msra.mxu0 0.0
    %2163 = vmatprep.subr.mxu0 0.0
    %2164 = vmatpush1.msra.mxu0 0.0
    %2165 = vmatprep.subr.mxu0 0.0
    %2166 = vmatpush1.msra.mxu0 0.0
    %2167 = vmatprep.subr.mxu0 0.0
    %2168 = vmatpush1.msra.mxu0 0.0
    %2169 = vmatprep.subr.mxu0 0.0
    %2170 = vmatpush1.msra.mxu0 0.0
    %2171 = vmatprep.subr.mxu0 0.0
    %2172 = vmatpush1.msra.mxu0 0.0
    %2173 = vmatprep.subr.mxu0 0.0
    %2174 = vmatpush1.msra.mxu0 0.0
    %2175 = vmatprep.subr.mxu0 0.0
    %2176 = vmatpush1.msra.mxu0 0.0
    %2177 = vmatprep.mubr.f32.mxu0 0.0
    %2178 = vmatmul.mubr.f32.gmra.mrb[0].mxu0 %v2007
    %v2179 = vpop.f32.mrb[0].mxu0
    %v2180 = vadd.f32 0.0, %v2179
    %v2181 = vpop.f32.mrb[0].mxu0
    %2182 = vdwg.mxu0
    %v2183 = vadd.f32 %v375, %v2180
    %v2184 = vxor.u32 %v2183, 2147483648
    %v2185 = vmul.f32 %v2184, 1.442695
    %v2186 = vpow.pop %v2185
    %v2187 = vadd.f32 %v2186, 1.0
    %v2188 = vrcp.pop %v2187
    %v2189 = vmul.f32 1.0, %v2188
    %v2190 = vtanh.pop %v2183
    %v2191 = vmul.f32 %v2189, %v1928
    %2193 = vrot.lane.b32.xlu0 %v2190, 64
    %v2194 = vpop.permute.xlu0 %2193
    %v2196 = vmul.f32 %v2189, %v2194
    %2198 = vrot.lane.b32.xlu0 %v2196, 32
    %v2199 = vpop.permute.xlu0 %2198
    %v2201 = vadd.f32 %v2191, %v2199
    %v2202 = vtanh.pop %v2201
    %2204 = vrot.lane.b32.xlu0 %v2202, 64
    %v2205 = vpop.permute.xlu0 %2204
    %v2207 = vmul.f32 %v2189, %v2205
    %v2208 = vsel %vm2112, 1, 0
    %2209 = vset.pattern.permute.xlu0 0
    %2210 = vperm.xlu0 %2209, %v2208
    %v2211 = vpop.permute.xlu0 %2210
    %vm2212 = vcmp.eq.s32.totalorder %v2211, 1
    %v2213 = vsel %vm2212, %v2207, %v1927
    %v2214 = vsel %vm2212, %v2201, %v1928
    %2216 = vrot.lane.b32.xlu0 %v2104, 32
    %v2217 = vpop.permute.xlu0 %2216
    %v2218 = vsel %vm253, %v2217, 0
    %2220 = vmatprep.subr.mxu0 0.0
    %2221 = vmatpush1.msra.mxu0 %v399
    %2222 = vmatprep.subr.mxu0 0.0
    %2223 = vmatpush1.msra.mxu0 %v400
    %2224 = vmatprep.subr.mxu0 0.0
    %2225 = vmatpush1.msra.mxu0 %v401
    %2226 = vmatprep.subr.mxu0 0.0
    %2227 = vmatpush1.msra.mxu0 %v402
    %2228 = vmatprep.subr.mxu0 0.0
    %2229 = vmatpush1.msra.mxu0 0.0
    %2230 = vmatprep.subr.mxu0 0.0
    %2231 = vmatpush1.msra.mxu0 0.0
    %2232 = vmatprep.subr.mxu0 0.0
    %2233 = vmatpush1.msra.mxu0 0.0
    %2234 = vmatprep.subr.mxu0 0.0
    %2235 = vmatpush1.msra.mxu0 0.0
    %2236 = vmatprep.subr.mxu0 0.0
    %2237 = vmatpush1.msra.mxu0 0.0
    %2238 = vmatprep.subr.mxu0 0.0
    %2239 = vmatpush1.msra.mxu0 0.0
    %2240 = vmatprep.subr.mxu0 0.0
    %2241 = vmatpush1.msra.mxu0 0.0
    %2242 = vmatprep.subr.mxu0 0.0
    %2243 = vmatpush1.msra.mxu0 0.0
    %2244 = vmatprep.subr.mxu0 0.0
    %2245 = vmatpush1.msra.mxu0 0.0
    %2246 = vmatprep.subr.mxu0 0.0
    %2247 = vmatpush1.msra.mxu0 0.0
    %2248 = vmatprep.subr.mxu0 0.0
    %2249 = vmatpush1.msra.mxu0 0.0
    %2250 = vmatprep.subr.mxu0 0.0
    %2251 = vmatpush1.msra.mxu0 0.0
    %2252 = vmatprep.subr.mxu0 0.0
    %2253 = vmatpush1.msra.mxu0 0.0
    %2254 = vmatprep.subr.mxu0 0.0
    %2255 = vmatpush1.msra.mxu0 0.0
    %2256 = vmatprep.subr.mxu0 0.0
    %2257 = vmatpush1.msra.mxu0 0.0
    %2258 = vmatprep.subr.mxu0 0.0
    %2259 = vmatpush1.msra.mxu0 0.0
    %2260 = vmatprep.subr.mxu0 0.0
    %2261 = vmatpush1.msra.mxu0 0.0
    %2262 = vmatprep.subr.mxu0 0.0
    %2263 = vmatpush1.msra.mxu0 0.0
    %2264 = vmatprep.subr.mxu0 0.0
    %2265 = vmatpush1.msra.mxu0 0.0
    %2266 = vmatprep.subr.mxu0 0.0
    %2267 = vmatpush1.msra.mxu0 0.0
    %2268 = vmatprep.subr.mxu0 0.0
    %2269 = vmatpush1.msra.mxu0 0.0
    %2270 = vmatprep.subr.mxu0 0.0
    %2271 = vmatpush1.msra.mxu0 0.0
    %2272 = vmatprep.subr.mxu0 0.0
    %2273 = vmatpush1.msra.mxu0 0.0
    %2274 = vmatprep.subr.mxu0 0.0
    %2275 = vmatpush1.msra.mxu0 0.0
    %2276 = vmatprep.subr.mxu0 0.0
    %2277 = vmatpush1.msra.mxu0 0.0
    %2278 = vmatprep.subr.mxu0 0.0
    %2279 = vmatpush1.msra.mxu0 0.0
    %2280 = vmatprep.subr.mxu0 0.0
    %2281 = vmatpush1.msra.mxu0 0.0
    %2282 = vmatprep.subr.mxu0 0.0
    %2283 = vmatpush1.msra.mxu0 0.0
    %2284 = vmatprep.mubr.f32.mxu0 0.0
    %2285 = vmatmul.mubr.f32.gmra.mrb[0].mxu0 %v2218
    %v2286 = vpop.f32.mrb[0].mxu0
    %v2287 = vadd.f32 0.0, %v2286
    %v2288 = vpop.f32.mrb[0].mxu0
    %2289 = vdwg.mxu0
    %2291 = vrot.lane.b32.xlu0 %v2213, 32
    %v2292 = vpop.permute.xlu0 %2291
    %v2293 = vsel %vm253, %v2292, 0
    %2295 = vmatprep.subr.mxu0 0.0
    %2296 = vmatpush1.msra.mxu0 %v395
    %2297 = vmatprep.subr.mxu0 0.0
    %2298 = vmatpush1.msra.mxu0 %v396
    %2299 = vmatprep.subr.mxu0 0.0
    %2300 = vmatpush1.msra.mxu0 %v397
    %2301 = vmatprep.subr.mxu0 0.0
    %2302 = vmatpush1.msra.mxu0 %v398
    %2303 = vmatprep.subr.mxu0 0.0
    %2304 = vmatpush1.msra.mxu0 0.0
    %2305 = vmatprep.subr.mxu0 0.0
    %2306 = vmatpush1.msra.mxu0 0.0
    %2307 = vmatprep.subr.mxu0 0.0
    %2308 = vmatpush1.msra.mxu0 0.0
    %2309 = vmatprep.subr.mxu0 0.0
    %2310 = vmatpush1.msra.mxu0 0.0
    %2311 = vmatprep.subr.mxu0 0.0
    %2312 = vmatpush1.msra.mxu0 0.0
    %2313 = vmatprep.subr.mxu0 0.0
    %2314 = vmatpush1.msra.mxu0 0.0
    %2315 = vmatprep.subr.mxu0 0.0
    %2316 = vmatpush1.msra.mxu0 0.0
    %2317 = vmatprep.subr.mxu0 0.0
    %2318 = vmatpush1.msra.mxu0 0.0
    %2319 = vmatprep.subr.mxu0 0.0
    %2320 = vmatpush1.msra.mxu0 0.0
    %2321 = vmatprep.subr.mxu0 0.0
    %2322 = vmatpush1.msra.mxu0 0.0
    %2323 = vmatprep.subr.mxu0 0.0
    %2324 = vmatpush1.msra.mxu0 0.0
    %2325 = vmatprep.subr.mxu0 0.0
    %2326 = vmatpush1.msra.mxu0 0.0
    %2327 = vmatprep.subr.mxu0 0.0
    %2328 = vmatpush1.msra.mxu0 0.0
    %2329 = vmatprep.subr.mxu0 0.0
    %2330 = vmatpush1.msra.mxu0 0.0
    %2331 = vmatprep.subr.mxu0 0.0
    %2332 = vmatpush1.msra.mxu0 0.0
    %2333 = vmatprep.subr.mxu0 0.0
    %2334 = vmatpush1.msra.mxu0 0.0
    %2335 = vmatprep.subr.mxu0 0.0
    %2336 = vmatpush1.msra.mxu0 0.0
    %2337 = vmatprep.subr.mxu0 0.0
    %2338 = vmatpush1.msra.mxu0 0.0
    %2339 = vmatprep.subr.mxu0 0.0
    %2340 = vmatpush1.msra.mxu0 0.0
    %2341 = vmatprep.subr.mxu0 0.0
    %2342 = vmatpush1.msra.mxu0 0.0
    %2343 = vmatprep.subr.mxu0 0.0
    %2344 = vmatpush1.msra.mxu0 0.0
    %2345 = vmatprep.subr.mxu0 0.0
    %2346 = vmatpush1.msra.mxu0 0.0
    %2347 = vmatprep.subr.mxu0 0.0
    %2348 = vmatpush1.msra.mxu0 0.0
    %2349 = vmatprep.subr.mxu0 0.0
    %2350 = vmatpush1.msra.mxu0 0.0
    %2351 = vmatprep.subr.mxu0 0.0
    %2352 = vmatpush1.msra.mxu0 0.0
    %2353 = vmatprep.subr.mxu0 0.0
    %2354 = vmatpush1.msra.mxu0 0.0
    %2355 = vmatprep.subr.mxu0 0.0
    %2356 = vmatpush1.msra.mxu0 0.0
    %2357 = vmatprep.subr.mxu0 0.0
    %2358 = vmatpush1.msra.mxu0 0.0
    %2359 = vmatprep.mubr.f32.mxu0 0.0
    %2360 = vmatmul.mubr.f32.gmra.mrb[0].mxu0 %v2293
    %v2361 = vpop.f32.mrb[0].mxu0
    %v2362 = vadd.f32 %v2287, %v2361
    %v2363 = vpop.f32.mrb[0].mxu0
    %2364 = vdwg.mxu0
    %v2365 = vadd.f32 %v2362, %v388
    %v2366 = vxor.u32 %v2365, 2147483648
    %v2367 = vmul.f32 %v2366, 1.442695
    %v2368 = vpow.pop %v2367
    %v2369 = vadd.f32 %v2368, 1.0
    %v2370 = vrcp.pop %v2369
    %v2371 = vmul.f32 1.0, %v2370
    %v2372 = vtanh.pop %v2365
    %v2373 = vmul.f32 %v2371, %v2105
    %2375 = vrot.lane.b32.xlu0 %v2372, 64
    %v2376 = vpop.permute.xlu0 %2375
    %v2378 = vmul.f32 %v2371, %v2376
    %2380 = vrot.lane.b32.xlu0 %v2378, 32
    %v2381 = vpop.permute.xlu0 %2380
    %v2383 = vadd.f32 %v2373, %v2381
    %v2384 = vtanh.pop %v2383
    %2386 = vrot.lane.b32.xlu0 %v2384, 64
    %v2387 = vpop.permute.xlu0 %2386
    %v2389 = vmul.f32 %v2371, %v2387
    %v2390 = vsel %vm2212, %v2389, %v2104
    %v2391 = vsel %vm2212, %v2383, %v2105
    %v2392 = vsel %vm2212, %v2389, 0.0
    %2394 = vrot.lane.b32.xlu0 %v2392, 96
    %v2395 = vpop.permute.xlu0 %2394
    %2397 = vst.msk [vmem:[#allocation2 + $0x8] sm:$0xff] %vm1255, %v2395
    %vm2398 = vcmp.gt.s32.totalorder %v390, 7
    %2399 = vmatprep.subr.mxu0 0.0
    %2400 = vmatpush1.msra.mxu0 %v391
    %2401 = vmatprep.subr.mxu0 0.0
    %2402 = vmatpush1.msra.mxu0 %v392
    %2403 = vmatprep.subr.mxu0 0.0
    %2404 = vmatpush1.msra.mxu0 %v393
    %2405 = vmatprep.subr.mxu0 0.0
    %2406 = vmatpush1.msra.mxu0 %v394
    %2407 = vmatprep.subr.mxu0 0.0
    %2408 = vmatpush1.msra.mxu0 0.0
    %2409 = vmatprep.subr.mxu0 0.0
    %2410 = vmatpush1.msra.mxu0 0.0
    %2411 = vmatprep.subr.mxu0 0.0
    %2412 = vmatpush1.msra.mxu0 0.0
    %2413 = vmatprep.subr.mxu0 0.0
    %2414 = vmatpush1.msra.mxu0 0.0
    %2415 = vmatprep.subr.mxu0 0.0
    %2416 = vmatpush1.msra.mxu0 0.0
    %2417 = vmatprep.subr.mxu0 0.0
    %2418 = vmatpush1.msra.mxu0 0.0
    %2419 = vmatprep.subr.mxu0 0.0
    %2420 = vmatpush1.msra.mxu0 0.0
    %2421 = vmatprep.subr.mxu0 0.0
    %2422 = vmatpush1.msra.mxu0 0.0
    %2423 = vmatprep.subr.mxu0 0.0
    %2424 = vmatpush1.msra.mxu0 0.0
    %2425 = vmatprep.subr.mxu0 0.0
    %2426 = vmatpush1.msra.mxu0 0.0
    %2427 = vmatprep.subr.mxu0 0.0
    %2428 = vmatpush1.msra.mxu0 0.0
    %2429 = vmatprep.subr.mxu0 0.0
    %2430 = vmatpush1.msra.mxu0 0.0
    %2431 = vmatprep.subr.mxu0 0.0
    %2432 = vmatpush1.msra.mxu0 0.0
    %2433 = vmatprep.subr.mxu0 0.0
    %2434 = vmatpush1.msra.mxu0 0.0
    %2435 = vmatprep.subr.mxu0 0.0
    %2436 = vmatpush1.msra.mxu0 0.0
    %2437 = vmatprep.subr.mxu0 0.0
    %2438 = vmatpush1.msra.mxu0 0.0
    %2439 = vmatprep.subr.mxu0 0.0
    %2440 = vmatpush1.msra.mxu0 0.0
    %2441 = vmatprep.subr.mxu0 0.0
    %2442 = vmatpush1.msra.mxu0 0.0
    %2443 = vmatprep.subr.mxu0 0.0
    %2444 = vmatpush1.msra.mxu0 0.0
    %2445 = vmatprep.subr.mxu0 0.0
    %2446 = vmatpush1.msra.mxu0 0.0
    %2447 = vmatprep.subr.mxu0 0.0
    %2448 = vmatpush1.msra.mxu0 0.0
    %2449 = vmatprep.subr.mxu0 0.0
    %2450 = vmatpush1.msra.mxu0 0.0
    %2451 = vmatprep.subr.mxu0 0.0
    %2452 = vmatpush1.msra.mxu0 0.0
    %2453 = vmatprep.subr.mxu0 0.0
    %2454 = vmatpush1.msra.mxu0 0.0
    %2455 = vmatprep.subr.mxu0 0.0
    %2456 = vmatpush1.msra.mxu0 0.0
    %2457 = vmatprep.subr.mxu0 0.0
    %2458 = vmatpush1.msra.mxu0 0.0
    %2459 = vmatprep.subr.mxu0 0.0
    %2460 = vmatpush1.msra.mxu0 0.0
    %2461 = vmatprep.subr.mxu0 0.0
    %2462 = vmatpush1.msra.mxu0 0.0
    %2463 = vmatprep.mubr.f32.mxu0 0.0
    %2464 = vmatmul.mubr.f32.gmra.mrb[0].mxu0 %v2293
    %v2465 = vpop.f32.mrb[0].mxu0
    %v2466 = vadd.f32 0.0, %v2465
    %v2467 = vpop.f32.mrb[0].mxu0
    %2468 = vdwg.mxu0
    %v2469 = vadd.f32 %v380, %v2466
    %v2470 = vxor.u32 %v2469, 2147483648
    %v2471 = vmul.f32 %v2470, 1.442695
    %v2472 = vpow.pop %v2471
    %v2473 = vadd.f32 %v2472, 1.0
    %v2474 = vrcp.pop %v2473
    %v2475 = vmul.f32 1.0, %v2474
    %v2476 = vtanh.pop %v2469
    %v2477 = vmul.f32 %v2475, %v2214
    %2479 = vrot.lane.b32.xlu0 %v2476, 64
    %v2480 = vpop.permute.xlu0 %2479
    %v2482 = vmul.f32 %v2475, %v2480
    %2484 = vrot.lane.b32.xlu0 %v2482, 32
    %v2485 = vpop.permute.xlu0 %2484
    %v2487 = vadd.f32 %v2477, %v2485
    %v2488 = vtanh.pop %v2487
    %2490 = vrot.lane.b32.xlu0 %v2488, 64
    %v2491 = vpop.permute.xlu0 %2490
    %v2493 = vmul.f32 %v2475, %v2491
    %v2494 = vsel %vm2398, 1, 0
    %2495 = vset.pattern.permute.xlu0 0
    %2496 = vperm.xlu0 %2495, %v2494
    %v2497 = vpop.permute.xlu0 %2496
    %vm2498 = vcmp.eq.s32.totalorder %v2497, 1
    %v2499 = vsel %vm2498, %v2493, %v2213
    %2501 = vrot.lane.b32.xlu0 %v2390, 32
    %v2502 = vpop.permute.xlu0 %2501
    %v2503 = vsel %vm253, %v2502, 0
    %2505 = vmatprep.subr.mxu0 0.0
    %2506 = vmatpush1.msra.mxu0 %v399
    %2507 = vmatprep.subr.mxu0 0.0
    %2508 = vmatpush1.msra.mxu0 %v400
    %2509 = vmatprep.subr.mxu0 0.0
    %2510 = vmatpush1.msra.mxu0 %v401
    %2511 = vmatprep.subr.mxu0 0.0
    %2512 = vmatpush1.msra.mxu0 %v402
    %2513 = vmatprep.subr.mxu0 0.0
    %2514 = vmatpush1.msra.mxu0 0.0
    %2515 = vmatprep.subr.mxu0 0.0
    %2516 = vmatpush1.msra.mxu0 0.0
    %2517 = vmatprep.subr.mxu0 0.0
    %2518 = vmatpush1.msra.mxu0 0.0
    %2519 = vmatprep.subr.mxu0 0.0
    %2520 = vmatpush1.msra.mxu0 0.0
    %2521 = vmatprep.subr.mxu0 0.0
    %2522 = vmatpush1.msra.mxu0 0.0
    %2523 = vmatprep.subr.mxu0 0.0
    %2524 = vmatpush1.msra.mxu0 0.0
    %2525 = vmatprep.subr.mxu0 0.0
    %2526 = vmatpush1.msra.mxu0 0.0
    %2527 = vmatprep.subr.mxu0 0.0
    %2528 = vmatpush1.msra.mxu0 0.0
    %2529 = vmatprep.subr.mxu0 0.0
    %2530 = vmatpush1.msra.mxu0 0.0
    %2531 = vmatprep.subr.mxu0 0.0
    %2532 = vmatpush1.msra.mxu0 0.0
    %2533 = vmatprep.subr.mxu0 0.0
    %2534 = vmatpush1.msra.mxu0 0.0
    %2535 = vmatprep.subr.mxu0 0.0
    %2536 = vmatpush1.msra.mxu0 0.0
    %2537 = vmatprep.subr.mxu0 0.0
    %2538 = vmatpush1.msra.mxu0 0.0
    %2539 = vmatprep.subr.mxu0 0.0
    %2540 = vmatpush1.msra.mxu0 0.0
    %2541 = vmatprep.subr.mxu0 0.0
    %2542 = vmatpush1.msra.mxu0 0.0
    %2543 = vmatprep.subr.mxu0 0.0
    %2544 = vmatpush1.msra.mxu0 0.0
    %2545 = vmatprep.subr.mxu0 0.0
    %2546 = vmatpush1.msra.mxu0 0.0
    %2547 = vmatprep.subr.mxu0 0.0
    %2548 = vmatpush1.msra.mxu0 0.0
    %2549 = vmatprep.subr.mxu0 0.0
    %2550 = vmatpush1.msra.mxu0 0.0
    %2551 = vmatprep.subr.mxu0 0.0
    %2552 = vmatpush1.msra.mxu0 0.0
    %2553 = vmatprep.subr.mxu0 0.0
    %2554 = vmatpush1.msra.mxu0 0.0
    %2555 = vmatprep.subr.mxu0 0.0
    %2556 = vmatpush1.msra.mxu0 0.0
    %2557 = vmatprep.subr.mxu0 0.0
    %2558 = vmatpush1.msra.mxu0 0.0
    %2559 = vmatprep.subr.mxu0 0.0
    %2560 = vmatpush1.msra.mxu0 0.0
    %2561 = vmatprep.subr.mxu0 0.0
    %2562 = vmatpush1.msra.mxu0 0.0
    %2563 = vmatprep.subr.mxu0 0.0
    %2564 = vmatpush1.msra.mxu0 0.0
    %2565 = vmatprep.subr.mxu0 0.0
    %2566 = vmatpush1.msra.mxu0 0.0
    %2567 = vmatprep.subr.mxu0 0.0
    %2568 = vmatpush1.msra.mxu0 0.0
    %2569 = vmatprep.mubr.f32.mxu0 0.0
    %2570 = vmatmul.mubr.f32.gmra.mrb[0].mxu0 %v2503
    %v2571 = vpop.f32.mrb[0].mxu0
    %v2572 = vadd.f32 0.0, %v2571
    %v2573 = vpop.f32.mrb[0].mxu0
    %2574 = vdwg.mxu0
    %2576 = vrot.lane.b32.xlu0 %v2499, 32
    %v2577 = vpop.permute.xlu0 %2576
    %v2578 = vsel %vm253, %v2577, 0
    %2580 = vmatprep.subr.mxu0 0.0
    %2581 = vmatpush1.msra.mxu0 %v395
    %2582 = vmatprep.subr.mxu0 0.0
    %2583 = vmatpush1.msra.mxu0 %v396
    %2584 = vmatprep.subr.mxu0 0.0
    %2585 = vmatpush1.msra.mxu0 %v397
    %2586 = vmatprep.subr.mxu0 0.0
    %2587 = vmatpush1.msra.mxu0 %v398
    %2588 = vmatprep.subr.mxu0 0.0
    %2589 = vmatpush1.msra.mxu0 0.0
    %2590 = vmatprep.subr.mxu0 0.0
    %2591 = vmatpush1.msra.mxu0 0.0
    %2592 = vmatprep.subr.mxu0 0.0
    %2593 = vmatpush1.msra.mxu0 0.0
    %2594 = vmatprep.subr.mxu0 0.0
    %2595 = vmatpush1.msra.mxu0 0.0
    %2596 = vmatprep.subr.mxu0 0.0
    %2597 = vmatpush1.msra.mxu0 0.0
    %2598 = vmatprep.subr.mxu0 0.0
    %2599 = vmatpush1.msra.mxu0 0.0
    %2600 = vmatprep.subr.mxu0 0.0
    %2601 = vmatpush1.msra.mxu0 0.0
    %2602 = vmatprep.subr.mxu0 0.0
    %2603 = vmatpush1.msra.mxu0 0.0
    %2604 = vmatprep.subr.mxu0 0.0
    %2605 = vmatpush1.msra.mxu0 0.0
    %2606 = vmatprep.subr.mxu0 0.0
    %2607 = vmatpush1.msra.mxu0 0.0
    %2608 = vmatprep.subr.mxu0 0.0
    %2609 = vmatpush1.msra.mxu0 0.0
    %2610 = vmatprep.subr.mxu0 0.0
    %2611 = vmatpush1.msra.mxu0 0.0
    %2612 = vmatprep.subr.mxu0 0.0
    %2613 = vmatpush1.msra.mxu0 0.0
    %2614 = vmatprep.subr.mxu0 0.0
    %2615 = vmatpush1.msra.mxu0 0.0
    %2616 = vmatprep.subr.mxu0 0.0
    %2617 = vmatpush1.msra.mxu0 0.0
    %2618 = vmatprep.subr.mxu0 0.0
    %2619 = vmatpush1.msra.mxu0 0.0
    %2620 = vmatprep.subr.mxu0 0.0
    %2621 = vmatpush1.msra.mxu0 0.0
    %2622 = vmatprep.subr.mxu0 0.0
    %2623 = vmatpush1.msra.mxu0 0.0
    %2624 = vmatprep.subr.mxu0 0.0
    %2625 = vmatpush1.msra.mxu0 0.0
    %2626 = vmatprep.subr.mxu0 0.0
    %2627 = vmatpush1.msra.mxu0 0.0
    %2628 = vmatprep.subr.mxu0 0.0
    %2629 = vmatpush1.msra.mxu0 0.0
    %2630 = vmatprep.subr.mxu0 0.0
    %2631 = vmatpush1.msra.mxu0 0.0
    %2632 = vmatprep.subr.mxu0 0.0
    %2633 = vmatpush1.msra.mxu0 0.0
    %2634 = vmatprep.subr.mxu0 0.0
    %2635 = vmatpush1.msra.mxu0 0.0
    %2636 = vmatprep.subr.mxu0 0.0
    %2637 = vmatpush1.msra.mxu0 0.0
    %2638 = vmatprep.subr.mxu0 0.0
    %2639 = vmatpush1.msra.mxu0 0.0
    %2640 = vmatprep.subr.mxu0 0.0
    %2641 = vmatpush1.msra.mxu0 0.0
    %2642 = vmatprep.subr.mxu0 0.0
    %2643 = vmatpush1.msra.mxu0 0.0
    %2644 = vmatprep.mubr.f32.mxu0 0.0
    %2645 = vmatmul.mubr.f32.gmra.mrb[0].mxu0 %v2578
    %v2646 = vpop.f32.mrb[0].mxu0
    %v2647 = vadd.f32 %v2572, %v2646
    %v2648 = vpop.f32.mrb[0].mxu0
    %2649 = vdwg.mxu0
    %v2650 = vadd.f32 %v2647, %v388
    %v2651 = vxor.u32 %v2650, 2147483648
    %v2652 = vmul.f32 %v2651, 1.442695
    %v2653 = vpow.pop %v2652
    %v2654 = vadd.f32 %v2653, 1.0
    %v2655 = vrcp.pop %v2654
    %v2656 = vmul.f32 1.0, %v2655
    %v2657 = vtanh.pop %v2650
    %v2658 = vmul.f32 %v2656, %v2391
    %2660 = vrot.lane.b32.xlu0 %v2657, 64
    %v2661 = vpop.permute.xlu0 %2660
    %v2663 = vmul.f32 %v2656, %v2661
    %2665 = vrot.lane.b32.xlu0 %v2663, 32
    %v2666 = vpop.permute.xlu0 %2665
    %v2668 = vadd.f32 %v2658, %v2666
    %v2669 = vtanh.pop %v2668
    %2671 = vrot.lane.b32.xlu0 %v2669, 64
    %v2672 = vpop.permute.xlu0 %2671
    %v2674 = vmul.f32 %v2656, %v2672
    %v2675 = vsel %vm2498, %v2674, %v2390
    %v2676 = vsel %vm2498, %v2668, %v2391
    %v2677 = vsel %vm2498, %v2674, 0.0
    %2678 = vst.msk [vmem:[#allocation2 + $0x8] sm:$0xff] %vm1538, %v2677
    %v2679 = vld [vmem:[%s9] sm:$0xff]
    %v2680 = vld [vmem:[%s9 + $0x8] sm:$0xff]
    %v2681 = vld [vmem:[%s9 + $0x10] sm:$0xff]
    %v2682 = vld [vmem:[%s9 + $0x18] sm:$0xff]
    %v2683 = vld [vmem:[%s10] sm:$0x1]
    %v2685 = vlaneseq
    %v2686 = vshrl.u32 %v2685, 7
    %v2687 = vsub.s32 0, %v2686
    %v2688 = vrot.slane %v2683, %v2687
    %2691 = vrot.lane.b32.xlu0 %v2675, 32
    %v2692 = vpop.permute.xlu0 %2691
    %v2693 = vsel %vm253, %v2692, 0
    %2695 = vmatprep.subr.mxu0 0.0
    %2696 = vmatpush1.msra.mxu0 %v2679
    %2697 = vmatprep.subr.mxu0 0.0
    %2698 = vmatpush1.msra.mxu0 %v2680
    %2699 = vmatprep.subr.mxu0 0.0
    %2700 = vmatpush1.msra.mxu0 %v2681
    %2701 = vmatprep.subr.mxu0 0.0
    %2702 = vmatpush1.msra.mxu0 %v2682
    %2703 = vmatprep.subr.mxu0 0.0
    %2704 = vmatpush1.msra.mxu0 0.0
    %2705 = vmatprep.subr.mxu0 0.0
    %2706 = vmatpush1.msra.mxu0 0.0
    %2707 = vmatprep.subr.mxu0 0.0
    %2708 = vmatpush1.msra.mxu0 0.0
    %2709 = vmatprep.subr.mxu0 0.0
    %2710 = vmatpush1.msra.mxu0 0.0
    %2711 = vmatprep.subr.mxu0 0.0
    %2712 = vmatpush1.msra.mxu0 0.0
    %2713 = vmatprep.subr.mxu0 0.0
    %2714 = vmatpush1.msra.mxu0 0.0
    %2715 = vmatprep.subr.mxu0 0.0
    %2716 = vmatpush1.msra.mxu0 0.0
    %2717 = vmatprep.subr.mxu0 0.0
    %2718 = vmatpush1.msra.mxu0 0.0
    %2719 = vmatprep.subr.mxu0 0.0
    %2720 = vmatpush1.msra.mxu0 0.0
    %2721 = vmatprep.subr.mxu0 0.0
    %2722 = vmatpush1.msra.mxu0 0.0
    %2723 = vmatprep.subr.mxu0 0.0
    %2724 = vmatpush1.msra.mxu0 0.0
    %2725 = vmatprep.subr.mxu0 0.0
    %2726 = vmatpush1.msra.mxu0 0.0
    %2727 = vmatprep.subr.mxu0 0.0
    %2728 = vmatpush1.msra.mxu0 0.0
    %2729 = vmatprep.subr.mxu0 0.0
    %2730 = vmatpush1.msra.mxu0 0.0
    %2731 = vmatprep.subr.mxu0 0.0
    %2732 = vmatpush1.msra.mxu0 0.0
    %2733 = vmatprep.subr.mxu0 0.0
    %2734 = vmatpush1.msra.mxu0 0.0
    %2735 = vmatprep.subr.mxu0 0.0
    %2736 = vmatpush1.msra.mxu0 0.0
    %2737 = vmatprep.subr.mxu0 0.0
    %2738 = vmatpush1.msra.mxu0 0.0
    %2739 = vmatprep.subr.mxu0 0.0
    %2740 = vmatpush1.msra.mxu0 0.0
    %2741 = vmatprep.subr.mxu0 0.0
    %2742 = vmatpush1.msra.mxu0 0.0
    %2743 = vmatprep.subr.mxu0 0.0
    %2744 = vmatpush1.msra.mxu0 0.0
    %2745 = vmatprep.subr.mxu0 0.0
    %2746 = vmatpush1.msra.mxu0 0.0
    %2747 = vmatprep.subr.mxu0 0.0
    %2748 = vmatpush1.msra.mxu0 0.0
    %2749 = vmatprep.subr.mxu0 0.0
    %2750 = vmatpush1.msra.mxu0 0.0
    %2751 = vmatprep.subr.mxu0 0.0
    %2752 = vmatpush1.msra.mxu0 0.0
    %2753 = vmatprep.subr.mxu0 0.0
    %2754 = vmatpush1.msra.mxu0 0.0
    %2755 = vmatprep.subr.mxu0 0.0
    %2756 = vmatpush1.msra.mxu0 0.0
    %2757 = vmatprep.subr.mxu0 0.0
    %2758 = vmatpush1.msra.mxu0 0.0
    %2759 = vmatprep.mubr.f32.mxu0 0.0
    %2760 = vmatmul.mubr.f32.gmra.mrb[0].mxu0 %v2693
    %v2761 = vpop.f32.mrb[0].mxu0
    %v2762 = vadd.f32 %v2688, %v2761
    %v2763 = vpop.f32.mrb[0].mxu0
    %2764 = vdwg.mxu0
    %v2765 = vtanh.pop %v2762
    %2766 = vst.msk [vmem:[#allocation4] sm:$0xff] %vm253, %v2765
    %2768 = vrot.lane.b32.xlu0 %v2676, 96
    %v2769 = vpop.permute.xlu0 %2768
    %2771 = vst.msk [vmem:[#allocation6] sm:$0xff] %vm253, %v2769
    // Predicated region
    $region46: #{tpu_custom_call.1} parent=1 // pred_check
      _
    $region47: #{tpu_custom_call.1} parent=1 // pred_check_branch
      %2773 = sbr.rel (0) target = $region49
    $region48: #{tpu_custom_call.1} parent=1 // pred_region
      %s2775 = ssub.s32 256, 256
      %2776 = vsyncadd [#allocation3], %s2775
      %s2778 = sshll.u32 [#allocation2], 4
      %s2779 = int_to_ptr.vmem [resolvable:$true] %s2778
      %2781 = dma.vmem_to_hbm [thread:$0]  %s2779, 256, %s11, [#allocation3]
    $region49: #{tpu_custom_call.1} parent=1 // pred_fallthru
      _
    // Predicated region
    $region50: #{tpu_custom_call.1} parent=1 // pred_check
      _
    $region51: #{tpu_custom_call.1} parent=1 // pred_check_branch
      %2783 = sbr.rel (0) target = $region53
    $region52: #{tpu_custom_call.1} parent=1 // pred_region
      %s2785 = ssub.s32 128, 128
      %2786 = vsyncadd [#allocation5], %s2785
      %s2788 = sshll.u32 [#allocation4], 4
      %s2789 = int_to_ptr.vmem [resolvable:$true] %s2788
      %2791 = dma.vmem_to_hbm [thread:$0]  %s2789, 128, %s12, [#allocation5]
    $region53: #{tpu_custom_call.1} parent=1 // pred_fallthru
      _
    // Predicated region
    $region54: #{tpu_custom_call.1} parent=1 // pred_check
      _
    $region55: #{tpu_custom_call.1} parent=1 // pred_check_branch
      %2793 = sbr.rel (0) target = $region57
    $region56: #{tpu_custom_call.1} parent=1 // pred_region
      %s2795 = ssub.s32 128, 128
      %2796 = vsyncadd [#allocation5], %s2795
      %s2798 = sshll.u32 [#allocation6], 4
      %s2799 = int_to_ptr.vmem [resolvable:$true] %s2798
      %2801 = dma.vmem_to_hbm [thread:$0]  %s2799, 128, %s13, [#allocation5]
    $region57: #{tpu_custom_call.1} parent=1 // pred_fallthru
      _
    // Predicated region
    $region58: #{tpu_custom_call.1} parent=1 // pred_check
      _
    $region59: #{tpu_custom_call.1} parent=1 // pred_check_branch
      %2803 = sbr.rel (0) target = $region61
    $region60: #{tpu_custom_call.1} parent=1 // pred_region
      %2804 = dma.done [#allocation3], 256
    $region61: #{tpu_custom_call.1} parent=1 // pred_fallthru
      _
    // Predicated region
    $region62: #{tpu_custom_call.1} parent=1 // pred_check
      _
    $region63: #{tpu_custom_call.1} parent=1 // pred_check_branch
      %2806 = sbr.rel (0) target = $region65
    $region64: #{tpu_custom_call.1} parent=1 // pred_region
      %2807 = dma.done [#allocation5], 128
    $region65: #{tpu_custom_call.1} parent=1 // pred_fallthru
      _
    // Predicated region
    $region66: #{tpu_custom_call.1} parent=1 // pred_check
      _
    $region67: #{tpu_custom_call.1} parent=1 // pred_check_branch
      %2809 = sbr.rel (0) target = $region69
    $region68: #{tpu_custom_call.1} parent=1 // pred_region
      %2810 = dma.done [#allocation5], 128
    $region69: #{tpu_custom_call.1} parent=1 // pred_fallthru
      _
    %2811 = vsyncpa [#allocation3], 1
    %2812 = vsyncpa [#allocation5], 1

</llo_original>
